<compile_context>
chip_gen: v6e
topology: v6e:2x2x1
jax: 0.10.0
libtpu: 0.0.40
codegen_flags: <defaults>
</compile_context>

<pallas_src>
import functools

import jax
import jax.numpy as jnp
from jax import lax
from jax.experimental import pallas as pl
from jax.experimental.pallas import tpu as pltpu


_BN_EPS = 1e-5


def _round_up(x, m):
    return (x + m - 1) // m * m


def _pick_tm(m, target=256):
    """Largest multiple of 16 <= target that divides m (fallback: full m)."""
    tm = min(target, m)
    tm -= tm % 16
    while tm > 0 and m % tm:
        tm -= 16
    return tm if tm > 0 else m


# ----------------------------------------------------------------------------
# Pallas kernels
# ----------------------------------------------------------------------------
def _gemm_stats_kernel(x_ref, w_ref, y_ref, st_ref):
    """Per M-tile: Y = X @ W (bf16 in, f32 acc) + partial per-channel stats."""
    y = jnp.dot(x_ref[...], w_ref[...], preferred_element_type=jnp.float32)
    y_ref[...] = y
    s1 = jnp.sum(y, axis=0, keepdims=True)          # (1, N)   sum
    s2 = jnp.sum(y * y, axis=0, keepdims=True)      # (1, N)   sum of squares
    st_ref[...] = jnp.concatenate([s1, s2], axis=0)[None, :, :]


def _bn_act_kernel(y_ref, sc_ref, sh_ref, o_ref, *, neg_slope):
    """Per M-tile: out = y * scale + shift (folded BN), optional LeakyReLU."""
    y = y_ref[...] * sc_ref[...] + sh_ref[...]
    if neg_slope is not None:
        y = jnp.where(y >= 0.0, y, neg_slope * y)
    o_ref[...] = y.astype(o_ref.dtype)


def _gemm_bias_sigmoid_kernel(x_ref, w_ref, b_ref, o_ref):
    y = jnp.dot(x_ref[...], w_ref[...], preferred_element_type=jnp.float32)
    o_ref[...] = jax.nn.sigmoid(y + b_ref[...])


# ----------------------------------------------------------------------------
# pallas_call wrappers (tiled over M, lane-dense padded N)
# ----------------------------------------------------------------------------
def gemm_stats(x_bf16, w_bf16, *, tm=256):
    m, k = x_bf16.shape
    n = w_bf16.shape[1]
    tm = _pick_tm(m, tm)
    nm = m // tm
    return pl.pallas_call(
        _gemm_stats_kernel,
        out_shape=(jax.ShapeDtypeStruct((m, n), jnp.float32),
                   jax.ShapeDtypeStruct((nm, 2, n), jnp.float32)),
        grid=(nm,),
        in_specs=[pl.BlockSpec((tm, k), lambda i: (i, 0)),
                  pl.BlockSpec((k, n), lambda i: (0, 0))],
        out_specs=(pl.BlockSpec((tm, n), lambda i: (i, 0)),
                   pl.BlockSpec((1, 2, n), lambda i: (i, 0, 0))),
        compiler_params=pltpu.CompilerParams(dimension_semantics=("parallel",)),
    )(x_bf16, w_bf16)


def bn_act(y, scale_row, shift_row, *, neg_slope, tm=256):
    m, n = y.shape
    tm = _pick_tm(m, tm)
    nm = m // tm
    kernel = functools.partial(_bn_act_kernel, neg_slope=neg_slope)
    return pl.pallas_call(
        kernel,
        out_shape=jax.ShapeDtypeStruct((m, n), jnp.bfloat16),
        grid=(nm,),
        in_specs=[pl.BlockSpec((tm, n), lambda i: (i, 0)),
                  pl.BlockSpec((1, n), lambda i: (0, 0)),
                  pl.BlockSpec((1, n), lambda i: (0, 0))],
        out_specs=pl.BlockSpec((tm, n), lambda i: (i, 0)),
        compiler_params=pltpu.CompilerParams(dimension_semantics=("parallel",)),
    )(y, scale_row, shift_row)


def gemm_bias_sigmoid(x_bf16, w_bf16, bias_row, *, tm=256):
    m, k = x_bf16.shape
    n = w_bf16.shape[1]
    tm = _pick_tm(m, tm)
    nm = m // tm
    return pl.pallas_call(
        _gemm_bias_sigmoid_kernel,
        out_shape=jax.ShapeDtypeStruct((m, n), jnp.float32),
        grid=(nm,),
        in_specs=[pl.BlockSpec((tm, k), lambda i: (i, 0)),
                  pl.BlockSpec((k, n), lambda i: (0, 0)),
                  pl.BlockSpec((1, n), lambda i: (0, 0))],
        out_specs=pl.BlockSpec((tm, n), lambda i: (i, 0)),
        compiler_params=pltpu.CompilerParams(dimension_semantics=("parallel",)),
    )(x_bf16, w_bf16, bias_row)


# ----------------------------------------------------------------------------
# Plain-JAX glue: im2col + weight reshaping (no heavy compute)
# ----------------------------------------------------------------------------
def _im2col(x_nhwc, kh, kw, stride, pad):
    if pad:
        x_nhwc = jnp.pad(x_nhwc, ((0, 0), (pad, pad), (pad, pad), (0, 0)))
    b, h, w, c = x_nhwc.shape
    ho = (h - kh) // stride + 1
    wo = (w - kw) // stride + 1
    cols = []
    for i in range(kh):
        for j in range(kw):
            cols.append(x_nhwc[:, i:i + stride * ho:stride, j:j + stride * wo:stride, :])
    p = jnp.stack(cols, axis=3)                       # (B, Ho, Wo, kh*kw, C)
    return p.reshape(b * ho * wo, kh * kw * c), (b, ho, wo)


def _w_to_mat(w_oihw):
    co, ci, kh, kw = w_oihw.shape
    # row ordering (i, j, c) matches the im2col patch ordering above
    return jnp.transpose(w_oihw, (2, 3, 1, 0)).reshape(kh * kw * ci, co)


# ----------------------------------------------------------------------------
# Layer helpers (use_pallas=False gives a bit-equivalent plain-JAX path used
# only as a tight correctness reference for the kernels).
# ----------------------------------------------------------------------------
def _conv_bn_layer(x_nhwc, w_oihw, gamma, beta, *, stride, pad, neg_slope,
                   use_pallas, tm):
    co, _, kh, kw = w_oihw.shape
    n_pad = _round_up(co, 128)
    w_mat = _w_to_mat(w_oihw)
    w_mat = jnp.pad(w_mat, ((0, 0), (0, n_pad - co))).astype(jnp.bfloat16)
    g = jnp.pad(gamma.astype(jnp.float32), (0, n_pad - co))
    b = jnp.pad(beta.astype(jnp.float32), (0, n_pad - co))

    xm, (bsz, ho, wo) = _im2col(x_nhwc, kh, kw, stride, pad)
    xm = xm.astype(jnp.bfloat16)
    m = xm.shape[0]

    if use_pallas:
        y, parts = gemm_stats(xm, w_mat, tm=tm)
        tot = jnp.sum(parts, axis=0)                                 # (2, n_pad)
    else:
        y = jnp.dot(xm, w_mat, preferred_element_type=jnp.float32)
        tot = jnp.stack([jnp.sum(y, axis=0), jnp.sum(y * y, axis=0)])

    mean = tot[0] / m
    var = jnp.maximum(tot[1] / m - mean * mean, 0.0)   # biased var (PyTorch BN)
    scale = g * lax.rsqrt(var + _BN_EPS)
    shift = b - mean * scale

    if use_pallas:
        out = bn_act(y, scale.reshape(1, n_pad), shift.reshape(1, n_pad),
                     neg_slope=neg_slope, tm=tm)
    else:
        o = y * scale.reshape(1, n_pad) + shift.reshape(1, n_pad)
        if neg_slope is not None:
            o = jnp.where(o >= 0.0, o, neg_slope * o)
        out = o.astype(jnp.bfloat16)

    return out.reshape(bsz, ho, wo, n_pad)[..., :co]


def _conv_sigmoid_layer(x_nhwc, w_oihw, bias, *, use_pallas, tm):
    co, _, kh, kw = w_oihw.shape
    n_pad = _round_up(co, 128)
    w_mat = jnp.pad(_w_to_mat(w_oihw), ((0, 0), (0, n_pad - co))).astype(jnp.bfloat16)
    b_row = jnp.pad(bias.astype(jnp.float32), (0, n_pad - co)).reshape(1, n_pad)

    xm, (bsz, ho, wo) = _im2col(x_nhwc, kh, kw, 1, 0)
    xm = xm.astype(jnp.bfloat16)
    m = xm.shape[0]
    m_pad = _round_up(m, 16)
    if m_pad != m:
        xm = jnp.pad(xm, ((0, m_pad - m), (0, 0)))

    if use_pallas:
        out = gemm_bias_sigmoid(xm, w_mat, b_row, tm=tm)
    else:
        out = jax.nn.sigmoid(jnp.dot(xm, w_mat, preferred_element_type=jnp.float32) + b_row)

    return out[:m, :co].reshape(bsz, ho, wo, co)


# ----------------------------------------------------------------------------
# Full forward pass (matches Discriminator.forward, training-mode BN)
# ----------------------------------------------------------------------------
def discriminator_forward(params, x_nchw, label, *, use_pallas=True, tm=256):
    ndf = params["w_in"].shape[0]
    bsz = x_nchw.shape[0]

    # torch.zeros(B,10).scatter_(1, label.unsqueeze(1), 0.1) == 0.1 * one_hot
    onehot = 0.1 * jax.nn.one_hot(label, 10, dtype=jnp.float32)
    lab_img = jnp.broadcast_to(onehot[:, None, None, :], (bsz, 64, 64, 10))
    x_nhwc = jnp.transpose(x_nchw, (0, 2, 3, 1))
    x0 = jnp.concatenate([x_nhwc, lab_img], axis=-1)               # (B,64,64,11)

    # Fuse embed_input + embed_label into one block-diagonal conv.  Exact:
    # BatchNorm is per-channel, so separate BNs == BN of the concatenation.
    w_emb = jnp.zeros((2 * ndf, 11, 4, 4), jnp.float32)
    w_emb = w_emb.at[:ndf, 0:1].set(params["w_in"])
    w_emb = w_emb.at[ndf:, 1:].set(params["w_lab"])
    g_emb = jnp.concatenate([params["g_in"], params["g_lab"]])
    b_emb = jnp.concatenate([params["b_in"], params["b_lab"]])

    h = _conv_bn_layer(x0, w_emb, g_emb, b_emb, stride=2, pad=1,
                       neg_slope=None, use_pallas=use_pallas, tm=tm)   # (B,32,32,2ndf)
    h = _conv_bn_layer(h, params["w_d1"], params["g_d1"], params["b_d1"],
                       stride=2, pad=1, neg_slope=0.2,
                       use_pallas=use_pallas, tm=tm)                   # (B,16,16,4ndf)
    h = _conv_bn_layer(h, params["w_d2"], params["g_d2"], params["b_d2"],
                       stride=2, pad=1, neg_slope=0.2,
                       use_pallas=use_pallas, tm=tm)                   # (B,8,8,8ndf)
    out = _conv_sigmoid_layer(h, params["w_d3"], params["bias_d3"],
                              use_pallas=use_pallas, tm=tm)            # (B,5,5,1)
    return jnp.transpose(out, (0, 3, 1, 2))                            # NCHW


# ----------------------------------------------------------------------------
# Pure-JAX f32 reference (PyTorch-equivalent math, HIGHEST precision conv)
# ----------------------------------------------------------------------------
def _conv_ref(x, w, stride, pad):
    return lax.conv_general_dilated(
        x, w, (stride, stride), [(pad, pad), (pad, pad)],
        dimension_numbers=("NCHW", "OIHW", "NCHW"),
        precision=lax.Precision.HIGHEST)


def _bn_ref(x, g, b, eps=_BN_EPS):
    mean = jnp.mean(x, axis=(0, 2, 3), keepdims=True)
    var = jnp.mean(jnp.square(x - mean), axis=(0, 2, 3), keepdims=True)
    return (x - mean) * lax.rsqrt(var + eps) * g.reshape(1, -1, 1, 1) + b.reshape(1, -1, 1, 1)


def reference_forward(params, x_nchw, label):
    bsz = x_nchw.shape[0]
    onehot = 0.1 * jax.nn.one_hot(label, 10, dtype=jnp.float32)
    lab = jnp.broadcast_to(onehot[:, :, None, None], (bsz, 10, 64, 64))
    e_in = _bn_ref(_conv_ref(x_nchw, params["w_in"], 2, 1), params["g_in"], params["b_in"])
    e_lab = _bn_ref(_conv_ref(lab, params["w_lab"], 2, 1), params["g_lab"], params["b_lab"])
    h = jnp.concatenate([e_in, e_lab], axis=1)
    h = _bn_ref(_conv_ref(h, params["w_d1"], 2, 1), params["g_d1"], params["b_d1"])
    h = jnp.where(h >= 0, h, 0.2 * h)
    h = _bn_ref(_conv_ref(h, params["w_d2"], 2, 1), params["g_d2"], params["b_d2"])
    h = jnp.where(h >= 0, h, 0.2 * h)
    h = _conv_ref(h, params["w_d3"], 1, 0) + params["bias_d3"].reshape(1, 1, 1, 1)
    return jax.nn.sigmoid(h)


# ----------------------------------------------------------------------------
if __name__ == "__main__":
    ndf = 16        # reduced from the default 64 to keep the example small
    bsz = 2
    key = jax.random.PRNGKey(0)
    ks = jax.random.split(key, 8)

    params = {
        "w_in":  0.05 * jax.random.normal(ks[0], (ndf, 1, 4, 4), jnp.float32),
        "w_lab": 0.05 * jax.random.normal(ks[1], (ndf, 10, 4, 4), jnp.float32),
        "w_d1":  0.05 * jax.random.normal(ks[2], (4 * ndf, 2 * ndf, 4, 4), jnp.float32),
        "w_d2":  0.05 * jax.random.normal(ks[3], (8 * ndf, 4 * ndf, 4, 4), jnp.float32),
        "w_d3":  0.05 * jax.random.normal(ks[4], (1, 8 * ndf, 4, 4), jnp.float32),
        "bias_d3": jnp.zeros((1,), jnp.float32),
        # BatchNorm affine params at PyTorch default init (gamma=1, beta=0)
        "g_in":  jnp.ones((ndf,), jnp.float32),      "b_in":  jnp.zeros((ndf,), jnp.float32),
        "g_lab": jnp.ones((ndf,), jnp.float32),      "b_lab": jnp.zeros((ndf,), jnp.float32),
        "g_d1":  jnp.ones((4 * ndf,), jnp.float32),  "b_d1":  jnp.zeros((4 * ndf,), jnp.float32),
        "g_d2":  jnp.ones((8 * ndf,), jnp.float32),  "b_d2":  jnp.zeros((8 * ndf,), jnp.float32),
    }

    x = jax.random.normal(ks[5], (bsz, 1, 64, 64), jnp.float32)
    label = jax.random.randint(ks[6], (bsz,), 0, 10, jnp.int32)

    fwd_pallas = jax.jit(functools.partial(discriminator_forward, use_pallas=True))
    fwd_same_math = jax.jit(functools.partial(discriminator_forward, use_pallas=False))

    out = jax.block_until_ready(fwd_pallas(params, x, label))
    assert out.shape == (bsz, 1, 5, 5), out.shape

    # Tight check: same math (bf16 MXU inputs, two-pass batch BN) in plain JAX.
    same = jax.block_until_ready(fwd_same_math(params, x, label))
    d_tight = float(jnp.max(jnp.abs(out - same)))
    assert d_tight < 5e-3, d_tight

    # Loose check: f32 HIGHEST-precision PyTorch-equivalent reference
    # (bounds the deliberate bf16-MXU precision change end-to-end).
    ref = jax.block_until_ready(reference_forward(params, x, label))
    d_loose = float(jnp.max(jnp.abs(out - ref)))
    assert d_loose < 5e-2, d_loose

    print("KERNEL_OK")
</pallas_src>

<mosaic_0001>
module attributes {stable_mosaic.version = 11 : i64} {
  func.func @_gemm_stats_kernel(%arg0: i32, %arg1: memref<256x176xbf16, #tpu.memory_space<vmem>>, %arg2: memref<176x128xbf16, #tpu.memory_space<vmem>>, %arg3: memref<256x128xf32, #tpu.memory_space<vmem>>, %arg4: memref<1x2x128xf32, #tpu.memory_space<vmem>>) attributes {dimension_semantics = [#tpu.dimension_semantics<parallel>], iteration_bounds = array<i64: 8>, scalar_prefetch = 0 : i64, scratch_operands = 0 : i64, tpu.core_type = #tpu.core_type<tc>, window_params = [{transform_indices = @transform_0, window_bounds = array<i64: 256, 176>}, {pipeline_mode = #tpu.pipeline_mode<synchronous>, transform_indices = @transform_1, window_bounds = array<i64: 176, 128>}, {transform_indices = @transform_2, window_bounds = array<i64: 256, 128>}, {transform_indices = @transform_3, window_bounds = array<i64: 1, 2, 128>}]} {
    %c0 = arith.constant 0 : index
    %c0_0 = arith.constant 0 : index
    %0 = vector.load %arg1[%c0, %c0_0] : memref<256x176xbf16, #tpu.memory_space<vmem>>, vector<256x176xbf16>
    %c0_1 = arith.constant 0 : index
    %c0_2 = arith.constant 0 : index
    %1 = vector.load %arg2[%c0_1, %c0_2] : memref<176x128xbf16, #tpu.memory_space<vmem>>, vector<176x128xbf16>
    %cst = arith.constant dense<0.000000e+00> : vector<256x128xf32>
    %2 = tpu.matmul %0, %1, %cst {dimension_numbers = #tpu.dot_dimension_numbers<[1], [0], [0], [1], [0, 0, 1, 1], [], []>} : vector<256x176xbf16>, vector<176x128xbf16>, vector<256x128xf32> -> vector<256x128xf32>
    %c0_3 = arith.constant 0 : index
    %c0_4 = arith.constant 0 : index
    %3 = vector.load %arg3[%c0_3, %c0_4] : memref<256x128xf32, #tpu.memory_space<vmem>>, vector<256x128xf32>
    tpu.vector_store %arg3[%c0_3, %c0_4], %2 {strides = array<i32>} : memref<256x128xf32, #tpu.memory_space<vmem>>, vector<256x128xf32>,
    %cst_5 = arith.constant dense<0.000000e+00> : vector<128xf32>
    %4 = vector.multi_reduction <add>, %2, %cst_5 [0] : vector<256x128xf32> to vector<128xf32>
    %5 = vector.shape_cast %4 : vector<128xf32> to vector<1x128xf32>
    %6 = arith.mulf %2, %2 : vector<256x128xf32>
    %cst_6 = arith.constant dense<0.000000e+00> : vector<128xf32>
    %7 = vector.multi_reduction <add>, %6, %cst_6 [0] : vector<256x128xf32> to vector<128xf32>
    %8 = vector.shape_cast %7 : vector<128xf32> to vector<1x128xf32>
    %9 = tpu.concatenate %5, %8 in 0 : vector<1x128xf32>, vector<1x128xf32> -> vector<2x128xf32>
    %10 = vector.shape_cast %9 : vector<2x128xf32> to vector<1x2x128xf32>
    %c0_7 = arith.constant 0 : index
    %c0_8 = arith.constant 0 : index
    %c0_9 = arith.constant 0 : index
    %11 = vector.load %arg4[%c0_7, %c0_8, %c0_9] : memref<1x2x128xf32, #tpu.memory_space<vmem>>, vector<1x2x128xf32>
    tpu.vector_store %arg4[%c0_7, %c0_8, %c0_9], %10 {strides = array<i32>} : memref<1x2x128xf32, #tpu.memory_space<vmem>>, vector<1x2x128xf32>,
    return
  }
  func.func @transform_0(%arg0: i32) -> (i32, i32) {
    %c0_i32 = arith.constant 0 : i32
    %c0_i32_0 = arith.constant 0 : i32
    return %arg0, %c0_i32 : i32, i32
  }
  func.func @transform_1(%arg0: i32) -> (i32, i32) {
    %c0_i32 = arith.constant 0 : i32
    %c0_i32_0 = arith.constant 0 : i32
    %c0_i32_1 = arith.constant 0 : i32
    return %c0_i32, %c0_i32_0 : i32, i32
  }
  func.func @transform_2(%arg0: i32) -> (i32, i32) {
    %c0_i32 = arith.constant 0 : i32
    %c0_i32_0 = arith.constant 0 : i32
    return %arg0, %c0_i32 : i32, i32
  }
  func.func @transform_3(%arg0: i32) -> (i32, i32, i32) {
    %c0_i32 = arith.constant 0 : i32
    %c0_i32_0 = arith.constant 0 : i32
    %c0_i32_1 = arith.constant 0 : i32
    return %arg0, %c0_i32, %c0_i32_0 : i32, i32, i32
  }
}

module attributes {stable_mosaic.version = 11 : i64} {
  func.func @_bn_act_kernel(%arg0: i32, %arg1: memref<256x128xf32, #tpu.memory_space<vmem>>, %arg2: memref<1x128xf32, #tpu.memory_space<vmem>>, %arg3: memref<1x128xf32, #tpu.memory_space<vmem>>, %arg4: memref<256x128xbf16, #tpu.memory_space<vmem>>) attributes {dimension_semantics = [#tpu.dimension_semantics<parallel>], iteration_bounds = array<i64: 8>, scalar_prefetch = 0 : i64, scratch_operands = 0 : i64, tpu.core_type = #tpu.core_type<tc>, window_params = [{transform_indices = @transform_0, window_bounds = array<i64: 256, 128>}, {pipeline_mode = #tpu.pipeline_mode<synchronous>, transform_indices = @transform_1, window_bounds = array<i64: 1, 128>}, {pipeline_mode = #tpu.pipeline_mode<synchronous>, transform_indices = @transform_2, window_bounds = array<i64: 1, 128>}, {transform_indices = @transform_3, window_bounds = array<i64: 256, 128>}]} {
    %c0 = arith.constant 0 : index
    %c0_0 = arith.constant 0 : index
    %0 = vector.load %arg1[%c0, %c0_0] : memref<256x128xf32, #tpu.memory_space<vmem>>, vector<256x128xf32>
    %c0_1 = arith.constant 0 : index
    %c0_2 = arith.constant 0 : index
    %1 = vector.load %arg2[%c0_1, %c0_2] : memref<1x128xf32, #tpu.memory_space<vmem>>, vector<1x128xf32>
    %2 = vector.broadcast %1 : vector<1x128xf32> to vector<256x128xf32>
    %3 = arith.mulf %0, %2 : vector<256x128xf32>
    %c0_3 = arith.constant 0 : index
    %c0_4 = arith.constant 0 : index
    %4 = vector.load %arg3[%c0_3, %c0_4] : memref<1x128xf32, #tpu.memory_space<vmem>>, vector<1x128xf32>
    %5 = vector.broadcast %4 : vector<1x128xf32> to vector<256x128xf32>
    %6 = arith.addf %3, %5 : vector<256x128xf32>
    %7 = arith.truncf %6 : vector<256x128xf32> to vector<256x128xbf16>
    %c0_5 = arith.constant 0 : index
    %c0_6 = arith.constant 0 : index
    %8 = vector.load %arg4[%c0_5, %c0_6] : memref<256x128xbf16, #tpu.memory_space<vmem>>, vector<256x128xbf16>
    tpu.vector_store %arg4[%c0_5, %c0_6], %7 {strides = array<i32>} : memref<256x128xbf16, #tpu.memory_space<vmem>>, vector<256x128xbf16>,
    return
  }
  func.func @transform_0(%arg0: i32) -> (i32, i32) {
    %c0_i32 = arith.constant 0 : i32
    %c0_i32_0 = arith.constant 0 : i32
    return %arg0, %c0_i32 : i32, i32
  }
  func.func @transform_1(%arg0: i32) -> (i32, i32) {
    %c0_i32 = arith.constant 0 : i32
    %c0_i32_0 = arith.constant 0 : i32
    %c0_i32_1 = arith.constant 0 : i32
    return %c0_i32, %c0_i32_0 : i32, i32
  }
  func.func @transform_2(%arg0: i32) -> (i32, i32) {
    %c0_i32 = arith.constant 0 : i32
    %c0_i32_0 = arith.constant 0 : i32
    %c0_i32_1 = arith.constant 0 : i32
    return %c0_i32, %c0_i32_0 : i32, i32
  }
  func.func @transform_3(%arg0: i32) -> (i32, i32) {
    %c0_i32 = arith.constant 0 : i32
    %c0_i32_0 = arith.constant 0 : i32
    return %arg0, %c0_i32 : i32, i32
  }
}

module attributes {stable_mosaic.version = 11 : i64} {
  func.func @_gemm_stats_kernel(%arg0: i32, %arg1: memref<256x512xbf16, #tpu.memory_space<vmem>>, %arg2: memref<512x128xbf16, #tpu.memory_space<vmem>>, %arg3: memref<256x128xf32, #tpu.memory_space<vmem>>, %arg4: memref<1x2x128xf32, #tpu.memory_space<vmem>>) attributes {dimension_semantics = [#tpu.dimension_semantics<parallel>], iteration_bounds = array<i64: 2>, scalar_prefetch = 0 : i64, scratch_operands = 0 : i64, tpu.core_type = #tpu.core_type<tc>, window_params = [{transform_indices = @transform_0, window_bounds = array<i64: 256, 512>}, {pipeline_mode = #tpu.pipeline_mode<synchronous>, transform_indices = @transform_1, window_bounds = array<i64: 512, 128>}, {transform_indices = @transform_2, window_bounds = array<i64: 256, 128>}, {transform_indices = @transform_3, window_bounds = array<i64: 1, 2, 128>}]} {
    %c0 = arith.constant 0 : index
    %c0_0 = arith.constant 0 : index
    %0 = vector.load %arg1[%c0, %c0_0] : memref<256x512xbf16, #tpu.memory_space<vmem>>, vector<256x512xbf16>
    %c0_1 = arith.constant 0 : index
    %c0_2 = arith.constant 0 : index
    %1 = vector.load %arg2[%c0_1, %c0_2] : memref<512x128xbf16, #tpu.memory_space<vmem>>, vector<512x128xbf16>
    %cst = arith.constant dense<0.000000e+00> : vector<256x128xf32>
    %2 = tpu.matmul %0, %1, %cst {dimension_numbers = #tpu.dot_dimension_numbers<[1], [0], [0], [1], [0, 0, 1, 1], [], []>} : vector<256x512xbf16>, vector<512x128xbf16>, vector<256x128xf32> -> vector<256x128xf32>
    %c0_3 = arith.constant 0 : index
    %c0_4 = arith.constant 0 : index
    %3 = vector.load %arg3[%c0_3, %c0_4] : memref<256x128xf32, #tpu.memory_space<vmem>>, vector<256x128xf32>
    tpu.vector_store %arg3[%c0_3, %c0_4], %2 {strides = array<i32>} : memref<256x128xf32, #tpu.memory_space<vmem>>, vector<256x128xf32>,
    %cst_5 = arith.constant dense<0.000000e+00> : vector<128xf32>
    %4 = vector.multi_reduction <add>, %2, %cst_5 [0] : vector<256x128xf32> to vector<128xf32>
    %5 = vector.shape_cast %4 : vector<128xf32> to vector<1x128xf32>
    %6 = arith.mulf %2, %2 : vector<256x128xf32>
    %cst_6 = arith.constant dense<0.000000e+00> : vector<128xf32>
    %7 = vector.multi_reduction <add>, %6, %cst_6 [0] : vector<256x128xf32> to vector<128xf32>
    %8 = vector.shape_cast %7 : vector<128xf32> to vector<1x128xf32>
    %9 = tpu.concatenate %5, %8 in 0 : vector<1x128xf32>, vector<1x128xf32> -> vector<2x128xf32>
    %10 = vector.shape_cast %9 : vector<2x128xf32> to vector<1x2x128xf32>
    %c0_7 = arith.constant 0 : index
    %c0_8 = arith.constant 0 : index
    %c0_9 = arith.constant 0 : index
    %11 = vector.load %arg4[%c0_7, %c0_8, %c0_9] : memref<1x2x128xf32, #tpu.memory_space<vmem>>, vector<1x2x128xf32>
    tpu.vector_store %arg4[%c0_7, %c0_8, %c0_9], %10 {strides = array<i32>} : memref<1x2x128xf32, #tpu.memory_space<vmem>>, vector<1x2x128xf32>,
    return
  }
  func.func @transform_0(%arg0: i32) -> (i32, i32) {
    %c0_i32 = arith.constant 0 : i32
    %c0_i32_0 = arith.constant 0 : i32
    return %arg0, %c0_i32 : i32, i32
  }
  func.func @transform_1(%arg0: i32) -> (i32, i32) {
    %c0_i32 = arith.constant 0 : i32
    %c0_i32_0 = arith.constant 0 : i32
    %c0_i32_1 = arith.constant 0 : i32
    return %c0_i32, %c0_i32_0 : i32, i32
  }
  func.func @transform_2(%arg0: i32) -> (i32, i32) {
    %c0_i32 = arith.constant 0 : i32
    %c0_i32_0 = arith.constant 0 : i32
    return %arg0, %c0_i32 : i32, i32
  }
  func.func @transform_3(%arg0: i32) -> (i32, i32, i32) {
    %c0_i32 = arith.constant 0 : i32
    %c0_i32_0 = arith.constant 0 : i32
    %c0_i32_1 = arith.constant 0 : i32
    return %arg0, %c0_i32, %c0_i32_0 : i32, i32, i32
  }
}

module attributes {stable_mosaic.version = 11 : i64} {
  func.func @_bn_act_kernel(%arg0: i32, %arg1: memref<256x128xf32, #tpu.memory_space<vmem>>, %arg2: memref<1x128xf32, #tpu.memory_space<vmem>>, %arg3: memref<1x128xf32, #tpu.memory_space<vmem>>, %arg4: memref<256x128xbf16, #tpu.memory_space<vmem>>) attributes {dimension_semantics = [#tpu.dimension_semantics<parallel>], iteration_bounds = array<i64: 2>, scalar_prefetch = 0 : i64, scratch_operands = 0 : i64, tpu.core_type = #tpu.core_type<tc>, window_params = [{transform_indices = @transform_0, window_bounds = array<i64: 256, 128>}, {pipeline_mode = #tpu.pipeline_mode<synchronous>, transform_indices = @transform_1, window_bounds = array<i64: 1, 128>}, {pipeline_mode = #tpu.pipeline_mode<synchronous>, transform_indices = @transform_2, window_bounds = array<i64: 1, 128>}, {transform_indices = @transform_3, window_bounds = array<i64: 256, 128>}]} {
    %c0 = arith.constant 0 : index
    %c0_0 = arith.constant 0 : index
    %0 = vector.load %arg1[%c0, %c0_0] : memref<256x128xf32, #tpu.memory_space<vmem>>, vector<256x128xf32>
    %c0_1 = arith.constant 0 : index
    %c0_2 = arith.constant 0 : index
    %1 = vector.load %arg2[%c0_1, %c0_2] : memref<1x128xf32, #tpu.memory_space<vmem>>, vector<1x128xf32>
    %2 = vector.broadcast %1 : vector<1x128xf32> to vector<256x128xf32>
    %3 = arith.mulf %0, %2 : vector<256x128xf32>
    %c0_3 = arith.constant 0 : index
    %c0_4 = arith.constant 0 : index
    %4 = vector.load %arg3[%c0_3, %c0_4] : memref<1x128xf32, #tpu.memory_space<vmem>>, vector<1x128xf32>
    %5 = vector.broadcast %4 : vector<1x128xf32> to vector<256x128xf32>
    %6 = arith.addf %3, %5 : vector<256x128xf32>
    %cst = arith.constant 0.000000e+00 : f32
    %7 = vector.broadcast %cst : f32 to vector<256x128xf32>
    %8 = arith.cmpf oge, %6, %7 : vector<256x128xf32>
    %cst_5 = arith.constant 2.000000e-01 : f32
    %9 = vector.broadcast %cst_5 : f32 to vector<256x128xf32>
    %10 = arith.mulf %9, %6 : vector<256x128xf32>
    %11 = arith.select %8, %6, %10 : vector<256x128xi1>, vector<256x128xf32>
    %12 = arith.truncf %11 : vector<256x128xf32> to vector<256x128xbf16>
    %c0_6 = arith.constant 0 : index
    %c0_7 = arith.constant 0 : index
    %13 = vector.load %arg4[%c0_6, %c0_7] : memref<256x128xbf16, #tpu.memory_space<vmem>>, vector<256x128xbf16>
    tpu.vector_store %arg4[%c0_6, %c0_7], %12 {strides = array<i32>} : memref<256x128xbf16, #tpu.memory_space<vmem>>, vector<256x128xbf16>,
    return
  }
  func.func @transform_0(%arg0: i32) -> (i32, i32) {
    %c0_i32 = arith.constant 0 : i32
    %c0_i32_0 = arith.constant 0 : i32
    return %arg0, %c0_i32 : i32, i32
  }
  func.func @transform_1(%arg0: i32) -> (i32, i32) {
    %c0_i32 = arith.constant 0 : i32
    %c0_i32_0 = arith.constant 0 : i32
    %c0_i32_1 = arith.constant 0 : i32
    return %c0_i32, %c0_i32_0 : i32, i32
  }
  func.func @transform_2(%arg0: i32) -> (i32, i32) {
    %c0_i32 = arith.constant 0 : i32
    %c0_i32_0 = arith.constant 0 : i32
    %c0_i32_1 = arith.constant 0 : i32
    return %c0_i32, %c0_i32_0 : i32, i32
  }
  func.func @transform_3(%arg0: i32) -> (i32, i32) {
    %c0_i32 = arith.constant 0 : i32
    %c0_i32_0 = arith.constant 0 : i32
    return %arg0, %c0_i32 : i32, i32
  }
}

module attributes {stable_mosaic.version = 11 : i64} {
  func.func @_gemm_stats_kernel(%arg0: i32, %arg1: memref<128x1024xbf16, #tpu.memory_space<vmem>>, %arg2: memref<1024x128xbf16, #tpu.memory_space<vmem>>, %arg3: memref<128x128xf32, #tpu.memory_space<vmem>>, %arg4: memref<1x2x128xf32, #tpu.memory_space<vmem>>) attributes {dimension_semantics = [#tpu.dimension_semantics<parallel>], iteration_bounds = array<i64: 1>, scalar_prefetch = 0 : i64, scratch_operands = 0 : i64, tpu.core_type = #tpu.core_type<tc>, window_params = [{transform_indices = @transform_0, window_bounds = array<i64: 128, 1024>}, {pipeline_mode = #tpu.pipeline_mode<synchronous>, transform_indices = @transform_1, window_bounds = array<i64: 1024, 128>}, {transform_indices = @transform_2, window_bounds = array<i64: 128, 128>}, {transform_indices = @transform_3, window_bounds = array<i64: 1, 2, 128>}]} {
    %c0 = arith.constant 0 : index
    %c0_0 = arith.constant 0 : index
    %0 = vector.load %arg1[%c0, %c0_0] : memref<128x1024xbf16, #tpu.memory_space<vmem>>, vector<128x1024xbf16>
    %c0_1 = arith.constant 0 : index
    %c0_2 = arith.constant 0 : index
    %1 = vector.load %arg2[%c0_1, %c0_2] : memref<1024x128xbf16, #tpu.memory_space<vmem>>, vector<1024x128xbf16>
    %cst = arith.constant dense<0.000000e+00> : vector<128x128xf32>
    %2 = tpu.matmul %0, %1, %cst {dimension_numbers = #tpu.dot_dimension_numbers<[1], [0], [0], [1], [0, 0, 1, 1], [], []>} : vector<128x1024xbf16>, vector<1024x128xbf16>, vector<128x128xf32> -> vector<128x128xf32>
    %c0_3 = arith.constant 0 : index
    %c0_4 = arith.constant 0 : index
    %3 = vector.load %arg3[%c0_3, %c0_4] : memref<128x128xf32, #tpu.memory_space<vmem>>, vector<128x128xf32>
    tpu.vector_store %arg3[%c0_3, %c0_4], %2 {strides = array<i32>} : memref<128x128xf32, #tpu.memory_space<vmem>>, vector<128x128xf32>,
    %cst_5 = arith.constant dense<0.000000e+00> : vector<128xf32>
    %4 = vector.multi_reduction <add>, %2, %cst_5 [0] : vector<128x128xf32> to vector<128xf32>
    %5 = vector.shape_cast %4 : vector<128xf32> to vector<1x128xf32>
    %6 = arith.mulf %2, %2 : vector<128x128xf32>
    %cst_6 = arith.constant dense<0.000000e+00> : vector<128xf32>
    %7 = vector.multi_reduction <add>, %6, %cst_6 [0] : vector<128x128xf32> to vector<128xf32>
    %8 = vector.shape_cast %7 : vector<128xf32> to vector<1x128xf32>
    %9 = tpu.concatenate %5, %8 in 0 : vector<1x128xf32>, vector<1x128xf32> -> vector<2x128xf32>
    %10 = vector.shape_cast %9 : vector<2x128xf32> to vector<1x2x128xf32>
    %c0_7 = arith.constant 0 : index
    %c0_8 = arith.constant 0 : index
    %c0_9 = arith.constant 0 : index
    %11 = vector.load %arg4[%c0_7, %c0_8, %c0_9] : memref<1x2x128xf32, #tpu.memory_space<vmem>>, vector<1x2x128xf32>
    tpu.vector_store %arg4[%c0_7, %c0_8, %c0_9], %10 {strides = array<i32>} : memref<1x2x128xf32, #tpu.memory_space<vmem>>, vector<1x2x128xf32>,
    return
  }
  func.func @transform_0(%arg0: i32) -> (i32, i32) {
    %c0_i32 = arith.constant 0 : i32
    %c0_i32_0 = arith.constant 0 : i32
    return %arg0, %c0_i32 : i32, i32
  }
  func.func @transform_1(%arg0: i32) -> (i32, i32) {
    %c0_i32 = arith.constant 0 : i32
    %c0_i32_0 = arith.constant 0 : i32
    %c0_i32_1 = arith.constant 0 : i32
    return %c0_i32, %c0_i32_0 : i32, i32
  }
  func.func @transform_2(%arg0: i32) -> (i32, i32) {
    %c0_i32 = arith.constant 0 : i32
    %c0_i32_0 = arith.constant 0 : i32
    return %arg0, %c0_i32 : i32, i32
  }
  func.func @transform_3(%arg0: i32) -> (i32, i32, i32) {
    %c0_i32 = arith.constant 0 : i32
    %c0_i32_0 = arith.constant 0 : i32
    %c0_i32_1 = arith.constant 0 : i32
    return %arg0, %c0_i32, %c0_i32_0 : i32, i32, i32
  }
}

module attributes {stable_mosaic.version = 11 : i64} {
  func.func @_bn_act_kernel(%arg0: i32, %arg1: memref<128x128xf32, #tpu.memory_space<vmem>>, %arg2: memref<1x128xf32, #tpu.memory_space<vmem>>, %arg3: memref<1x128xf32, #tpu.memory_space<vmem>>, %arg4: memref<128x128xbf16, #tpu.memory_space<vmem>>) attributes {dimension_semantics = [#tpu.dimension_semantics<parallel>], iteration_bounds = array<i64: 1>, scalar_prefetch = 0 : i64, scratch_operands = 0 : i64, tpu.core_type = #tpu.core_type<tc>, window_params = [{transform_indices = @transform_0, window_bounds = array<i64: 128, 128>}, {pipeline_mode = #tpu.pipeline_mode<synchronous>, transform_indices = @transform_1, window_bounds = array<i64: 1, 128>}, {pipeline_mode = #tpu.pipeline_mode<synchronous>, transform_indices = @transform_2, window_bounds = array<i64: 1, 128>}, {transform_indices = @transform_3, window_bounds = array<i64: 128, 128>}]} {
    %c0 = arith.constant 0 : index
    %c0_0 = arith.constant 0 : index
    %0 = vector.load %arg1[%c0, %c0_0] : memref<128x128xf32, #tpu.memory_space<vmem>>, vector<128x128xf32>
    %c0_1 = arith.constant 0 : index
    %c0_2 = arith.constant 0 : index
    %1 = vector.load %arg2[%c0_1, %c0_2] : memref<1x128xf32, #tpu.memory_space<vmem>>, vector<1x128xf32>
    %2 = vector.broadcast %1 : vector<1x128xf32> to vector<128x128xf32>
    %3 = arith.mulf %0, %2 : vector<128x128xf32>
    %c0_3 = arith.constant 0 : index
    %c0_4 = arith.constant 0 : index
    %4 = vector.load %arg3[%c0_3, %c0_4] : memref<1x128xf32, #tpu.memory_space<vmem>>, vector<1x128xf32>
    %5 = vector.broadcast %4 : vector<1x128xf32> to vector<128x128xf32>
    %6 = arith.addf %3, %5 : vector<128x128xf32>
    %cst = arith.constant 0.000000e+00 : f32
    %7 = vector.broadcast %cst : f32 to vector<128x128xf32>
    %8 = arith.cmpf oge, %6, %7 : vector<128x128xf32>
    %cst_5 = arith.constant 2.000000e-01 : f32
    %9 = vector.broadcast %cst_5 : f32 to vector<128x128xf32>
    %10 = arith.mulf %9, %6 : vector<128x128xf32>
    %11 = arith.select %8, %6, %10 : vector<128x128xi1>, vector<128x128xf32>
    %12 = arith.truncf %11 : vector<128x128xf32> to vector<128x128xbf16>
    %c0_6 = arith.constant 0 : index
    %c0_7 = arith.constant 0 : index
    %13 = vector.load %arg4[%c0_6, %c0_7] : memref<128x128xbf16, #tpu.memory_space<vmem>>, vector<128x128xbf16>
    tpu.vector_store %arg4[%c0_6, %c0_7], %12 {strides = array<i32>} : memref<128x128xbf16, #tpu.memory_space<vmem>>, vector<128x128xbf16>,
    return
  }
  func.func @transform_0(%arg0: i32) -> (i32, i32) {
    %c0_i32 = arith.constant 0 : i32
    %c0_i32_0 = arith.constant 0 : i32
    return %arg0, %c0_i32 : i32, i32
  }
  func.func @transform_1(%arg0: i32) -> (i32, i32) {
    %c0_i32 = arith.constant 0 : i32
    %c0_i32_0 = arith.constant 0 : i32
    %c0_i32_1 = arith.constant 0 : i32
    return %c0_i32, %c0_i32_0 : i32, i32
  }
  func.func @transform_2(%arg0: i32) -> (i32, i32) {
    %c0_i32 = arith.constant 0 : i32
    %c0_i32_0 = arith.constant 0 : i32
    %c0_i32_1 = arith.constant 0 : i32
    return %c0_i32, %c0_i32_0 : i32, i32
  }
  func.func @transform_3(%arg0: i32) -> (i32, i32) {
    %c0_i32 = arith.constant 0 : i32
    %c0_i32_0 = arith.constant 0 : i32
    return %arg0, %c0_i32 : i32, i32
  }
}

module attributes {stable_mosaic.version = 11 : i64} {
  func.func @_gemm_bias_sigmoid_kernel(%arg0: i32, %arg1: memref<64x2048xbf16, #tpu.memory_space<vmem>>, %arg2: memref<2048x128xbf16, #tpu.memory_space<vmem>>, %arg3: memref<1x128xf32, #tpu.memory_space<vmem>>, %arg4: memref<64x128xf32, #tpu.memory_space<vmem>>) attributes {dimension_semantics = [#tpu.dimension_semantics<parallel>], iteration_bounds = array<i64: 1>, scalar_prefetch = 0 : i64, scratch_operands = 0 : i64, tpu.core_type = #tpu.core_type<tc>, window_params = [{transform_indices = @transform_0, window_bounds = array<i64: 64, 2048>}, {pipeline_mode = #tpu.pipeline_mode<synchronous>, transform_indices = @transform_1, window_bounds = array<i64: 2048, 128>}, {pipeline_mode = #tpu.pipeline_mode<synchronous>, transform_indices = @transform_2, window_bounds = array<i64: 1, 128>}, {transform_indices = @transform_3, window_bounds = array<i64: 64, 128>}]} {
    %c0 = arith.constant 0 : index
    %c0_0 = arith.constant 0 : index
    %0 = vector.load %arg1[%c0, %c0_0] : memref<64x2048xbf16, #tpu.memory_space<vmem>>, vector<64x2048xbf16>
    %c0_1 = arith.constant 0 : index
    %c0_2 = arith.constant 0 : index
    %1 = vector.load %arg2[%c0_1, %c0_2] : memref<2048x128xbf16, #tpu.memory_space<vmem>>, vector<2048x128xbf16>
    %cst = arith.constant dense<0.000000e+00> : vector<64x128xf32>
    %2 = tpu.matmul %0, %1, %cst {dimension_numbers = #tpu.dot_dimension_numbers<[1], [0], [0], [1], [0, 0, 1, 1], [], []>} : vector<64x2048xbf16>, vector<2048x128xbf16>, vector<64x128xf32> -> vector<64x128xf32>
    %c0_3 = arith.constant 0 : index
    %c0_4 = arith.constant 0 : index
    %3 = vector.load %arg3[%c0_3, %c0_4] : memref<1x128xf32, #tpu.memory_space<vmem>>, vector<1x128xf32>
    %4 = vector.broadcast %3 : vector<1x128xf32> to vector<64x128xf32>
    %5 = arith.addf %2, %4 : vector<64x128xf32>
    %6 = arith.negf %5 : vector<64x128xf32>
    %7 = math.exp %6 : vector<64x128xf32>
    %cst_5 = arith.constant 1.000000e+00 : f32
    %8 = vector.broadcast %cst_5 : f32 to vector<64x128xf32>
    %9 = arith.addf %8, %7 : vector<64x128xf32>
    %10 = arith.divf %8, %9 : vector<64x128xf32>
    %c0_6 = arith.constant 0 : index
    %c0_7 = arith.constant 0 : index
    %11 = vector.load %arg4[%c0_6, %c0_7] : memref<64x128xf32, #tpu.memory_space<vmem>>, vector<64x128xf32>
    tpu.vector_store %arg4[%c0_6, %c0_7], %10 {strides = array<i32>} : memref<64x128xf32, #tpu.memory_space<vmem>>, vector<64x128xf32>,
    return
  }
  func.func @transform_0(%arg0: i32) -> (i32, i32) {
    %c0_i32 = arith.constant 0 : i32
    %c0_i32_0 = arith.constant 0 : i32
    return %arg0, %c0_i32 : i32, i32
  }
  func.func @transform_1(%arg0: i32) -> (i32, i32) {
    %c0_i32 = arith.constant 0 : i32
    %c0_i32_0 = arith.constant 0 : i32
    %c0_i32_1 = arith.constant 0 : i32
    return %c0_i32, %c0_i32_0 : i32, i32
  }
  func.func @transform_2(%arg0: i32) -> (i32, i32) {
    %c0_i32 = arith.constant 0 : i32
    %c0_i32_0 = arith.constant 0 : i32
    %c0_i32_1 = arith.constant 0 : i32
    return %c0_i32, %c0_i32_0 : i32, i32
  }
  func.func @transform_3(%arg0: i32) -> (i32, i32) {
    %c0_i32 = arith.constant 0 : i32
    %c0_i32_0 = arith.constant 0 : i32
    return %arg0, %c0_i32 : i32, i32
  }
}

</mosaic_0001>

<llo_original>
// kernel: discriminator_forward.8
$region0: #{discriminator_forward.8}
  #allocation0 [shape = 'u32[]', space=smem, size = 0x4, offset = 0x4, fixed_abs, tag = 'smem constant byte address 0x4 - core index']
  #allocation1 [shape = 'u32[144,128]{1,0:T(1,128)}', space=vmem, size = 0x12000, scoped, tag = 'internal scratch']
  %s0 = inlined_call_operand.vmem [shape: f32[2048,128], index: 0, kind: input, shape index: {}]
  %s1 = inlined_call_operand.vmem [shape: f32[1,128], index: 1, kind: input, shape index: {}]
  %s2 = inlined_call_operand.vmem [shape: f32[1,128], index: 2, kind: input, shape index: {}]
  %s3 = inlined_call_operand.vmem [shape: bf16[2048,128], index: 3, kind: output, shape index: {}]
  %s4 = sld [smem:[#allocation0]]
  $region45: #{discriminator_forward.8} parent=0
    _
  %s6 = ssub.s32 1, %s4
  %s7 = scalar_select 0, %s6, %s4
  loop: start=0, step=1, limit=10
  $region2: #{discriminator_forward.8} parent=0 // loop_pre_header
    _
  $region3: #{discriminator_forward.8} parent=0 // loop_header
    %s9 = sphi 0, %s13
    %p10 = scmp.ge.s32.totalorder %s9, 10
    %s19 = sphi 0, %s21
    %s22 = sphi 0, %s19
    %s23 = sphi 0, %s22
    %s39 = sphi 0, %s23
    %s43 = sphi 0, %s43
    %s45 = sphi 0, %s43
    %s46 = sphi 0, %s45
    %s60 = sphi 0, %s46
    %s64 = sphi 0, %s64
    %s66 = sphi 0, %s64
    %s67 = sphi 0, %s66
    %s81 = sphi 0, %s67
    %s87 = sphi 0, %s89
    %s90 = sphi 0, %s87
    %s91 = sphi 0, %s90
    %s107 = sphi 0, %s91
  $region4: #{discriminator_forward.8} parent=0 // loop_header_branch
    %12 = sbr.rel (%p10) target = $region8
  $region5: #{discriminator_forward.8} parent=0 // loop_body
    %s14 = ssub.s32 %s9, 1
    %s15 = ssub.s32 %s9, 2
    %s16 = sadd.s32 %s9, 1
    %s17 = ssub.s32 %s9, %s16
    %p18 = scmp.eq.s32.totalorder %s17, 0
    %s20 = sadd.s32 %s19, 1
    %s21 = scalar_select %p18, %s19, %s20
    %p24 = pneg %p18
    %p25 = scmp.eq.s32.totalorder %s9, 7
    %p26 = por %p24, %p25
    %p27 = scmp.ne.s32.totalorder %s19, %s22
    %p28 = scmp.eq.s32.totalorder %s9, 0
    %p29 = por %p27, %p28
    %p30 = scmp.ne.s32.totalorder %s19, %s22
    %p31 = scmp.eq.s32.totalorder %s14, 7
    %p32 = por %p30, %p31
    %p33 = scmp.ne.s32.totalorder %s22, %s23
    %p34 = scmp.eq.s32.totalorder %s14, 0
    %p35 = por %p33, %p34
    %p36 = scmp.ne.s32.totalorder %s22, %s23
    %p37 = scmp.eq.s32.totalorder %s15, 7
    %p38 = por %p36, %p37
    %p40 = scmp.ne.s32.totalorder %s23, %s39
    %p41 = scmp.eq.s32.totalorder %s15, 0
    %p42 = por %p40, %p41
    %s44 = sadd.s32 %s43, 1
    %p47 = scmp.eq.s32.totalorder %s9, 7
    %p48 = scmp.ne.s32.totalorder %s43, %s45
    %p49 = scmp.eq.s32.totalorder %s9, 0
    %p50 = por %p48, %p49
    %p51 = scmp.ne.s32.totalorder %s43, %s45
    %p52 = scmp.eq.s32.totalorder %s14, 7
    %p53 = por %p51, %p52
    %p54 = scmp.ne.s32.totalorder %s45, %s46
    %p55 = scmp.eq.s32.totalorder %s14, 0
    %p56 = por %p54, %p55
    %p57 = scmp.ne.s32.totalorder %s45, %s46
    %p58 = scmp.eq.s32.totalorder %s15, 7
    %p59 = por %p57, %p58
    %p61 = scmp.ne.s32.totalorder %s46, %s60
    %p62 = scmp.eq.s32.totalorder %s15, 0
    %p63 = por %p61, %p62
    %s65 = sadd.s32 %s64, 1
    %p68 = scmp.eq.s32.totalorder %s9, 7
    %p69 = scmp.ne.s32.totalorder %s64, %s66
    %p70 = scmp.eq.s32.totalorder %s9, 0
    %p71 = por %p69, %p70
    %p72 = scmp.ne.s32.totalorder %s64, %s66
    %p73 = scmp.eq.s32.totalorder %s14, 7
    %p74 = por %p72, %p73
    %p75 = scmp.ne.s32.totalorder %s66, %s67
    %p76 = scmp.eq.s32.totalorder %s14, 0
    %p77 = por %p75, %p76
    %p78 = scmp.ne.s32.totalorder %s66, %s67
    %p79 = scmp.eq.s32.totalorder %s15, 7
    %p80 = por %p78, %p79
    %p82 = scmp.ne.s32.totalorder %s67, %s81
    %p83 = scmp.eq.s32.totalorder %s15, 0
    %p84 = por %p82, %p83
    %s85 = ssub.s32 %s9, %s16
    %p86 = scmp.eq.s32.totalorder %s85, 0
    %s88 = sadd.s32 %s87, 1
    %s89 = scalar_select %p86, %s87, %s88
    %p92 = pneg %p86
    %p93 = scmp.eq.s32.totalorder %s9, 7
    %p94 = por %p92, %p93
    %p95 = scmp.ne.s32.totalorder %s87, %s90
    %p96 = scmp.eq.s32.totalorder %s9, 0
    %p97 = por %p95, %p96
    %p98 = scmp.ne.s32.totalorder %s87, %s90
    %p99 = scmp.eq.s32.totalorder %s14, 7
    %p100 = por %p98, %p99
    %p101 = scmp.ne.s32.totalorder %s90, %s91
    %p102 = scmp.eq.s32.totalorder %s14, 0
    %p103 = por %p101, %p102
    %p104 = scmp.ne.s32.totalorder %s90, %s91
    %p105 = scmp.eq.s32.totalorder %s15, 7
    %p106 = por %p104, %p105
    %p108 = scmp.ne.s32.totalorder %s91, %s107
    %p109 = scmp.eq.s32.totalorder %s15, 0
    %p110 = por %p108, %p109
    %p111 = scmp.le.s32.totalorder 1, %s9
    %p112 = scmp.lt.s32.totalorder %s9, 9
    %p113 = pnand %p111, %p112
    %p114 = pneg %p113
    // Predicated region
    $region9: #{discriminator_forward.8} parent=5 // pred_check
      _
    $region10: #{discriminator_forward.8} parent=5 // pred_check_branch
      %116 = sbr.rel (%p113) target = $region12
    $region11: #{discriminator_forward.8} parent=5 // pred_region
      %s117 = ssub.s32 %s9, 1
      // Predicated region
      $region13: #{discriminator_forward.8} parent=11 // pred_check
        %p118 = pneg %p56
      $region14: #{discriminator_forward.8} parent=11 // pred_check_branch
        %120 = sbr.rel (%p118) target = $region16
      $region15: #{discriminator_forward.8} parent=11 // pred_region
        _
      $region16: #{discriminator_forward.8} parent=11 // pred_fallthru
        _
      // Predicated region
      $region17: #{discriminator_forward.8} parent=11 // pred_check
        %p121 = pneg %p77
      $region18: #{discriminator_forward.8} parent=11 // pred_check_branch
        %123 = sbr.rel (%p121) target = $region20
      $region19: #{discriminator_forward.8} parent=11 // pred_region
        _
      $region20: #{discriminator_forward.8} parent=11 // pred_fallthru
        _
    $region12: #{discriminator_forward.8} parent=5 // pred_fallthru
      _
    %p124 = scmp.lt.s32.totalorder %s9, 8
    // Predicated region
    $region21: #{discriminator_forward.8} parent=5 // pred_check
      %p125 = pneg %p124
    $region22: #{discriminator_forward.8} parent=5 // pred_check_branch
      %127 = sbr.rel (%p125) target = $region24
    $region23: #{discriminator_forward.8} parent=5 // pred_region
      // Predicated region
      $region25: #{discriminator_forward.8} parent=23 // pred_check
        %p128 = pneg %p29
      $region26: #{discriminator_forward.8} parent=23 // pred_check_branch
        %130 = sbr.rel (%p128) target = $region28
      $region27: #{discriminator_forward.8} parent=23 // pred_region
        %s131 = smul.u32 32, %s9
        %p132 = scmp.lt.s32.totalorder %s131, 255
        %s133 = scalar_select %p132, %s131, 255
        %s134 = smul.addr %s133, 8
        %s135 = scalar_lea.vmem %s0, %s134
        %s136 = smul.u32 32, %s9
      $region28: #{discriminator_forward.8} parent=23 // pred_fallthru
        _
    $region24: #{discriminator_forward.8} parent=5 // pred_fallthru
      _
    %p137 = scmp.le.s32.totalorder 1, %s9
    %p138 = scmp.lt.s32.totalorder %s9, 9
    %p139 = pnand %p137, %p138
    %p140 = pneg %p139
    // Predicated region
    $region29: #{discriminator_forward.8} parent=5 // pred_check
      _
    $region30: #{discriminator_forward.8} parent=5 // pred_check_branch
      %142 = sbr.rel (%p139) target = $region32
    $region31: #{discriminator_forward.8} parent=5 // pred_region
      %s143 = ssub.s32 %s9, 1
      %s144 = smul.u32 32, %s14
      %p145 = scmp.lt.s32.totalorder %s144, 255
      %s146 = scalar_select %p145, %s144, 255
      %s147 = smul.addr %s146, 8
      %s148 = scalar_lea.vmem %s0, %s147
      %p149 = pneg %p35
      %p150 = pneg %p32
      %p151 = pneg %p56
      %p152 = pneg %p53
      %p153 = pneg %p77
      %p154 = pneg %p74
      %p155 = pneg %p103
      %p156 = pneg %p100
      %s157 = smul.u32 32, %s14
      %p158 = scmp.lt.s32.totalorder %s157, 255
      %s159 = scalar_select %p158, %s157, 255
      %s160 = smul.addr %s159, 4
      %s161 = scalar_lea.vmem %s3, %s160
      %s162 = smul.u32 32, %s14
      %p163 = scmp.lt.s32.totalorder %s162, 255
      %s164 = scalar_select %p163, %s162, 255
      %s165 = smul.addr %s164, 8
      %s166 = scalar_lea.vmem %s0, %s165
      %s167 = smul.u32 32, %s14
      %s168 = smul.u32 32, %s14
      %p169 = scmp.lt.s32.totalorder %s168, 255
      %s170 = scalar_select %p169, %s168, 255
      %s171 = smul.addr %s170, 4
      %s172 = scalar_lea.vmem %s3, %s171
      %s173 = smul.u32 32, %s14
      %v174 = vld [vmem:[%s166] sm:$0xff]
      %v175 = vld [vmem:[%s166 + $0x8] sm:$0xff]
      %v176 = vld [vmem:[%s166 + $0x10] sm:$0xff]
      %v177 = vld [vmem:[%s166 + $0x18] sm:$0xff]
      %v178 = vld [vmem:[%s166 + $0x20] sm:$0xff]
      %v179 = vld [vmem:[%s166 + $0x28] sm:$0xff]
      %v180 = vld [vmem:[%s166 + $0x30] sm:$0xff]
      %v181 = vld [vmem:[%s166 + $0x38] sm:$0xff]
      %v182 = vld [vmem:[%s166 + $0x40] sm:$0xff]
      %v183 = vld [vmem:[%s166 + $0x48] sm:$0xff]
      %v184 = vld [vmem:[%s166 + $0x50] sm:$0xff]
      %v185 = vld [vmem:[%s166 + $0x58] sm:$0xff]
      %v186 = vld [vmem:[%s166 + $0x60] sm:$0xff]
      %v187 = vld [vmem:[%s166 + $0x68] sm:$0xff]
      %v188 = vld [vmem:[%s166 + $0x70] sm:$0xff]
      %v189 = vld [vmem:[%s166 + $0x78] sm:$0xff]
      %v190 = vld [vmem:[%s166 + $0x80] sm:$0xff]
      %v191 = vld [vmem:[%s166 + $0x88] sm:$0xff]
      %v192 = vld [vmem:[%s166 + $0x90] sm:$0xff]
      %v193 = vld [vmem:[%s166 + $0x98] sm:$0xff]
      %v194 = vld [vmem:[%s166 + $0xa0] sm:$0xff]
      %v195 = vld [vmem:[%s166 + $0xa8] sm:$0xff]
      %v196 = vld [vmem:[%s166 + $0xb0] sm:$0xff]
      %v197 = vld [vmem:[%s166 + $0xb8] sm:$0xff]
      %v198 = vld [vmem:[%s166 + $0xc0] sm:$0xff]
      %v199 = vld [vmem:[%s166 + $0xc8] sm:$0xff]
      %v200 = vld [vmem:[%s166 + $0xd0] sm:$0xff]
      %v201 = vld [vmem:[%s166 + $0xd8] sm:$0xff]
      %v202 = vld [vmem:[%s166 + $0xe0] sm:$0xff]
      %v203 = vld [vmem:[%s166 + $0xe8] sm:$0xff]
      %v204 = vld [vmem:[%s166 + $0xf0] sm:$0xff]
      %v205 = vld [vmem:[%s166 + $0xf8] sm:$0xff]
      %v206 = vld [vmem:[%s1] sm:$0x1]
      %v208 = vlaneseq
      %v209 = vshrl.u32 %v208, 7
      %v210 = vsub.s32 0, %v209
      %v211 = vrot.slane %v206, %v210
      %v213 = vmul.f32 %v174, %v211
      %v214 = vmul.f32 %v175, %v211
      %v215 = vmul.f32 %v176, %v211
      %v216 = vmul.f32 %v177, %v211
      %v217 = vmul.f32 %v178, %v211
      %v218 = vmul.f32 %v179, %v211
      %v219 = vmul.f32 %v180, %v211
      %v220 = vmul.f32 %v181, %v211
      %v221 = vmul.f32 %v182, %v211
      %v222 = vmul.f32 %v183, %v211
      %v223 = vmul.f32 %v184, %v211
      %v224 = vmul.f32 %v185, %v211
      %v225 = vmul.f32 %v186, %v211
      %v226 = vmul.f32 %v187, %v211
      %v227 = vmul.f32 %v188, %v211
      %v228 = vmul.f32 %v189, %v211
      %v229 = vmul.f32 %v190, %v211
      %v230 = vmul.f32 %v191, %v211
      %v231 = vmul.f32 %v192, %v211
      %v232 = vmul.f32 %v193, %v211
      %v233 = vmul.f32 %v194, %v211
      %v234 = vmul.f32 %v195, %v211
      %v235 = vmul.f32 %v196, %v211
      %v236 = vmul.f32 %v197, %v211
      %v237 = vmul.f32 %v198, %v211
      %v238 = vmul.f32 %v199, %v211
      %v239 = vmul.f32 %v200, %v211
      %v240 = vmul.f32 %v201, %v211
      %v241 = vmul.f32 %v202, %v211
      %v242 = vmul.f32 %v203, %v211
      %v243 = vmul.f32 %v204, %v211
      %v244 = vmul.f32 %v205, %v211
      %v245 = vld [vmem:[%s2] sm:$0x1]
      %v247 = vlaneseq
      %v248 = vshrl.u32 %v247, 7
      %v249 = vsub.s32 0, %v248
      %v250 = vrot.slane %v245, %v249
      %v252 = vadd.f32 %v213, %v250
      %v253 = vadd.f32 %v214, %v250
      %v254 = vadd.f32 %v215, %v250
      %v255 = vadd.f32 %v216, %v250
      %v256 = vadd.f32 %v217, %v250
      %v257 = vadd.f32 %v218, %v250
      %v258 = vadd.f32 %v219, %v250
      %v259 = vadd.f32 %v220, %v250
      %v260 = vadd.f32 %v221, %v250
      %v261 = vadd.f32 %v222, %v250
      %v262 = vadd.f32 %v223, %v250
      %v263 = vadd.f32 %v224, %v250
      %v264 = vadd.f32 %v225, %v250
      %v265 = vadd.f32 %v226, %v250
      %v266 = vadd.f32 %v227, %v250
      %v267 = vadd.f32 %v228, %v250
      %v268 = vadd.f32 %v229, %v250
      %v269 = vadd.f32 %v230, %v250
      %v270 = vadd.f32 %v231, %v250
      %v271 = vadd.f32 %v232, %v250
      %v272 = vadd.f32 %v233, %v250
      %v273 = vadd.f32 %v234, %v250
      %v274 = vadd.f32 %v235, %v250
      %v275 = vadd.f32 %v236, %v250
      %v276 = vadd.f32 %v237, %v250
      %v277 = vadd.f32 %v238, %v250
      %v278 = vadd.f32 %v239, %v250
      %v279 = vadd.f32 %v240, %v250
      %v280 = vadd.f32 %v241, %v250
      %v281 = vadd.f32 %v242, %v250
      %v282 = vadd.f32 %v243, %v250
      %v283 = vadd.f32 %v244, %v250
      %v284 = vpack.c.bf16 %v253, %v252
      %v285 = vpack.c.bf16 %v255, %v254
      %v286 = vpack.c.bf16 %v257, %v256
      %v287 = vpack.c.bf16 %v259, %v258
      %v288 = vpack.c.bf16 %v261, %v260
      %v289 = vpack.c.bf16 %v263, %v262
      %v290 = vpack.c.bf16 %v265, %v264
      %v291 = vpack.c.bf16 %v267, %v266
      %v292 = vpack.c.bf16 %v269, %v268
      %v293 = vpack.c.bf16 %v271, %v270
      %v294 = vpack.c.bf16 %v273, %v272
      %v295 = vpack.c.bf16 %v275, %v274
      %v296 = vpack.c.bf16 %v277, %v276
      %v297 = vpack.c.bf16 %v279, %v278
      %v298 = vpack.c.bf16 %v281, %v280
      %v299 = vpack.c.bf16 %v283, %v282
      %v316 = vunpack.c.l.b16 %v284
      %v317 = vunpack.c.h.b16 %v284
      %v318 = vunpack.c.l.b16 %v285
      %v319 = vunpack.c.h.b16 %v285
      %v320 = vunpack.c.l.b16 %v286
      %v321 = vunpack.c.h.b16 %v286
      %v322 = vunpack.c.l.b16 %v287
      %v323 = vunpack.c.h.b16 %v287
      %v324 = vunpack.c.l.b16 %v288
      %v325 = vunpack.c.h.b16 %v288
      %v326 = vunpack.c.l.b16 %v289
      %v327 = vunpack.c.h.b16 %v289
      %v328 = vunpack.c.l.b16 %v290
      %v329 = vunpack.c.h.b16 %v290
      %v330 = vunpack.c.l.b16 %v291
      %v331 = vunpack.c.h.b16 %v291
      %v332 = vunpack.c.l.b16 %v292
      %v333 = vunpack.c.h.b16 %v292
      %v334 = vunpack.c.l.b16 %v293
      %v335 = vunpack.c.h.b16 %v293
      %v336 = vunpack.c.l.b16 %v294
      %v337 = vunpack.c.h.b16 %v294
      %v338 = vunpack.c.l.b16 %v295
      %v339 = vunpack.c.h.b16 %v295
      %v340 = vunpack.c.l.b16 %v296
      %v341 = vunpack.c.h.b16 %v296
      %v342 = vunpack.c.l.b16 %v297
      %v343 = vunpack.c.h.b16 %v297
      %v344 = vunpack.c.l.b16 %v298
      %v345 = vunpack.c.h.b16 %v298
      %v346 = vunpack.c.l.b16 %v299
      %v347 = vunpack.c.h.b16 %v299
      %v348 = vpack.c.b16 %v316, %v316
      %v349 = vpack.c.b16 %v317, %v317
      %v350 = vpack.c.b16 %v318, %v318
      %v351 = vpack.c.b16 %v319, %v319
      %v352 = vpack.c.b16 %v320, %v320
      %v353 = vpack.c.b16 %v321, %v321
      %v354 = vpack.c.b16 %v322, %v322
      %v355 = vpack.c.b16 %v323, %v323
      %v356 = vpack.c.b16 %v324, %v324
      %v357 = vpack.c.b16 %v325, %v325
      %v358 = vpack.c.b16 %v326, %v326
      %v359 = vpack.c.b16 %v327, %v327
      %v360 = vpack.c.b16 %v328, %v328
      %v361 = vpack.c.b16 %v329, %v329
      %v362 = vpack.c.b16 %v330, %v330
      %v363 = vpack.c.b16 %v331, %v331
      %v364 = vpack.c.b16 %v332, %v332
      %v365 = vpack.c.b16 %v333, %v333
      %v366 = vpack.c.b16 %v334, %v334
      %v367 = vpack.c.b16 %v335, %v335
      %v368 = vpack.c.b16 %v336, %v336
      %v369 = vpack.c.b16 %v337, %v337
      %v370 = vpack.c.b16 %v338, %v338
      %v371 = vpack.c.b16 %v339, %v339
      %v372 = vpack.c.b16 %v340, %v340
      %v373 = vpack.c.b16 %v341, %v341
      %v374 = vpack.c.b16 %v342, %v342
      %v375 = vpack.c.b16 %v343, %v343
      %v376 = vpack.c.b16 %v344, %v344
      %v377 = vpack.c.b16 %v345, %v345
      %v378 = vpack.c.b16 %v346, %v346
      %v379 = vpack.c.b16 %v347, %v347
      %412 = vst [vmem:[%s172] sm:$0xf] %v348
      %413 = vst [vmem:[%s172 + $0x4] sm:$0xf] %v349
      %414 = vst [vmem:[%s172 + $0x8] sm:$0xf] %v350
      %415 = vst [vmem:[%s172 + $0xc] sm:$0xf] %v351
      %416 = vst [vmem:[%s172 + $0x10] sm:$0xf] %v352
      %417 = vst [vmem:[%s172 + $0x14] sm:$0xf] %v353
      %418 = vst [vmem:[%s172 + $0x18] sm:$0xf] %v354
      %419 = vst [vmem:[%s172 + $0x1c] sm:$0xf] %v355
      %420 = vst [vmem:[%s172 + $0x20] sm:$0xf] %v356
      %421 = vst [vmem:[%s172 + $0x24] sm:$0xf] %v357
      %422 = vst [vmem:[%s172 + $0x28] sm:$0xf] %v358
      %423 = vst [vmem:[%s172 + $0x2c] sm:$0xf] %v359
      %424 = vst [vmem:[%s172 + $0x30] sm:$0xf] %v360
      %425 = vst [vmem:[%s172 + $0x34] sm:$0xf] %v361
      %426 = vst [vmem:[%s172 + $0x38] sm:$0xf] %v362
      %427 = vst [vmem:[%s172 + $0x3c] sm:$0xf] %v363
      %428 = vst [vmem:[%s172 + $0x40] sm:$0xf] %v364
      %429 = vst [vmem:[%s172 + $0x44] sm:$0xf] %v365
      %430 = vst [vmem:[%s172 + $0x48] sm:$0xf] %v366
      %431 = vst [vmem:[%s172 + $0x4c] sm:$0xf] %v367
      %432 = vst [vmem:[%s172 + $0x50] sm:$0xf] %v368
      %433 = vst [vmem:[%s172 + $0x54] sm:$0xf] %v369
      %434 = vst [vmem:[%s172 + $0x58] sm:$0xf] %v370
      %435 = vst [vmem:[%s172 + $0x5c] sm:$0xf] %v371
      %436 = vst [vmem:[%s172 + $0x60] sm:$0xf] %v372
      %437 = vst [vmem:[%s172 + $0x64] sm:$0xf] %v373
      %438 = vst [vmem:[%s172 + $0x68] sm:$0xf] %v374
      %439 = vst [vmem:[%s172 + $0x6c] sm:$0xf] %v375
      %440 = vst [vmem:[%s172 + $0x70] sm:$0xf] %v376
      %441 = vst [vmem:[%s172 + $0x74] sm:$0xf] %v377
      %442 = vst [vmem:[%s172 + $0x78] sm:$0xf] %v378
      %443 = vst [vmem:[%s172 + $0x7c] sm:$0xf] %v379
      %s444 = smul.u32 32, %s14
      %p445 = scmp.lt.s32.totalorder %s444, 255
      %s446 = scalar_select %p445, %s444, 255
      %s447 = smul.addr %s446, 4
      %s448 = scalar_lea.vmem %s3, %s447
      // Predicated region
      $region33: #{discriminator_forward.8} parent=31 // pred_check
        %p449 = pneg %p100
      $region34: #{discriminator_forward.8} parent=31 // pred_check_branch
        %451 = sbr.rel (%p449) target = $region36
      $region35: #{discriminator_forward.8} parent=31 // pred_region
        %s452 = smul.u32 32, %s14
      $region36: #{discriminator_forward.8} parent=31 // pred_fallthru
        _
    $region32: #{discriminator_forward.8} parent=5 // pred_fallthru
      _
    %p453 = scmp.le.s32.totalorder 2, %s9
    // Predicated region
    $region37: #{discriminator_forward.8} parent=5 // pred_check
      %p454 = pneg %p453
    $region38: #{discriminator_forward.8} parent=5 // pred_check_branch
      %456 = sbr.rel (%p454) target = $region40
    $region39: #{discriminator_forward.8} parent=5 // pred_region
      %s457 = ssub.s32 %s9, 2
      // Predicated region
      $region41: #{discriminator_forward.8} parent=39 // pred_check
        %p458 = pneg %p106
      $region42: #{discriminator_forward.8} parent=39 // pred_check_branch
        %460 = sbr.rel (%p458) target = $region44
      $region43: #{discriminator_forward.8} parent=39 // pred_region
        %s461 = smul.u32 32, %s15
        %p462 = scmp.lt.s32.totalorder %s461, 255
        %s463 = scalar_select %p462, %s461, 255
        %s464 = smul.addr %s463, 4
        %s465 = scalar_lea.vmem %s3, %s464
      $region44: #{discriminator_forward.8} parent=39 // pred_fallthru
        _
    $region40: #{discriminator_forward.8} parent=5 // pred_fallthru
      _
  $region6: #{discriminator_forward.8} parent=0 // loop_footer
    %s13 = sadd.s32 1, %s9
  $region7: #{discriminator_forward.8} parent=0 // loop_footer_branch
    %8 = sbr.rel target = $region3
  $region8: #{discriminator_forward.8} parent=0 // loop_exit
    _

// kernel: discriminator_forward.7
$region0: #{discriminator_forward.7}
  #allocation0 [shape = 'u32[]', space=smem, size = 0x4, offset = 0x4, fixed_abs, tag = 'smem constant byte address 0x4 - core index']
  #allocation1 [shape = 'u32[144,128]{1,0:T(1,128)}', space=vmem, size = 0x12000, scoped, tag = 'internal scratch']
  %s0 = inlined_call_operand.vmem [shape: bf16[2048,176], index: 0, kind: input, shape index: {}]
  %s1 = inlined_call_operand.vmem [shape: bf16[176,128], index: 1, kind: input, shape index: {}]
  %s2 = inlined_call_operand.vmem [shape: f32[2048,128], index: 2, kind: output, shape index: {0}]
  %s3 = inlined_call_operand.vmem [shape: f32[8,2,128], index: 3, kind: output, shape index: {1}]
  %4 = xla_tuple %s2, %s3
  %s5 = sld [smem:[#allocation0]]
  $region49: #{discriminator_forward.7} parent=0
    _
  %s7 = ssub.s32 1, %s5
  %s8 = scalar_select 0, %s7, %s5
  loop: start=0, step=1, limit=10
  $region2: #{discriminator_forward.7} parent=0 // loop_pre_header
    _
  $region3: #{discriminator_forward.7} parent=0 // loop_header
    %s10 = sphi 0, %s14
    %p11 = scmp.ge.s32.totalorder %s10, 10
    %s20 = sphi 0, %s22
    %s23 = sphi 0, %s20
    %s24 = sphi 0, %s23
    %s40 = sphi 0, %s24
    %s44 = sphi 0, %s44
    %s46 = sphi 0, %s44
    %s47 = sphi 0, %s46
    %s61 = sphi 0, %s47
    %s67 = sphi 0, %s69
    %s70 = sphi 0, %s67
    %s71 = sphi 0, %s70
    %s87 = sphi 0, %s71
    %s93 = sphi 0, %s95
    %s96 = sphi 0, %s93
    %s97 = sphi 0, %s96
    %s113 = sphi 0, %s97
  $region4: #{discriminator_forward.7} parent=0 // loop_header_branch
    %13 = sbr.rel (%p11) target = $region8
  $region5: #{discriminator_forward.7} parent=0 // loop_body
    %s15 = ssub.s32 %s10, 1
    %s16 = ssub.s32 %s10, 2
    %s17 = sadd.s32 %s10, 1
    %s18 = ssub.s32 %s10, %s17
    %p19 = scmp.eq.s32.totalorder %s18, 0
    %s21 = sadd.s32 %s20, 1
    %s22 = scalar_select %p19, %s20, %s21
    %p25 = pneg %p19
    %p26 = scmp.eq.s32.totalorder %s10, 7
    %p27 = por %p25, %p26
    %p28 = scmp.ne.s32.totalorder %s20, %s23
    %p29 = scmp.eq.s32.totalorder %s10, 0
    %p30 = por %p28, %p29
    %p31 = scmp.ne.s32.totalorder %s20, %s23
    %p32 = scmp.eq.s32.totalorder %s15, 7
    %p33 = por %p31, %p32
    %p34 = scmp.ne.s32.totalorder %s23, %s24
    %p35 = scmp.eq.s32.totalorder %s15, 0
    %p36 = por %p34, %p35
    %p37 = scmp.ne.s32.totalorder %s23, %s24
    %p38 = scmp.eq.s32.totalorder %s16, 7
    %p39 = por %p37, %p38
    %p41 = scmp.ne.s32.totalorder %s24, %s40
    %p42 = scmp.eq.s32.totalorder %s16, 0
    %p43 = por %p41, %p42
    %s45 = sadd.s32 %s44, 1
    %p48 = scmp.eq.s32.totalorder %s10, 7
    %p49 = scmp.ne.s32.totalorder %s44, %s46
    %p50 = scmp.eq.s32.totalorder %s10, 0
    %p51 = por %p49, %p50
    %p52 = scmp.ne.s32.totalorder %s44, %s46
    %p53 = scmp.eq.s32.totalorder %s15, 7
    %p54 = por %p52, %p53
    %p55 = scmp.ne.s32.totalorder %s46, %s47
    %p56 = scmp.eq.s32.totalorder %s15, 0
    %p57 = por %p55, %p56
    %p58 = scmp.ne.s32.totalorder %s46, %s47
    %p59 = scmp.eq.s32.totalorder %s16, 7
    %p60 = por %p58, %p59
    %p62 = scmp.ne.s32.totalorder %s47, %s61
    %p63 = scmp.eq.s32.totalorder %s16, 0
    %p64 = por %p62, %p63
    %s65 = ssub.s32 %s10, %s17
    %p66 = scmp.eq.s32.totalorder %s65, 0
    %s68 = sadd.s32 %s67, 1
    %s69 = scalar_select %p66, %s67, %s68
    %p72 = pneg %p66
    %p73 = scmp.eq.s32.totalorder %s10, 7
    %p74 = por %p72, %p73
    %p75 = scmp.ne.s32.totalorder %s67, %s70
    %p76 = scmp.eq.s32.totalorder %s10, 0
    %p77 = por %p75, %p76
    %p78 = scmp.ne.s32.totalorder %s67, %s70
    %p79 = scmp.eq.s32.totalorder %s15, 7
    %p80 = por %p78, %p79
    %p81 = scmp.ne.s32.totalorder %s70, %s71
    %p82 = scmp.eq.s32.totalorder %s15, 0
    %p83 = por %p81, %p82
    %p84 = scmp.ne.s32.totalorder %s70, %s71
    %p85 = scmp.eq.s32.totalorder %s16, 7
    %p86 = por %p84, %p85
    %p88 = scmp.ne.s32.totalorder %s71, %s87
    %p89 = scmp.eq.s32.totalorder %s16, 0
    %p90 = por %p88, %p89
    %s91 = ssub.s32 %s10, %s17
    %p92 = scmp.eq.s32.totalorder %s91, 0
    %s94 = sadd.s32 %s93, 1
    %s95 = scalar_select %p92, %s93, %s94
    %p98 = pneg %p92
    %p99 = scmp.eq.s32.totalorder %s10, 7
    %p100 = por %p98, %p99
    %p101 = scmp.ne.s32.totalorder %s93, %s96
    %p102 = scmp.eq.s32.totalorder %s10, 0
    %p103 = por %p101, %p102
    %p104 = scmp.ne.s32.totalorder %s93, %s96
    %p105 = scmp.eq.s32.totalorder %s15, 7
    %p106 = por %p104, %p105
    %p107 = scmp.ne.s32.totalorder %s96, %s97
    %p108 = scmp.eq.s32.totalorder %s15, 0
    %p109 = por %p107, %p108
    %p110 = scmp.ne.s32.totalorder %s96, %s97
    %p111 = scmp.eq.s32.totalorder %s16, 7
    %p112 = por %p110, %p111
    %p114 = scmp.ne.s32.totalorder %s97, %s113
    %p115 = scmp.eq.s32.totalorder %s16, 0
    %p116 = por %p114, %p115
    %p117 = scmp.le.s32.totalorder 1, %s10
    %p118 = scmp.lt.s32.totalorder %s10, 9
    %p119 = pnand %p117, %p118
    %p120 = pneg %p119
    // Predicated region
    $region9: #{discriminator_forward.7} parent=5 // pred_check
      _
    $region10: #{discriminator_forward.7} parent=5 // pred_check_branch
      %122 = sbr.rel (%p119) target = $region12
    $region11: #{discriminator_forward.7} parent=5 // pred_region
      %s123 = ssub.s32 %s10, 1
      // Predicated region
      $region13: #{discriminator_forward.7} parent=11 // pred_check
        %p124 = pneg %p57
      $region14: #{discriminator_forward.7} parent=11 // pred_check_branch
        %126 = sbr.rel (%p124) target = $region16
      $region15: #{discriminator_forward.7} parent=11 // pred_region
        _
      $region16: #{discriminator_forward.7} parent=11 // pred_fallthru
        _
    $region12: #{discriminator_forward.7} parent=5 // pred_fallthru
      _
    %p127 = scmp.lt.s32.totalorder %s10, 8
    // Predicated region
    $region17: #{discriminator_forward.7} parent=5 // pred_check
      %p128 = pneg %p127
    $region18: #{discriminator_forward.7} parent=5 // pred_check_branch
      %130 = sbr.rel (%p128) target = $region20
    $region19: #{discriminator_forward.7} parent=5 // pred_region
      // Predicated region
      $region21: #{discriminator_forward.7} parent=19 // pred_check
        %p131 = pneg %p30
      $region22: #{discriminator_forward.7} parent=19 // pred_check_branch
        %133 = sbr.rel (%p131) target = $region24
      $region23: #{discriminator_forward.7} parent=19 // pred_region
        %s134 = smul.u32 32, %s10
        %p135 = scmp.lt.s32.totalorder %s134, 255
        %s136 = scalar_select %p135, %s134, 255
        %s137 = smul.addr %s136, 2
        %s138 = smul.addr %s137, 4
        %s139 = scalar_lea.vmem %s0, %s138
        %s140 = smul.u32 32, %s10
      $region24: #{discriminator_forward.7} parent=19 // pred_fallthru
        _
    $region20: #{discriminator_forward.7} parent=5 // pred_fallthru
      _
    %p141 = scmp.le.s32.totalorder 1, %s10
    %p142 = scmp.lt.s32.totalorder %s10, 9
    %p143 = pnand %p141, %p142
    %p144 = pneg %p143
    // Predicated region
    $region25: #{discriminator_forward.7} parent=5 // pred_check
      _
    $region26: #{discriminator_forward.7} parent=5 // pred_check_branch
      %146 = sbr.rel (%p143) target = $region28
    $region27: #{discriminator_forward.7} parent=5 // pred_region
      %s147 = ssub.s32 %s10, 1
      %s148 = smul.u32 32, %s15
      %p149 = scmp.lt.s32.totalorder %s148, 255
      %s150 = scalar_select %p149, %s148, 255
      %s151 = smul.addr %s150, 2
      %s152 = smul.addr %s151, 4
      %s153 = scalar_lea.vmem %s0, %s152
      %p154 = pneg %p36
      %p155 = pneg %p33
      %p156 = pneg %p57
      %p157 = pneg %p54
      %p158 = pneg %p83
      %p159 = pneg %p80
      %s160 = smul.u32 32, %s15
      %p161 = scmp.lt.s32.totalorder %s160, 255
      %s162 = scalar_select %p161, %s160, 255
      %s163 = smul.addr %s162, 8
      %s164 = scalar_lea.vmem %s2, %s163
      %p165 = pneg %p109
      %p166 = pneg %p106
      %p167 = scmp.lt.s32.totalorder %s15, 7
      %s168 = scalar_select %p167, %s15, 7
      %s169 = smul.addr %s168, 2
      %s170 = scalar_lea.vmem %s3, %s169
      %s171 = smul.u32 32, %s15
      %p172 = scmp.lt.s32.totalorder %s171, 255
      %s173 = scalar_select %p172, %s171, 255
      %s174 = smul.addr %s173, 2
      %s175 = smul.addr %s174, 4
      %s176 = scalar_lea.vmem %s0, %s175
      %s177 = smul.u32 32, %s15
      %s178 = smul.u32 32, %s15
      %p179 = scmp.lt.s32.totalorder %s178, 255
      %s180 = scalar_select %p179, %s178, 255
      %s181 = smul.addr %s180, 8
      %s182 = scalar_lea.vmem %s2, %s181
      %s183 = smul.u32 32, %s15
      %p184 = scmp.lt.s32.totalorder %s15, 7
      %s185 = scalar_select %p184, %s15, 7
      %s186 = smul.addr %s185, 2
      %s187 = scalar_lea.vmem %s3, %s186
      %v189 = vld [vmem:[%s176] sm:$0xff]
      %v190 = vld [vmem:[%s176 + $0x8] sm:$0xff]
      %v191 = vld [vmem:[%s176 + $0x10] sm:$0xff]
      %v192 = vld [vmem:[%s176 + $0x18] sm:$0xff]
      %v193 = vld [vmem:[%s176 + $0x20] sm:$0xff]
      %v194 = vld [vmem:[%s176 + $0x28] sm:$0xff]
      %v195 = vld [vmem:[%s176 + $0x30] sm:$0xff]
      %v196 = vld [vmem:[%s176 + $0x38] sm:$0xff]
      %v197 = vld [vmem:[%s176 + $0x40] sm:$0xff]
      %v198 = vld [vmem:[%s176 + $0x48] sm:$0xff]
      %v199 = vld [vmem:[%s176 + $0x50] sm:$0xff]
      %v200 = vld [vmem:[%s176 + $0x58] sm:$0xff]
      %v201 = vld [vmem:[%s176 + $0x60] sm:$0xff]
      %v202 = vld [vmem:[%s176 + $0x68] sm:$0xff]
      %v203 = vld [vmem:[%s176 + $0x70] sm:$0xff]
      %v204 = vld [vmem:[%s176 + $0x78] sm:$0xff]
      %v205 = vld [vmem:[%s176 + $0x80] sm:$0xff]
      %v206 = vld [vmem:[%s176 + $0x88] sm:$0xff]
      %v207 = vld [vmem:[%s176 + $0x90] sm:$0xff]
      %v208 = vld [vmem:[%s176 + $0x98] sm:$0xff]
      %v209 = vld [vmem:[%s176 + $0xa0] sm:$0xff]
      %v210 = vld [vmem:[%s176 + $0xa8] sm:$0xff]
      %v211 = vld [vmem:[%s176 + $0xb0] sm:$0xff]
      %v212 = vld [vmem:[%s176 + $0xb8] sm:$0xff]
      %v213 = vld [vmem:[%s176 + $0xc0] sm:$0xff]
      %v214 = vld [vmem:[%s176 + $0xc8] sm:$0xff]
      %v215 = vld [vmem:[%s176 + $0xd0] sm:$0xff]
      %v216 = vld [vmem:[%s176 + $0xd8] sm:$0xff]
      %v217 = vld [vmem:[%s176 + $0xe0] sm:$0xff]
      %v218 = vld [vmem:[%s176 + $0xe8] sm:$0xff]
      %v219 = vld [vmem:[%s176 + $0xf0] sm:$0xff]
      %v220 = vld [vmem:[%s176 + $0xf8] sm:$0xff]
      %v221 = vld [vmem:[%s1] sm:$0xf]
      %v222 = vld [vmem:[%s1 + $0x4] sm:$0xf]
      %v223 = vld [vmem:[%s1 + $0x8] sm:$0xf]
      %v224 = vld [vmem:[%s1 + $0xc] sm:$0xf]
      %v225 = vld [vmem:[%s1 + $0x10] sm:$0xf]
      %v226 = vld [vmem:[%s1 + $0x14] sm:$0xf]
      %v227 = vld [vmem:[%s1 + $0x18] sm:$0xf]
      %v228 = vld [vmem:[%s1 + $0x1c] sm:$0xf]
      %v229 = vld [vmem:[%s1 + $0x20] sm:$0xf]
      %v230 = vld [vmem:[%s1 + $0x24] sm:$0xf]
      %v231 = vld [vmem:[%s1 + $0x28] sm:$0xf]
      %v232 = vld [vmem:[%s1 + $0x2c] sm:$0xf]
      %v233 = vld [vmem:[%s1 + $0x30] sm:$0xf]
      %v234 = vld [vmem:[%s1 + $0x34] sm:$0xf]
      %v235 = vld [vmem:[%s1 + $0x38] sm:$0xf]
      %v236 = vld [vmem:[%s1 + $0x3c] sm:$0xf]
      %v237 = vld [vmem:[%s1 + $0x40] sm:$0xf]
      %v238 = vld [vmem:[%s1 + $0x44] sm:$0xf]
      %v239 = vld [vmem:[%s1 + $0x48] sm:$0xf]
      %v240 = vld [vmem:[%s1 + $0x4c] sm:$0xf]
      %v241 = vld [vmem:[%s1 + $0x50] sm:$0xf]
      %v242 = vld [vmem:[%s1 + $0x54] sm:$0xf]
      %v275 = vunpack.c.l.b16 %v189
      %v276 = vunpack.c.h.b16 %v189
      %v277 = vunpack.c.l.b16 %v190
      %v278 = vunpack.c.h.b16 %v190
      %v279 = vunpack.c.l.b16 %v191
      %v280 = vunpack.c.h.b16 %v191
      %v281 = vunpack.c.l.b16 %v192
      %v282 = vunpack.c.h.b16 %v192
      %v283 = vunpack.c.l.b16 %v193
      %v284 = vunpack.c.h.b16 %v193
      %v285 = vunpack.c.l.b16 %v194
      %v286 = vunpack.c.h.b16 %v194
      %v287 = vunpack.c.l.b16 %v195
      %v288 = vunpack.c.h.b16 %v195
      %v289 = vunpack.c.l.b16 %v196
      %v290 = vunpack.c.h.b16 %v196
      %v291 = vunpack.c.l.b16 %v197
      %v292 = vunpack.c.h.b16 %v197
      %v293 = vunpack.c.l.b16 %v198
      %v294 = vunpack.c.h.b16 %v198
      %v295 = vunpack.c.l.b16 %v199
      %v296 = vunpack.c.h.b16 %v199
      %v297 = vunpack.c.l.b16 %v200
      %v298 = vunpack.c.h.b16 %v200
      %v299 = vunpack.c.l.b16 %v201
      %v300 = vunpack.c.h.b16 %v201
      %v301 = vunpack.c.l.b16 %v202
      %v302 = vunpack.c.h.b16 %v202
      %v303 = vunpack.c.l.b16 %v203
      %v304 = vunpack.c.h.b16 %v203
      %v305 = vunpack.c.l.b16 %v204
      %v306 = vunpack.c.h.b16 %v204
      %v307 = vunpack.c.l.b16 %v205
      %v308 = vunpack.c.h.b16 %v205
      %v309 = vunpack.c.l.b16 %v206
      %v310 = vunpack.c.h.b16 %v206
      %v311 = vunpack.c.l.b16 %v207
      %v312 = vunpack.c.h.b16 %v207
      %v313 = vunpack.c.l.b16 %v208
      %v314 = vunpack.c.h.b16 %v208
      %v315 = vunpack.c.l.b16 %v209
      %v316 = vunpack.c.h.b16 %v209
      %v317 = vunpack.c.l.b16 %v210
      %v318 = vunpack.c.h.b16 %v210
      %v319 = vunpack.c.l.b16 %v211
      %v320 = vunpack.c.h.b16 %v211
      %v321 = vunpack.c.l.b16 %v212
      %v322 = vunpack.c.h.b16 %v212
      %v323 = vunpack.c.l.b16 %v213
      %v324 = vunpack.c.h.b16 %v213
      %v325 = vunpack.c.l.b16 %v214
      %v326 = vunpack.c.h.b16 %v214
      %v327 = vunpack.c.l.b16 %v215
      %v328 = vunpack.c.h.b16 %v215
      %v329 = vunpack.c.l.b16 %v216
      %v330 = vunpack.c.h.b16 %v216
      %v331 = vunpack.c.l.b16 %v217
      %v332 = vunpack.c.h.b16 %v217
      %v333 = vunpack.c.l.b16 %v218
      %v334 = vunpack.c.h.b16 %v218
      %v335 = vunpack.c.l.b16 %v219
      %v336 = vunpack.c.h.b16 %v219
      %v337 = vunpack.c.l.b16 %v220
      %v338 = vunpack.c.h.b16 %v220
      %v339 = vpack.c.b16 %v277, %v275
      %v340 = vpack.c.b16 %v278, %v276
      %v341 = vpack.c.b16 %v281, %v279
      %v342 = vpack.c.b16 %v282, %v280
      %v343 = vpack.c.b16 %v285, %v283
      %v344 = vpack.c.b16 %v286, %v284
      %v345 = vpack.c.b16 %v289, %v287
      %v346 = vpack.c.b16 %v290, %v288
      %v347 = vpack.c.b16 %v293, %v291
      %v348 = vpack.c.b16 %v294, %v292
      %v349 = vpack.c.b16 %v297, %v295
      %v350 = vpack.c.b16 %v298, %v296
      %v351 = vpack.c.b16 %v301, %v299
      %v352 = vpack.c.b16 %v302, %v300
      %v353 = vpack.c.b16 %v305, %v303
      %v354 = vpack.c.b16 %v306, %v304
      %v355 = vpack.c.b16 %v309, %v307
      %v356 = vpack.c.b16 %v310, %v308
      %v357 = vpack.c.b16 %v313, %v311
      %v358 = vpack.c.b16 %v314, %v312
      %v359 = vpack.c.b16 %v317, %v315
      %v360 = vpack.c.b16 %v318, %v316
      %v361 = vpack.c.b16 %v321, %v319
      %v362 = vpack.c.b16 %v322, %v320
      %v363 = vpack.c.b16 %v325, %v323
      %v364 = vpack.c.b16 %v326, %v324
      %v365 = vpack.c.b16 %v329, %v327
      %v366 = vpack.c.b16 %v330, %v328
      %v367 = vpack.c.b16 %v333, %v331
      %v368 = vpack.c.b16 %v334, %v332
      %v369 = vpack.c.b16 %v337, %v335
      %v370 = vpack.c.b16 %v338, %v336
      %v409 = vunpack.c.l.b16 %v221
      %v410 = vunpack.c.l.b16 %v222
      %v411 = vunpack.c.l.b16 %v223
      %v412 = vunpack.c.l.b16 %v224
      %v413 = vunpack.c.l.b16 %v225
      %v414 = vunpack.c.l.b16 %v226
      %v415 = vunpack.c.l.b16 %v227
      %v416 = vunpack.c.l.b16 %v228
      %v417 = vunpack.c.l.b16 %v229
      %v418 = vunpack.c.l.b16 %v230
      %v419 = vunpack.c.l.b16 %v231
      %v420 = vunpack.c.l.b16 %v232
      %v421 = vunpack.c.l.b16 %v233
      %v422 = vunpack.c.l.b16 %v234
      %v423 = vunpack.c.l.b16 %v235
      %v424 = vunpack.c.l.b16 %v236
      %v425 = vunpack.c.l.b16 %v237
      %v426 = vunpack.c.l.b16 %v238
      %v427 = vunpack.c.l.b16 %v239
      %v428 = vunpack.c.l.b16 %v240
      %v429 = vunpack.c.l.b16 %v241
      %v430 = vunpack.c.l.b16 %v242
      %v431 = vpack.c.b16 %v410, %v409
      %v432 = vpack.c.b16 %v412, %v411
      %v433 = vpack.c.b16 %v414, %v413
      %v434 = vpack.c.b16 %v416, %v415
      %v435 = vpack.c.b16 %v418, %v417
      %v436 = vpack.c.b16 %v420, %v419
      %v437 = vpack.c.b16 %v422, %v421
      %v438 = vpack.c.b16 %v424, %v423
      %v439 = vpack.c.b16 %v426, %v425
      %v440 = vpack.c.b16 %v428, %v427
      %v441 = vpack.c.b16 %v430, %v429
      %vm453 = vcmask 392192
      %v455 = vsel %vm453, %v340, 0
      %v458 = vsel %vm453, %v342, 0
      %v461 = vsel %vm453, %v344, 0
      %v464 = vsel %vm453, %v346, 0
      %v467 = vsel %vm453, %v348, 0
      %v470 = vsel %vm453, %v350, 0
      %v473 = vsel %vm453, %v352, 0
      %v476 = vsel %vm453, %v354, 0
      %v479 = vsel %vm453, %v356, 0
      %v482 = vsel %vm453, %v358, 0
      %v485 = vsel %vm453, %v360, 0
      %v488 = vsel %vm453, %v362, 0
      %v491 = vsel %vm453, %v364, 0
      %v494 = vsel %vm453, %v366, 0
      %v497 = vsel %vm453, %v368, 0
      %v500 = vsel %vm453, %v370, 0
      %502 = vmatprep.subr.bf16.mxu0 0
      %503 = vmatpush1.bf16.msra.mxu0 %v438
      %504 = vmatprep.subr.bf16.mxu0 0
      %505 = vmatpush1.bf16.msra.mxu0 %v437
      %506 = vmatprep.subr.bf16.mxu0 0
      %507 = vmatpush1.bf16.msra.mxu0 %v436
      %508 = vmatprep.subr.bf16.mxu0 0
      %509 = vmatpush1.bf16.msra.mxu0 %v435
      %510 = vmatprep.subr.bf16.mxu0 0
      %511 = vmatpush1.bf16.msra.mxu0 %v434
      %512 = vmatprep.subr.bf16.mxu0 0
      %513 = vmatpush1.bf16.msra.mxu0 %v433
      %514 = vmatprep.subr.bf16.mxu0 0
      %515 = vmatpush1.bf16.msra.mxu0 %v432
      %516 = vmatprep.subr.bf16.mxu0 0
      %517 = vmatpush1.bf16.msra.mxu0 %v431
      %518 = vmatprep.subr.bf16.mxu0 0
      %519 = vmatpush2.bf16.msra.mxu0 0
      %520 = vmatprep.subr.bf16.mxu0 0
      %521 = vmatpush2.bf16.msra.mxu0 0
      %522 = vmatprep.subr.bf16.mxu0 0
      %523 = vmatpush2.bf16.msra.mxu0 0
      %524 = vmatprep.subr.bf16.mxu0 0
      %525 = vmatpush2.bf16.msra.mxu0 0
      %526 = vmatprep.subr.bf16.mxu0 0
      %527 = vmatpush2.bf16.msra.mxu0 0
      %528 = vmatprep.subr.bf16.mxu0 0
      %529 = vmatpush2.bf16.msra.mxu0 %v441
      %530 = vmatprep.subr.bf16.mxu0 0
      %531 = vmatpush2.bf16.msra.mxu0 %v440
      %532 = vmatprep.subr.bf16.mxu0 0
      %533 = vmatpush2.bf16.msra.mxu0 %v439
      %534 = vmatprep.mubr.bf16.mxu0 %v455
      %535 = vmatmul.mubr.bf16.gmra.mxu0 %v339
      %v536 = vpop.f32.mrf.mxu0
      %v537 = vadd.f32 0.0, %v536
      %v538 = vpop.f32.mrf.mxu0
      %v539 = vpop.f32.mrf.mxu0
      %v540 = vadd.f32 0.0, %v539
      %v541 = vpop.f32.mrf.mxu0
      %542 = vmatprep.mubr.bf16.mxu0 %v458
      %543 = vmatmul.mubr.bf16.gmra.mxu0 %v341
      %v544 = vpop.f32.mrf.mxu0
      %v545 = vadd.f32 0.0, %v544
      %v546 = vpop.f32.mrf.mxu0
      %v547 = vpop.f32.mrf.mxu0
      %v548 = vadd.f32 0.0, %v547
      %v549 = vpop.f32.mrf.mxu0
      %550 = vmatprep.mubr.bf16.mxu0 %v461
      %551 = vmatmul.mubr.bf16.gmra.mxu0 %v343
      %v552 = vpop.f32.mrf.mxu0
      %v553 = vadd.f32 0.0, %v552
      %v554 = vpop.f32.mrf.mxu0
      %v555 = vpop.f32.mrf.mxu0
      %v556 = vadd.f32 0.0, %v555
      %v557 = vpop.f32.mrf.mxu0
      %558 = vmatprep.mubr.bf16.mxu0 %v464
      %559 = vmatmul.mubr.bf16.gmra.mxu0 %v345
      %v560 = vpop.f32.mrf.mxu0
      %v561 = vadd.f32 0.0, %v560
      %v562 = vpop.f32.mrf.mxu0
      %v563 = vpop.f32.mrf.mxu0
      %v564 = vadd.f32 0.0, %v563
      %v565 = vpop.f32.mrf.mxu0
      %566 = vmatprep.mubr.bf16.mxu0 %v467
      %567 = vmatmul.mubr.bf16.gmra.mxu0 %v347
      %v568 = vpop.f32.mrf.mxu0
      %v569 = vadd.f32 0.0, %v568
      %v570 = vpop.f32.mrf.mxu0
      %v571 = vpop.f32.mrf.mxu0
      %v572 = vadd.f32 0.0, %v571
      %v573 = vpop.f32.mrf.mxu0
      %574 = vmatprep.mubr.bf16.mxu0 %v470
      %575 = vmatmul.mubr.bf16.gmra.mxu0 %v349
      %v576 = vpop.f32.mrf.mxu0
      %v577 = vadd.f32 0.0, %v576
      %v578 = vpop.f32.mrf.mxu0
      %v579 = vpop.f32.mrf.mxu0
      %v580 = vadd.f32 0.0, %v579
      %v581 = vpop.f32.mrf.mxu0
      %582 = vmatprep.mubr.bf16.mxu0 %v473
      %583 = vmatmul.mubr.bf16.gmra.mxu0 %v351
      %v584 = vpop.f32.mrf.mxu0
      %v585 = vadd.f32 0.0, %v584
      %v586 = vpop.f32.mrf.mxu0
      %v587 = vpop.f32.mrf.mxu0
      %v588 = vadd.f32 0.0, %v587
      %v589 = vpop.f32.mrf.mxu0
      %590 = vmatprep.mubr.bf16.mxu0 %v476
      %591 = vmatmul.mubr.bf16.gmra.mxu0 %v353
      %v592 = vpop.f32.mrf.mxu0
      %v593 = vadd.f32 0.0, %v592
      %v594 = vpop.f32.mrf.mxu0
      %v595 = vpop.f32.mrf.mxu0
      %v596 = vadd.f32 0.0, %v595
      %v597 = vpop.f32.mrf.mxu0
      %598 = vmatprep.mubr.bf16.mxu0 %v479
      %599 = vmatmul.mubr.bf16.gmra.mxu0 %v355
      %v600 = vpop.f32.mrf.mxu0
      %v601 = vadd.f32 0.0, %v600
      %v602 = vpop.f32.mrf.mxu0
      %v603 = vpop.f32.mrf.mxu0
      %v604 = vadd.f32 0.0, %v603
      %v605 = vpop.f32.mrf.mxu0
      %606 = vmatprep.mubr.bf16.mxu0 %v482
      %607 = vmatmul.mubr.bf16.gmra.mxu0 %v357
      %v608 = vpop.f32.mrf.mxu0
      %v609 = vadd.f32 0.0, %v608
      %v610 = vpop.f32.mrf.mxu0
      %v611 = vpop.f32.mrf.mxu0
      %v612 = vadd.f32 0.0, %v611
      %v613 = vpop.f32.mrf.mxu0
      %614 = vmatprep.mubr.bf16.mxu0 %v485
      %615 = vmatmul.mubr.bf16.gmra.mxu0 %v359
      %v616 = vpop.f32.mrf.mxu0
      %v617 = vadd.f32 0.0, %v616
      %v618 = vpop.f32.mrf.mxu0
      %v619 = vpop.f32.mrf.mxu0
      %v620 = vadd.f32 0.0, %v619
      %v621 = vpop.f32.mrf.mxu0
      %622 = vmatprep.mubr.bf16.mxu0 %v488
      %623 = vmatmul.mubr.bf16.gmra.mxu0 %v361
      %v624 = vpop.f32.mrf.mxu0
      %v625 = vadd.f32 0.0, %v624
      %v626 = vpop.f32.mrf.mxu0
      %v627 = vpop.f32.mrf.mxu0
      %v628 = vadd.f32 0.0, %v627
      %v629 = vpop.f32.mrf.mxu0
      %630 = vmatprep.mubr.bf16.mxu0 %v491
      %631 = vmatmul.mubr.bf16.gmra.mxu0 %v363
      %v632 = vpop.f32.mrf.mxu0
      %v633 = vadd.f32 0.0, %v632
      %v634 = vpop.f32.mrf.mxu0
      %v635 = vpop.f32.mrf.mxu0
      %v636 = vadd.f32 0.0, %v635
      %v637 = vpop.f32.mrf.mxu0
      %638 = vmatprep.mubr.bf16.mxu0 %v494
      %639 = vmatmul.mubr.bf16.gmra.mxu0 %v365
      %v640 = vpop.f32.mrf.mxu0
      %v641 = vadd.f32 0.0, %v640
      %v642 = vpop.f32.mrf.mxu0
      %v643 = vpop.f32.mrf.mxu0
      %v644 = vadd.f32 0.0, %v643
      %v645 = vpop.f32.mrf.mxu0
      %646 = vmatprep.mubr.bf16.mxu0 %v497
      %647 = vmatmul.mubr.bf16.gmra.mxu0 %v367
      %v648 = vpop.f32.mrf.mxu0
      %v649 = vadd.f32 0.0, %v648
      %v650 = vpop.f32.mrf.mxu0
      %v651 = vpop.f32.mrf.mxu0
      %v652 = vadd.f32 0.0, %v651
      %v653 = vpop.f32.mrf.mxu0
      %654 = vmatprep.mubr.bf16.mxu0 %v500
      %655 = vmatmul.mubr.bf16.gmra.mxu0 %v369
      %v656 = vpop.f32.mrf.mxu0
      %v657 = vadd.f32 0.0, %v656
      %v658 = vpop.f32.mrf.mxu0
      %v659 = vpop.f32.mrf.mxu0
      %v660 = vadd.f32 0.0, %v659
      %v661 = vpop.f32.mrf.mxu0
      %662 = vdwg.mxu0
      %663 = vst [vmem:[%s182] sm:$0xff] %v537
      %664 = vst [vmem:[%s182 + $0x8] sm:$0xff] %v540
      %665 = vst [vmem:[%s182 + $0x10] sm:$0xff] %v545
      %666 = vst [vmem:[%s182 + $0x18] sm:$0xff] %v548
      %667 = vst [vmem:[%s182 + $0x20] sm:$0xff] %v553
      %668 = vst [vmem:[%s182 + $0x28] sm:$0xff] %v556
      %669 = vst [vmem:[%s182 + $0x30] sm:$0xff] %v561
      %670 = vst [vmem:[%s182 + $0x38] sm:$0xff] %v564
      %671 = vst [vmem:[%s182 + $0x40] sm:$0xff] %v569
      %672 = vst [vmem:[%s182 + $0x48] sm:$0xff] %v572
      %673 = vst [vmem:[%s182 + $0x50] sm:$0xff] %v577
      %674 = vst [vmem:[%s182 + $0x58] sm:$0xff] %v580
      %675 = vst [vmem:[%s182 + $0x60] sm:$0xff] %v585
      %676 = vst [vmem:[%s182 + $0x68] sm:$0xff] %v588
      %677 = vst [vmem:[%s182 + $0x70] sm:$0xff] %v593
      %678 = vst [vmem:[%s182 + $0x78] sm:$0xff] %v596
      %679 = vst [vmem:[%s182 + $0x80] sm:$0xff] %v601
      %680 = vst [vmem:[%s182 + $0x88] sm:$0xff] %v604
      %681 = vst [vmem:[%s182 + $0x90] sm:$0xff] %v609
      %682 = vst [vmem:[%s182 + $0x98] sm:$0xff] %v612
      %683 = vst [vmem:[%s182 + $0xa0] sm:$0xff] %v617
      %684 = vst [vmem:[%s182 + $0xa8] sm:$0xff] %v620
      %685 = vst [vmem:[%s182 + $0xb0] sm:$0xff] %v625
      %686 = vst [vmem:[%s182 + $0xb8] sm:$0xff] %v628
      %687 = vst [vmem:[%s182 + $0xc0] sm:$0xff] %v633
      %688 = vst [vmem:[%s182 + $0xc8] sm:$0xff] %v636
      %689 = vst [vmem:[%s182 + $0xd0] sm:$0xff] %v641
      %690 = vst [vmem:[%s182 + $0xd8] sm:$0xff] %v644
      %691 = vst [vmem:[%s182 + $0xe0] sm:$0xff] %v649
      %692 = vst [vmem:[%s182 + $0xe8] sm:$0xff] %v652
      %693 = vst [vmem:[%s182 + $0xf0] sm:$0xff] %v657
      %694 = vst [vmem:[%s182 + $0xf8] sm:$0xff] %v660
      %v695 = vadd.f32 %v537, %v540
      %v696 = vadd.f32 %v695, %v545
      %v697 = vadd.f32 %v696, %v548
      %v698 = vadd.f32 %v697, %v553
      %v699 = vadd.f32 %v698, %v556
      %v700 = vadd.f32 %v699, %v561
      %v701 = vadd.f32 %v700, %v564
      %v702 = vadd.f32 %v701, %v569
      %v703 = vadd.f32 %v702, %v572
      %v704 = vadd.f32 %v703, %v577
      %v705 = vadd.f32 %v704, %v580
      %v706 = vadd.f32 %v705, %v585
      %v707 = vadd.f32 %v706, %v588
      %v708 = vadd.f32 %v707, %v593
      %v709 = vadd.f32 %v708, %v596
      %v710 = vadd.f32 %v709, %v601
      %v711 = vadd.f32 %v710, %v604
      %v712 = vadd.f32 %v711, %v609
      %v713 = vadd.f32 %v712, %v612
      %v714 = vadd.f32 %v713, %v617
      %v715 = vadd.f32 %v714, %v620
      %v716 = vadd.f32 %v715, %v625
      %v717 = vadd.f32 %v716, %v628
      %v718 = vadd.f32 %v717, %v633
      %v719 = vadd.f32 %v718, %v636
      %v720 = vadd.f32 %v719, %v641
      %v721 = vadd.f32 %v720, %v644
      %v722 = vadd.f32 %v721, %v649
      %v723 = vadd.f32 %v722, %v652
      %v724 = vadd.f32 %v723, %v657
      %v725 = vadd.f32 %v724, %v660
      %v726 = vrot.slane %v725, 4
      %v727 = vadd.f32 %v725, %v726
      %v728 = vrot.slane %v727, 2
      %v729 = vadd.f32 %v727, %v728
      %v730 = vrot.slane %v729, 1
      %v731 = vadd.f32 %v729, %v730
      %v732 = vmul.f32 %v537, %v537
      %v733 = vmul.f32 %v540, %v540
      %v734 = vmul.f32 %v545, %v545
      %v735 = vmul.f32 %v548, %v548
      %v736 = vmul.f32 %v553, %v553
      %v737 = vmul.f32 %v556, %v556
      %v738 = vmul.f32 %v561, %v561
      %v739 = vmul.f32 %v564, %v564
      %v740 = vmul.f32 %v569, %v569
      %v741 = vmul.f32 %v572, %v572
      %v742 = vmul.f32 %v577, %v577
      %v743 = vmul.f32 %v580, %v580
      %v744 = vmul.f32 %v585, %v585
      %v745 = vmul.f32 %v588, %v588
      %v746 = vmul.f32 %v593, %v593
      %v747 = vmul.f32 %v596, %v596
      %v748 = vmul.f32 %v601, %v601
      %v749 = vmul.f32 %v604, %v604
      %v750 = vmul.f32 %v609, %v609
      %v751 = vmul.f32 %v612, %v612
      %v752 = vmul.f32 %v617, %v617
      %v753 = vmul.f32 %v620, %v620
      %v754 = vmul.f32 %v625, %v625
      %v755 = vmul.f32 %v628, %v628
      %v756 = vmul.f32 %v633, %v633
      %v757 = vmul.f32 %v636, %v636
      %v758 = vmul.f32 %v641, %v641
      %v759 = vmul.f32 %v644, %v644
      %v760 = vmul.f32 %v649, %v649
      %v761 = vmul.f32 %v652, %v652
      %v762 = vmul.f32 %v657, %v657
      %v763 = vmul.f32 %v660, %v660
      %v764 = vadd.f32 %v732, %v733
      %v765 = vadd.f32 %v764, %v734
      %v766 = vadd.f32 %v765, %v735
      %v767 = vadd.f32 %v766, %v736
      %v768 = vadd.f32 %v767, %v737
      %v769 = vadd.f32 %v768, %v738
      %v770 = vadd.f32 %v769, %v739
      %v771 = vadd.f32 %v770, %v740
      %v772 = vadd.f32 %v771, %v741
      %v773 = vadd.f32 %v772, %v742
      %v774 = vadd.f32 %v773, %v743
      %v775 = vadd.f32 %v774, %v744
      %v776 = vadd.f32 %v775, %v745
      %v777 = vadd.f32 %v776, %v746
      %v778 = vadd.f32 %v777, %v747
      %v779 = vadd.f32 %v778, %v748
      %v780 = vadd.f32 %v779, %v749
      %v781 = vadd.f32 %v780, %v750
      %v782 = vadd.f32 %v781, %v751
      %v783 = vadd.f32 %v782, %v752
      %v784 = vadd.f32 %v783, %v753
      %v785 = vadd.f32 %v784, %v754
      %v786 = vadd.f32 %v785, %v755
      %v787 = vadd.f32 %v786, %v756
      %v788 = vadd.f32 %v787, %v757
      %v789 = vadd.f32 %v788, %v758
      %v790 = vadd.f32 %v789, %v759
      %v791 = vadd.f32 %v790, %v760
      %v792 = vadd.f32 %v791, %v761
      %v793 = vadd.f32 %v792, %v762
      %v794 = vadd.f32 %v793, %v763
      %v795 = vrot.slane %v794, 4
      %v796 = vadd.f32 %v794, %v795
      %v797 = vrot.slane %v796, 2
      %v798 = vadd.f32 %v796, %v797
      %v799 = vrot.slane %v798, 1
      %v800 = vadd.f32 %v798, %v799
      %vm801 = vcmask 1040384
      %v802 = vsel %vm801, %v731, %v800
      %803 = vst [vmem:[%s187] sm:$0x3] %v802
      %s804 = smul.u32 32, %s15
      %p805 = scmp.lt.s32.totalorder %s804, 255
      %s806 = scalar_select %p805, %s804, 255
      %s807 = smul.addr %s806, 8
      %s808 = scalar_lea.vmem %s2, %s807
      %p809 = scmp.lt.s32.totalorder %s15, 7
      %s810 = scalar_select %p809, %s15, 7
      %s811 = smul.addr %s810, 2
      %s812 = scalar_lea.vmem %s3, %s811
      // Predicated region
      $region29: #{discriminator_forward.7} parent=27 // pred_check
        %p813 = pneg %p80
      $region30: #{discriminator_forward.7} parent=27 // pred_check_branch
        %815 = sbr.rel (%p813) target = $region32
      $region31: #{discriminator_forward.7} parent=27 // pred_region
        %s816 = smul.u32 32, %s15
      $region32: #{discriminator_forward.7} parent=27 // pred_fallthru
        _
      // Predicated region
      $region33: #{discriminator_forward.7} parent=27 // pred_check
        %p817 = pneg %p106
      $region34: #{discriminator_forward.7} parent=27 // pred_check_branch
        %819 = sbr.rel (%p817) target = $region36
      $region35: #{discriminator_forward.7} parent=27 // pred_region
        _
      $region36: #{discriminator_forward.7} parent=27 // pred_fallthru
        _
    $region28: #{discriminator_forward.7} parent=5 // pred_fallthru
      _
    %p820 = scmp.le.s32.totalorder 2, %s10
    // Predicated region
    $region37: #{discriminator_forward.7} parent=5 // pred_check
      %p821 = pneg %p820
    $region38: #{discriminator_forward.7} parent=5 // pred_check_branch
      %823 = sbr.rel (%p821) target = $region40
    $region39: #{discriminator_forward.7} parent=5 // pred_region
      %s824 = ssub.s32 %s10, 2
      // Predicated region
      $region41: #{discriminator_forward.7} parent=39 // pred_check
        %p825 = pneg %p86
      $region42: #{discriminator_forward.7} parent=39 // pred_check_branch
        %827 = sbr.rel (%p825) target = $region44
      $region43: #{discriminator_forward.7} parent=39 // pred_region
        %s828 = smul.u32 32, %s16
        %p829 = scmp.lt.s32.totalorder %s828, 255
        %s830 = scalar_select %p829, %s828, 255
        %s831 = smul.addr %s830, 8
        %s832 = scalar_lea.vmem %s2, %s831
      $region44: #{discriminator_forward.7} parent=39 // pred_fallthru
        _
      // Predicated region
      $region45: #{discriminator_forward.7} parent=39 // pred_check
        %p833 = pneg %p112
      $region46: #{discriminator_forward.7} parent=39 // pred_check_branch
        %835 = sbr.rel (%p833) target = $region48
      $region47: #{discriminator_forward.7} parent=39 // pred_region
        %p836 = scmp.lt.s32.totalorder %s16, 7
        %s837 = scalar_select %p836, %s16, 7
        %s838 = smul.addr %s837, 2
        %s839 = scalar_lea.vmem %s3, %s838
      $region48: #{discriminator_forward.7} parent=39 // pred_fallthru
        _
    $region40: #{discriminator_forward.7} parent=5 // pred_fallthru
      _
  $region6: #{discriminator_forward.7} parent=0 // loop_footer
    %s14 = sadd.s32 1, %s10
  $region7: #{discriminator_forward.7} parent=0 // loop_footer_branch
    %9 = sbr.rel target = $region3
  $region8: #{discriminator_forward.7} parent=0 // loop_exit
    _

// kernel: discriminator_forward.9
$region0: #{discriminator_forward.9}
  #allocation0 [shape = 'u32[]', space=smem, size = 0x4, offset = 0x4, fixed_abs, tag = 'smem constant byte address 0x4 - core index']
  #allocation1 [shape = 'u32[144,128]{1,0:T(1,128)}', space=vmem, size = 0x12000, scoped, tag = 'internal scratch']
  %s0 = inlined_call_operand.vmem [shape: bf16[512,512], index: 0, kind: input, shape index: {}]
  %s1 = inlined_call_operand.vmem [shape: bf16[512,128], index: 1, kind: input, shape index: {}]
  %s2 = inlined_call_operand.vmem [shape: f32[512,128], index: 2, kind: output, shape index: {0}]
  %s3 = inlined_call_operand.vmem [shape: f32[2,2,128], index: 3, kind: output, shape index: {1}]
  %4 = xla_tuple %s2, %s3
  %s5 = sld [smem:[#allocation0]]
  $region49: #{discriminator_forward.9} parent=0
    _
  %s7 = ssub.s32 1, %s5
  %s8 = scalar_select 0, %s7, %s5
  loop: start=0, step=1, limit=4
  $region2: #{discriminator_forward.9} parent=0 // loop_pre_header
    _
  $region3: #{discriminator_forward.9} parent=0 // loop_header
    %s10 = sphi 0, %s14
    %p11 = scmp.ge.s32.totalorder %s10, 4
    %s20 = sphi 0, %s22
    %s23 = sphi 0, %s20
    %s24 = sphi 0, %s23
    %s40 = sphi 0, %s24
    %s44 = sphi 0, %s44
    %s46 = sphi 0, %s44
    %s47 = sphi 0, %s46
    %s61 = sphi 0, %s47
    %s67 = sphi 0, %s69
    %s70 = sphi 0, %s67
    %s71 = sphi 0, %s70
    %s87 = sphi 0, %s71
    %s93 = sphi 0, %s95
    %s96 = sphi 0, %s93
    %s97 = sphi 0, %s96
    %s113 = sphi 0, %s97
  $region4: #{discriminator_forward.9} parent=0 // loop_header_branch
    %13 = sbr.rel (%p11) target = $region8
  $region5: #{discriminator_forward.9} parent=0 // loop_body
    %s15 = ssub.s32 %s10, 1
    %s16 = ssub.s32 %s10, 2
    %s17 = sadd.s32 %s10, 1
    %s18 = ssub.s32 %s10, %s17
    %p19 = scmp.eq.s32.totalorder %s18, 0
    %s21 = sadd.s32 %s20, 1
    %s22 = scalar_select %p19, %s20, %s21
    %p25 = pneg %p19
    %p26 = scmp.eq.s32.totalorder %s10, 1
    %p27 = por %p25, %p26
    %p28 = scmp.ne.s32.totalorder %s20, %s23
    %p29 = scmp.eq.s32.totalorder %s10, 0
    %p30 = por %p28, %p29
    %p31 = scmp.ne.s32.totalorder %s20, %s23
    %p32 = scmp.eq.s32.totalorder %s15, 1
    %p33 = por %p31, %p32
    %p34 = scmp.ne.s32.totalorder %s23, %s24
    %p35 = scmp.eq.s32.totalorder %s15, 0
    %p36 = por %p34, %p35
    %p37 = scmp.ne.s32.totalorder %s23, %s24
    %p38 = scmp.eq.s32.totalorder %s16, 1
    %p39 = por %p37, %p38
    %p41 = scmp.ne.s32.totalorder %s24, %s40
    %p42 = scmp.eq.s32.totalorder %s16, 0
    %p43 = por %p41, %p42
    %s45 = sadd.s32 %s44, 1
    %p48 = scmp.eq.s32.totalorder %s10, 1
    %p49 = scmp.ne.s32.totalorder %s44, %s46
    %p50 = scmp.eq.s32.totalorder %s10, 0
    %p51 = por %p49, %p50
    %p52 = scmp.ne.s32.totalorder %s44, %s46
    %p53 = scmp.eq.s32.totalorder %s15, 1
    %p54 = por %p52, %p53
    %p55 = scmp.ne.s32.totalorder %s46, %s47
    %p56 = scmp.eq.s32.totalorder %s15, 0
    %p57 = por %p55, %p56
    %p58 = scmp.ne.s32.totalorder %s46, %s47
    %p59 = scmp.eq.s32.totalorder %s16, 1
    %p60 = por %p58, %p59
    %p62 = scmp.ne.s32.totalorder %s47, %s61
    %p63 = scmp.eq.s32.totalorder %s16, 0
    %p64 = por %p62, %p63
    %s65 = ssub.s32 %s10, %s17
    %p66 = scmp.eq.s32.totalorder %s65, 0
    %s68 = sadd.s32 %s67, 1
    %s69 = scalar_select %p66, %s67, %s68
    %p72 = pneg %p66
    %p73 = scmp.eq.s32.totalorder %s10, 1
    %p74 = por %p72, %p73
    %p75 = scmp.ne.s32.totalorder %s67, %s70
    %p76 = scmp.eq.s32.totalorder %s10, 0
    %p77 = por %p75, %p76
    %p78 = scmp.ne.s32.totalorder %s67, %s70
    %p79 = scmp.eq.s32.totalorder %s15, 1
    %p80 = por %p78, %p79
    %p81 = scmp.ne.s32.totalorder %s70, %s71
    %p82 = scmp.eq.s32.totalorder %s15, 0
    %p83 = por %p81, %p82
    %p84 = scmp.ne.s32.totalorder %s70, %s71
    %p85 = scmp.eq.s32.totalorder %s16, 1
    %p86 = por %p84, %p85
    %p88 = scmp.ne.s32.totalorder %s71, %s87
    %p89 = scmp.eq.s32.totalorder %s16, 0
    %p90 = por %p88, %p89
    %s91 = ssub.s32 %s10, %s17
    %p92 = scmp.eq.s32.totalorder %s91, 0
    %s94 = sadd.s32 %s93, 1
    %s95 = scalar_select %p92, %s93, %s94
    %p98 = pneg %p92
    %p99 = scmp.eq.s32.totalorder %s10, 1
    %p100 = por %p98, %p99
    %p101 = scmp.ne.s32.totalorder %s93, %s96
    %p102 = scmp.eq.s32.totalorder %s10, 0
    %p103 = por %p101, %p102
    %p104 = scmp.ne.s32.totalorder %s93, %s96
    %p105 = scmp.eq.s32.totalorder %s15, 1
    %p106 = por %p104, %p105
    %p107 = scmp.ne.s32.totalorder %s96, %s97
    %p108 = scmp.eq.s32.totalorder %s15, 0
    %p109 = por %p107, %p108
    %p110 = scmp.ne.s32.totalorder %s96, %s97
    %p111 = scmp.eq.s32.totalorder %s16, 1
    %p112 = por %p110, %p111
    %p114 = scmp.ne.s32.totalorder %s97, %s113
    %p115 = scmp.eq.s32.totalorder %s16, 0
    %p116 = por %p114, %p115
    %p117 = scmp.le.s32.totalorder 1, %s10
    %p118 = scmp.lt.s32.totalorder %s10, 3
    %p119 = pnand %p117, %p118
    %p120 = pneg %p119
    // Predicated region
    $region9: #{discriminator_forward.9} parent=5 // pred_check
      _
    $region10: #{discriminator_forward.9} parent=5 // pred_check_branch
      %122 = sbr.rel (%p119) target = $region12
    $region11: #{discriminator_forward.9} parent=5 // pred_region
      %s123 = ssub.s32 %s10, 1
      // Predicated region
      $region13: #{discriminator_forward.9} parent=11 // pred_check
        %p124 = pneg %p57
      $region14: #{discriminator_forward.9} parent=11 // pred_check_branch
        %126 = sbr.rel (%p124) target = $region16
      $region15: #{discriminator_forward.9} parent=11 // pred_region
        _
      $region16: #{discriminator_forward.9} parent=11 // pred_fallthru
        _
    $region12: #{discriminator_forward.9} parent=5 // pred_fallthru
      _
    %p127 = scmp.lt.s32.totalorder %s10, 2
    // Predicated region
    $region17: #{discriminator_forward.9} parent=5 // pred_check
      %p128 = pneg %p127
    $region18: #{discriminator_forward.9} parent=5 // pred_check_branch
      %130 = sbr.rel (%p128) target = $region20
    $region19: #{discriminator_forward.9} parent=5 // pred_region
      // Predicated region
      $region21: #{discriminator_forward.9} parent=19 // pred_check
        %p131 = pneg %p30
      $region22: #{discriminator_forward.9} parent=19 // pred_check_branch
        %133 = sbr.rel (%p131) target = $region24
      $region23: #{discriminator_forward.9} parent=19 // pred_region
        %s134 = smul.u32 32, %s10
        %p135 = scmp.lt.s32.totalorder %s134, 63
        %s136 = scalar_select %p135, %s134, 63
        %s137 = smul.addr %s136, 4
        %s138 = smul.addr %s137, 4
        %s139 = scalar_lea.vmem %s0, %s138
        %s140 = smul.u32 32, %s10
      $region24: #{discriminator_forward.9} parent=19 // pred_fallthru
        _
    $region20: #{discriminator_forward.9} parent=5 // pred_fallthru
      _
    %p141 = scmp.le.s32.totalorder 1, %s10
    %p142 = scmp.lt.s32.totalorder %s10, 3
    %p143 = pnand %p141, %p142
    %p144 = pneg %p143
    // Predicated region
    $region25: #{discriminator_forward.9} parent=5 // pred_check
      _
    $region26: #{discriminator_forward.9} parent=5 // pred_check_branch
      %146 = sbr.rel (%p143) target = $region28
    $region27: #{discriminator_forward.9} parent=5 // pred_region
      %s147 = ssub.s32 %s10, 1
      %s148 = smul.u32 32, %s15
      %p149 = scmp.lt.s32.totalorder %s148, 63
      %s150 = scalar_select %p149, %s148, 63
      %s151 = smul.addr %s150, 4
      %s152 = smul.addr %s151, 4
      %s153 = scalar_lea.vmem %s0, %s152
      %p154 = pneg %p36
      %p155 = pneg %p33
      %p156 = pneg %p57
      %p157 = pneg %p54
      %p158 = pneg %p83
      %p159 = pneg %p80
      %s160 = smul.u32 32, %s15
      %p161 = scmp.lt.s32.totalorder %s160, 63
      %s162 = scalar_select %p161, %s160, 63
      %s163 = smul.addr %s162, 8
      %s164 = scalar_lea.vmem %s2, %s163
      %p165 = pneg %p109
      %p166 = pneg %p106
      %p167 = scmp.lt.s32.totalorder %s15, 1
      %s168 = scalar_select %p167, %s15, 1
      %s169 = smul.addr %s168, 2
      %s170 = scalar_lea.vmem %s3, %s169
      %s171 = smul.u32 32, %s15
      %p172 = scmp.lt.s32.totalorder %s171, 63
      %s173 = scalar_select %p172, %s171, 63
      %s174 = smul.addr %s173, 4
      %s175 = smul.addr %s174, 4
      %s176 = scalar_lea.vmem %s0, %s175
      %s177 = smul.u32 32, %s15
      %s178 = smul.u32 32, %s15
      %p179 = scmp.lt.s32.totalorder %s178, 63
      %s180 = scalar_select %p179, %s178, 63
      %s181 = smul.addr %s180, 8
      %s182 = scalar_lea.vmem %s2, %s181
      %s183 = smul.u32 32, %s15
      %p184 = scmp.lt.s32.totalorder %s15, 1
      %s185 = scalar_select %p184, %s15, 1
      %s186 = smul.addr %s185, 2
      %s187 = scalar_lea.vmem %s3, %s186
      %v189 = vld [vmem:[%s176] sm:$0xff]
      %v190 = vld [vmem:[%s176 + $0x8] sm:$0xff]
      %v191 = vld [vmem:[%s176 + $0x10] sm:$0xff]
      %v192 = vld [vmem:[%s176 + $0x18] sm:$0xff]
      %v193 = vld [vmem:[%s176 + $0x20] sm:$0xff]
      %v194 = vld [vmem:[%s176 + $0x28] sm:$0xff]
      %v195 = vld [vmem:[%s176 + $0x30] sm:$0xff]
      %v196 = vld [vmem:[%s176 + $0x38] sm:$0xff]
      %v197 = vld [vmem:[%s176 + $0x40] sm:$0xff]
      %v198 = vld [vmem:[%s176 + $0x48] sm:$0xff]
      %v199 = vld [vmem:[%s176 + $0x50] sm:$0xff]
      %v200 = vld [vmem:[%s176 + $0x58] sm:$0xff]
      %v201 = vld [vmem:[%s176 + $0x60] sm:$0xff]
      %v202 = vld [vmem:[%s176 + $0x68] sm:$0xff]
      %v203 = vld [vmem:[%s176 + $0x70] sm:$0xff]
      %v204 = vld [vmem:[%s176 + $0x78] sm:$0xff]
      %v205 = vld [vmem:[%s176 + $0x80] sm:$0xff]
      %v206 = vld [vmem:[%s176 + $0x88] sm:$0xff]
      %v207 = vld [vmem:[%s176 + $0x90] sm:$0xff]
      %v208 = vld [vmem:[%s176 + $0x98] sm:$0xff]
      %v209 = vld [vmem:[%s176 + $0xa0] sm:$0xff]
      %v210 = vld [vmem:[%s176 + $0xa8] sm:$0xff]
      %v211 = vld [vmem:[%s176 + $0xb0] sm:$0xff]
      %v212 = vld [vmem:[%s176 + $0xb8] sm:$0xff]
      %v213 = vld [vmem:[%s176 + $0xc0] sm:$0xff]
      %v214 = vld [vmem:[%s176 + $0xc8] sm:$0xff]
      %v215 = vld [vmem:[%s176 + $0xd0] sm:$0xff]
      %v216 = vld [vmem:[%s176 + $0xd8] sm:$0xff]
      %v217 = vld [vmem:[%s176 + $0xe0] sm:$0xff]
      %v218 = vld [vmem:[%s176 + $0xe8] sm:$0xff]
      %v219 = vld [vmem:[%s176 + $0xf0] sm:$0xff]
      %v220 = vld [vmem:[%s176 + $0xf8] sm:$0xff]
      %v221 = vld [vmem:[%s176 + $0x100] sm:$0xff]
      %v222 = vld [vmem:[%s176 + $0x108] sm:$0xff]
      %v223 = vld [vmem:[%s176 + $0x110] sm:$0xff]
      %v224 = vld [vmem:[%s176 + $0x118] sm:$0xff]
      %v225 = vld [vmem:[%s176 + $0x120] sm:$0xff]
      %v226 = vld [vmem:[%s176 + $0x128] sm:$0xff]
      %v227 = vld [vmem:[%s176 + $0x130] sm:$0xff]
      %v228 = vld [vmem:[%s176 + $0x138] sm:$0xff]
      %v229 = vld [vmem:[%s176 + $0x140] sm:$0xff]
      %v230 = vld [vmem:[%s176 + $0x148] sm:$0xff]
      %v231 = vld [vmem:[%s176 + $0x150] sm:$0xff]
      %v232 = vld [vmem:[%s176 + $0x158] sm:$0xff]
      %v233 = vld [vmem:[%s176 + $0x160] sm:$0xff]
      %v234 = vld [vmem:[%s176 + $0x168] sm:$0xff]
      %v235 = vld [vmem:[%s176 + $0x170] sm:$0xff]
      %v236 = vld [vmem:[%s176 + $0x178] sm:$0xff]
      %v237 = vld [vmem:[%s176 + $0x180] sm:$0xff]
      %v238 = vld [vmem:[%s176 + $0x188] sm:$0xff]
      %v239 = vld [vmem:[%s176 + $0x190] sm:$0xff]
      %v240 = vld [vmem:[%s176 + $0x198] sm:$0xff]
      %v241 = vld [vmem:[%s176 + $0x1a0] sm:$0xff]
      %v242 = vld [vmem:[%s176 + $0x1a8] sm:$0xff]
      %v243 = vld [vmem:[%s176 + $0x1b0] sm:$0xff]
      %v244 = vld [vmem:[%s176 + $0x1b8] sm:$0xff]
      %v245 = vld [vmem:[%s176 + $0x1c0] sm:$0xff]
      %v246 = vld [vmem:[%s176 + $0x1c8] sm:$0xff]
      %v247 = vld [vmem:[%s176 + $0x1d0] sm:$0xff]
      %v248 = vld [vmem:[%s176 + $0x1d8] sm:$0xff]
      %v249 = vld [vmem:[%s176 + $0x1e0] sm:$0xff]
      %v250 = vld [vmem:[%s176 + $0x1e8] sm:$0xff]
      %v251 = vld [vmem:[%s176 + $0x1f0] sm:$0xff]
      %v252 = vld [vmem:[%s176 + $0x1f8] sm:$0xff]
      %v253 = vld [vmem:[%s1] sm:$0xf]
      %v254 = vld [vmem:[%s1 + $0x4] sm:$0xf]
      %v255 = vld [vmem:[%s1 + $0x8] sm:$0xf]
      %v256 = vld [vmem:[%s1 + $0xc] sm:$0xf]
      %v257 = vld [vmem:[%s1 + $0x10] sm:$0xf]
      %v258 = vld [vmem:[%s1 + $0x14] sm:$0xf]
      %v259 = vld [vmem:[%s1 + $0x18] sm:$0xf]
      %v260 = vld [vmem:[%s1 + $0x1c] sm:$0xf]
      %v261 = vld [vmem:[%s1 + $0x20] sm:$0xf]
      %v262 = vld [vmem:[%s1 + $0x24] sm:$0xf]
      %v263 = vld [vmem:[%s1 + $0x28] sm:$0xf]
      %v264 = vld [vmem:[%s1 + $0x2c] sm:$0xf]
      %v265 = vld [vmem:[%s1 + $0x30] sm:$0xf]
      %v266 = vld [vmem:[%s1 + $0x34] sm:$0xf]
      %v267 = vld [vmem:[%s1 + $0x38] sm:$0xf]
      %v268 = vld [vmem:[%s1 + $0x3c] sm:$0xf]
      %v269 = vld [vmem:[%s1 + $0x40] sm:$0xf]
      %v270 = vld [vmem:[%s1 + $0x44] sm:$0xf]
      %v271 = vld [vmem:[%s1 + $0x48] sm:$0xf]
      %v272 = vld [vmem:[%s1 + $0x4c] sm:$0xf]
      %v273 = vld [vmem:[%s1 + $0x50] sm:$0xf]
      %v274 = vld [vmem:[%s1 + $0x54] sm:$0xf]
      %v275 = vld [vmem:[%s1 + $0x58] sm:$0xf]
      %v276 = vld [vmem:[%s1 + $0x5c] sm:$0xf]
      %v277 = vld [vmem:[%s1 + $0x60] sm:$0xf]
      %v278 = vld [vmem:[%s1 + $0x64] sm:$0xf]
      %v279 = vld [vmem:[%s1 + $0x68] sm:$0xf]
      %v280 = vld [vmem:[%s1 + $0x6c] sm:$0xf]
      %v281 = vld [vmem:[%s1 + $0x70] sm:$0xf]
      %v282 = vld [vmem:[%s1 + $0x74] sm:$0xf]
      %v283 = vld [vmem:[%s1 + $0x78] sm:$0xf]
      %v284 = vld [vmem:[%s1 + $0x7c] sm:$0xf]
      %v285 = vld [vmem:[%s1 + $0x80] sm:$0xf]
      %v286 = vld [vmem:[%s1 + $0x84] sm:$0xf]
      %v287 = vld [vmem:[%s1 + $0x88] sm:$0xf]
      %v288 = vld [vmem:[%s1 + $0x8c] sm:$0xf]
      %v289 = vld [vmem:[%s1 + $0x90] sm:$0xf]
      %v290 = vld [vmem:[%s1 + $0x94] sm:$0xf]
      %v291 = vld [vmem:[%s1 + $0x98] sm:$0xf]
      %v292 = vld [vmem:[%s1 + $0x9c] sm:$0xf]
      %v293 = vld [vmem:[%s1 + $0xa0] sm:$0xf]
      %v294 = vld [vmem:[%s1 + $0xa4] sm:$0xf]
      %v295 = vld [vmem:[%s1 + $0xa8] sm:$0xf]
      %v296 = vld [vmem:[%s1 + $0xac] sm:$0xf]
      %v297 = vld [vmem:[%s1 + $0xb0] sm:$0xf]
      %v298 = vld [vmem:[%s1 + $0xb4] sm:$0xf]
      %v299 = vld [vmem:[%s1 + $0xb8] sm:$0xf]
      %v300 = vld [vmem:[%s1 + $0xbc] sm:$0xf]
      %v301 = vld [vmem:[%s1 + $0xc0] sm:$0xf]
      %v302 = vld [vmem:[%s1 + $0xc4] sm:$0xf]
      %v303 = vld [vmem:[%s1 + $0xc8] sm:$0xf]
      %v304 = vld [vmem:[%s1 + $0xcc] sm:$0xf]
      %v305 = vld [vmem:[%s1 + $0xd0] sm:$0xf]
      %v306 = vld [vmem:[%s1 + $0xd4] sm:$0xf]
      %v307 = vld [vmem:[%s1 + $0xd8] sm:$0xf]
      %v308 = vld [vmem:[%s1 + $0xdc] sm:$0xf]
      %v309 = vld [vmem:[%s1 + $0xe0] sm:$0xf]
      %v310 = vld [vmem:[%s1 + $0xe4] sm:$0xf]
      %v311 = vld [vmem:[%s1 + $0xe8] sm:$0xf]
      %v312 = vld [vmem:[%s1 + $0xec] sm:$0xf]
      %v313 = vld [vmem:[%s1 + $0xf0] sm:$0xf]
      %v314 = vld [vmem:[%s1 + $0xf4] sm:$0xf]
      %v315 = vld [vmem:[%s1 + $0xf8] sm:$0xf]
      %v316 = vld [vmem:[%s1 + $0xfc] sm:$0xf]
      %v381 = vunpack.c.l.b16 %v189
      %v382 = vunpack.c.h.b16 %v189
      %v383 = vunpack.c.l.b16 %v190
      %v384 = vunpack.c.h.b16 %v190
      %v385 = vunpack.c.l.b16 %v191
      %v386 = vunpack.c.h.b16 %v191
      %v387 = vunpack.c.l.b16 %v192
      %v388 = vunpack.c.h.b16 %v192
      %v389 = vunpack.c.l.b16 %v193
      %v390 = vunpack.c.h.b16 %v193
      %v391 = vunpack.c.l.b16 %v194
      %v392 = vunpack.c.h.b16 %v194
      %v393 = vunpack.c.l.b16 %v195
      %v394 = vunpack.c.h.b16 %v195
      %v395 = vunpack.c.l.b16 %v196
      %v396 = vunpack.c.h.b16 %v196
      %v397 = vunpack.c.l.b16 %v197
      %v398 = vunpack.c.h.b16 %v197
      %v399 = vunpack.c.l.b16 %v198
      %v400 = vunpack.c.h.b16 %v198
      %v401 = vunpack.c.l.b16 %v199
      %v402 = vunpack.c.h.b16 %v199
      %v403 = vunpack.c.l.b16 %v200
      %v404 = vunpack.c.h.b16 %v200
      %v405 = vunpack.c.l.b16 %v201
      %v406 = vunpack.c.h.b16 %v201
      %v407 = vunpack.c.l.b16 %v202
      %v408 = vunpack.c.h.b16 %v202
      %v409 = vunpack.c.l.b16 %v203
      %v410 = vunpack.c.h.b16 %v203
      %v411 = vunpack.c.l.b16 %v204
      %v412 = vunpack.c.h.b16 %v204
      %v413 = vunpack.c.l.b16 %v205
      %v414 = vunpack.c.h.b16 %v205
      %v415 = vunpack.c.l.b16 %v206
      %v416 = vunpack.c.h.b16 %v206
      %v417 = vunpack.c.l.b16 %v207
      %v418 = vunpack.c.h.b16 %v207
      %v419 = vunpack.c.l.b16 %v208
      %v420 = vunpack.c.h.b16 %v208
      %v421 = vunpack.c.l.b16 %v209
      %v422 = vunpack.c.h.b16 %v209
      %v423 = vunpack.c.l.b16 %v210
      %v424 = vunpack.c.h.b16 %v210
      %v425 = vunpack.c.l.b16 %v211
      %v426 = vunpack.c.h.b16 %v211
      %v427 = vunpack.c.l.b16 %v212
      %v428 = vunpack.c.h.b16 %v212
      %v429 = vunpack.c.l.b16 %v213
      %v430 = vunpack.c.h.b16 %v213
      %v431 = vunpack.c.l.b16 %v214
      %v432 = vunpack.c.h.b16 %v214
      %v433 = vunpack.c.l.b16 %v215
      %v434 = vunpack.c.h.b16 %v215
      %v435 = vunpack.c.l.b16 %v216
      %v436 = vunpack.c.h.b16 %v216
      %v437 = vunpack.c.l.b16 %v217
      %v438 = vunpack.c.h.b16 %v217
      %v439 = vunpack.c.l.b16 %v218
      %v440 = vunpack.c.h.b16 %v218
      %v441 = vunpack.c.l.b16 %v219
      %v442 = vunpack.c.h.b16 %v219
      %v443 = vunpack.c.l.b16 %v220
      %v444 = vunpack.c.h.b16 %v220
      %v445 = vunpack.c.l.b16 %v221
      %v446 = vunpack.c.h.b16 %v221
      %v447 = vunpack.c.l.b16 %v222
      %v448 = vunpack.c.h.b16 %v222
      %v449 = vunpack.c.l.b16 %v223
      %v450 = vunpack.c.h.b16 %v223
      %v451 = vunpack.c.l.b16 %v224
      %v452 = vunpack.c.h.b16 %v224
      %v453 = vunpack.c.l.b16 %v225
      %v454 = vunpack.c.h.b16 %v225
      %v455 = vunpack.c.l.b16 %v226
      %v456 = vunpack.c.h.b16 %v226
      %v457 = vunpack.c.l.b16 %v227
      %v458 = vunpack.c.h.b16 %v227
      %v459 = vunpack.c.l.b16 %v228
      %v460 = vunpack.c.h.b16 %v228
      %v461 = vunpack.c.l.b16 %v229
      %v462 = vunpack.c.h.b16 %v229
      %v463 = vunpack.c.l.b16 %v230
      %v464 = vunpack.c.h.b16 %v230
      %v465 = vunpack.c.l.b16 %v231
      %v466 = vunpack.c.h.b16 %v231
      %v467 = vunpack.c.l.b16 %v232
      %v468 = vunpack.c.h.b16 %v232
      %v469 = vunpack.c.l.b16 %v233
      %v470 = vunpack.c.h.b16 %v233
      %v471 = vunpack.c.l.b16 %v234
      %v472 = vunpack.c.h.b16 %v234
      %v473 = vunpack.c.l.b16 %v235
      %v474 = vunpack.c.h.b16 %v235
      %v475 = vunpack.c.l.b16 %v236
      %v476 = vunpack.c.h.b16 %v236
      %v477 = vunpack.c.l.b16 %v237
      %v478 = vunpack.c.h.b16 %v237
      %v479 = vunpack.c.l.b16 %v238
      %v480 = vunpack.c.h.b16 %v238
      %v481 = vunpack.c.l.b16 %v239
      %v482 = vunpack.c.h.b16 %v239
      %v483 = vunpack.c.l.b16 %v240
      %v484 = vunpack.c.h.b16 %v240
      %v485 = vunpack.c.l.b16 %v241
      %v486 = vunpack.c.h.b16 %v241
      %v487 = vunpack.c.l.b16 %v242
      %v488 = vunpack.c.h.b16 %v242
      %v489 = vunpack.c.l.b16 %v243
      %v490 = vunpack.c.h.b16 %v243
      %v491 = vunpack.c.l.b16 %v244
      %v492 = vunpack.c.h.b16 %v244
      %v493 = vunpack.c.l.b16 %v245
      %v494 = vunpack.c.h.b16 %v245
      %v495 = vunpack.c.l.b16 %v246
      %v496 = vunpack.c.h.b16 %v246
      %v497 = vunpack.c.l.b16 %v247
      %v498 = vunpack.c.h.b16 %v247
      %v499 = vunpack.c.l.b16 %v248
      %v500 = vunpack.c.h.b16 %v248
      %v501 = vunpack.c.l.b16 %v249
      %v502 = vunpack.c.h.b16 %v249
      %v503 = vunpack.c.l.b16 %v250
      %v504 = vunpack.c.h.b16 %v250
      %v505 = vunpack.c.l.b16 %v251
      %v506 = vunpack.c.h.b16 %v251
      %v507 = vunpack.c.l.b16 %v252
      %v508 = vunpack.c.h.b16 %v252
      %v509 = vpack.c.b16 %v385, %v381
      %v510 = vpack.c.b16 %v386, %v382
      %v511 = vpack.c.b16 %v387, %v383
      %v512 = vpack.c.b16 %v388, %v384
      %v513 = vpack.c.b16 %v393, %v389
      %v514 = vpack.c.b16 %v394, %v390
      %v515 = vpack.c.b16 %v395, %v391
      %v516 = vpack.c.b16 %v396, %v392
      %v517 = vpack.c.b16 %v401, %v397
      %v518 = vpack.c.b16 %v402, %v398
      %v519 = vpack.c.b16 %v403, %v399
      %v520 = vpack.c.b16 %v404, %v400
      %v521 = vpack.c.b16 %v409, %v405
      %v522 = vpack.c.b16 %v410, %v406
      %v523 = vpack.c.b16 %v411, %v407
      %v524 = vpack.c.b16 %v412, %v408
      %v525 = vpack.c.b16 %v417, %v413
      %v526 = vpack.c.b16 %v418, %v414
      %v527 = vpack.c.b16 %v419, %v415
      %v528 = vpack.c.b16 %v420, %v416
      %v529 = vpack.c.b16 %v425, %v421
      %v530 = vpack.c.b16 %v426, %v422
      %v531 = vpack.c.b16 %v427, %v423
      %v532 = vpack.c.b16 %v428, %v424
      %v533 = vpack.c.b16 %v433, %v429
      %v534 = vpack.c.b16 %v434, %v430
      %v535 = vpack.c.b16 %v435, %v431
      %v536 = vpack.c.b16 %v436, %v432
      %v537 = vpack.c.b16 %v441, %v437
      %v538 = vpack.c.b16 %v442, %v438
      %v539 = vpack.c.b16 %v443, %v439
      %v540 = vpack.c.b16 %v444, %v440
      %v541 = vpack.c.b16 %v449, %v445
      %v542 = vpack.c.b16 %v450, %v446
      %v543 = vpack.c.b16 %v451, %v447
      %v544 = vpack.c.b16 %v452, %v448
      %v545 = vpack.c.b16 %v457, %v453
      %v546 = vpack.c.b16 %v458, %v454
      %v547 = vpack.c.b16 %v459, %v455
      %v548 = vpack.c.b16 %v460, %v456
      %v549 = vpack.c.b16 %v465, %v461
      %v550 = vpack.c.b16 %v466, %v462
      %v551 = vpack.c.b16 %v467, %v463
      %v552 = vpack.c.b16 %v468, %v464
      %v553 = vpack.c.b16 %v473, %v469
      %v554 = vpack.c.b16 %v474, %v470
      %v555 = vpack.c.b16 %v475, %v471
      %v556 = vpack.c.b16 %v476, %v472
      %v557 = vpack.c.b16 %v481, %v477
      %v558 = vpack.c.b16 %v482, %v478
      %v559 = vpack.c.b16 %v483, %v479
      %v560 = vpack.c.b16 %v484, %v480
      %v561 = vpack.c.b16 %v489, %v485
      %v562 = vpack.c.b16 %v490, %v486
      %v563 = vpack.c.b16 %v491, %v487
      %v564 = vpack.c.b16 %v492, %v488
      %v565 = vpack.c.b16 %v497, %v493
      %v566 = vpack.c.b16 %v498, %v494
      %v567 = vpack.c.b16 %v499, %v495
      %v568 = vpack.c.b16 %v500, %v496
      %v569 = vpack.c.b16 %v505, %v501
      %v570 = vpack.c.b16 %v506, %v502
      %v571 = vpack.c.b16 %v507, %v503
      %v572 = vpack.c.b16 %v508, %v504
      %v701 = vunpack.c.l.b16 %v253
      %v702 = vunpack.c.l.b16 %v254
      %v703 = vunpack.c.l.b16 %v255
      %v704 = vunpack.c.l.b16 %v256
      %v705 = vunpack.c.l.b16 %v257
      %v706 = vunpack.c.l.b16 %v258
      %v707 = vunpack.c.l.b16 %v259
      %v708 = vunpack.c.l.b16 %v260
      %v709 = vunpack.c.l.b16 %v261
      %v710 = vunpack.c.l.b16 %v262
      %v711 = vunpack.c.l.b16 %v263
      %v712 = vunpack.c.l.b16 %v264
      %v713 = vunpack.c.l.b16 %v265
      %v714 = vunpack.c.l.b16 %v266
      %v715 = vunpack.c.l.b16 %v267
      %v716 = vunpack.c.l.b16 %v268
      %v717 = vunpack.c.l.b16 %v269
      %v718 = vunpack.c.l.b16 %v270
      %v719 = vunpack.c.l.b16 %v271
      %v720 = vunpack.c.l.b16 %v272
      %v721 = vunpack.c.l.b16 %v273
      %v722 = vunpack.c.l.b16 %v274
      %v723 = vunpack.c.l.b16 %v275
      %v724 = vunpack.c.l.b16 %v276
      %v725 = vunpack.c.l.b16 %v277
      %v726 = vunpack.c.l.b16 %v278
      %v727 = vunpack.c.l.b16 %v279
      %v728 = vunpack.c.l.b16 %v280
      %v729 = vunpack.c.l.b16 %v281
      %v730 = vunpack.c.l.b16 %v282
      %v731 = vunpack.c.l.b16 %v283
      %v732 = vunpack.c.l.b16 %v284
      %v733 = vunpack.c.l.b16 %v285
      %v734 = vunpack.c.l.b16 %v286
      %v735 = vunpack.c.l.b16 %v287
      %v736 = vunpack.c.l.b16 %v288
      %v737 = vunpack.c.l.b16 %v289
      %v738 = vunpack.c.l.b16 %v290
      %v739 = vunpack.c.l.b16 %v291
      %v740 = vunpack.c.l.b16 %v292
      %v741 = vunpack.c.l.b16 %v293
      %v742 = vunpack.c.l.b16 %v294
      %v743 = vunpack.c.l.b16 %v295
      %v744 = vunpack.c.l.b16 %v296
      %v745 = vunpack.c.l.b16 %v297
      %v746 = vunpack.c.l.b16 %v298
      %v747 = vunpack.c.l.b16 %v299
      %v748 = vunpack.c.l.b16 %v300
      %v749 = vunpack.c.l.b16 %v301
      %v750 = vunpack.c.l.b16 %v302
      %v751 = vunpack.c.l.b16 %v303
      %v752 = vunpack.c.l.b16 %v304
      %v753 = vunpack.c.l.b16 %v305
      %v754 = vunpack.c.l.b16 %v306
      %v755 = vunpack.c.l.b16 %v307
      %v756 = vunpack.c.l.b16 %v308
      %v757 = vunpack.c.l.b16 %v309
      %v758 = vunpack.c.l.b16 %v310
      %v759 = vunpack.c.l.b16 %v311
      %v760 = vunpack.c.l.b16 %v312
      %v761 = vunpack.c.l.b16 %v313
      %v762 = vunpack.c.l.b16 %v314
      %v763 = vunpack.c.l.b16 %v315
      %v764 = vunpack.c.l.b16 %v316
      %v765 = vpack.c.b16 %v702, %v701
      %v766 = vpack.c.b16 %v704, %v703
      %v767 = vpack.c.b16 %v706, %v705
      %v768 = vpack.c.b16 %v708, %v707
      %v769 = vpack.c.b16 %v710, %v709
      %v770 = vpack.c.b16 %v712, %v711
      %v771 = vpack.c.b16 %v714, %v713
      %v772 = vpack.c.b16 %v716, %v715
      %v773 = vpack.c.b16 %v718, %v717
      %v774 = vpack.c.b16 %v720, %v719
      %v775 = vpack.c.b16 %v722, %v721
      %v776 = vpack.c.b16 %v724, %v723
      %v777 = vpack.c.b16 %v726, %v725
      %v778 = vpack.c.b16 %v728, %v727
      %v779 = vpack.c.b16 %v730, %v729
      %v780 = vpack.c.b16 %v732, %v731
      %v781 = vpack.c.b16 %v734, %v733
      %v782 = vpack.c.b16 %v736, %v735
      %v783 = vpack.c.b16 %v738, %v737
      %v784 = vpack.c.b16 %v740, %v739
      %v785 = vpack.c.b16 %v742, %v741
      %v786 = vpack.c.b16 %v744, %v743
      %v787 = vpack.c.b16 %v746, %v745
      %v788 = vpack.c.b16 %v748, %v747
      %v789 = vpack.c.b16 %v750, %v749
      %v790 = vpack.c.b16 %v752, %v751
      %v791 = vpack.c.b16 %v754, %v753
      %v792 = vpack.c.b16 %v756, %v755
      %v793 = vpack.c.b16 %v758, %v757
      %v794 = vpack.c.b16 %v760, %v759
      %v795 = vpack.c.b16 %v762, %v761
      %v796 = vpack.c.b16 %v764, %v763
      %829 = vmatprep.subr.bf16.mxu0 0
      %830 = vmatpush1.bf16.msra.mxu0 %v772
      %831 = vmatprep.subr.bf16.mxu0 0
      %832 = vmatpush1.bf16.msra.mxu0 %v771
      %833 = vmatprep.subr.bf16.mxu0 0
      %834 = vmatpush1.bf16.msra.mxu0 %v770
      %835 = vmatprep.subr.bf16.mxu0 0
      %836 = vmatpush1.bf16.msra.mxu0 %v769
      %837 = vmatprep.subr.bf16.mxu0 0
      %838 = vmatpush1.bf16.msra.mxu0 %v768
      %839 = vmatprep.subr.bf16.mxu0 0
      %840 = vmatpush1.bf16.msra.mxu0 %v767
      %841 = vmatprep.subr.bf16.mxu0 0
      %842 = vmatpush1.bf16.msra.mxu0 %v766
      %843 = vmatprep.subr.bf16.mxu0 0
      %844 = vmatpush1.bf16.msra.mxu0 %v765
      %845 = vmatprep.subr.bf16.mxu0 0
      %846 = vmatpush2.bf16.msra.mxu0 %v780
      %847 = vmatprep.subr.bf16.mxu0 0
      %848 = vmatpush2.bf16.msra.mxu0 %v779
      %849 = vmatprep.subr.bf16.mxu0 0
      %850 = vmatpush2.bf16.msra.mxu0 %v778
      %851 = vmatprep.subr.bf16.mxu0 0
      %852 = vmatpush2.bf16.msra.mxu0 %v777
      %853 = vmatprep.subr.bf16.mxu0 0
      %854 = vmatpush2.bf16.msra.mxu0 %v776
      %855 = vmatprep.subr.bf16.mxu0 0
      %856 = vmatpush2.bf16.msra.mxu0 %v775
      %857 = vmatprep.subr.bf16.mxu0 0
      %858 = vmatpush2.bf16.msra.mxu0 %v774
      %859 = vmatprep.subr.bf16.mxu0 0
      %860 = vmatpush2.bf16.msra.mxu0 %v773
      %861 = vmatprep.mubr.bf16.mxu0 %v510
      %862 = vmatmul.mubr.bf16.gmra.mxu0 %v509
      %v863 = vpop.f32.mrf.mxu0
      %v864 = vadd.f32 0.0, %v863
      %v865 = vpop.f32.mrf.mxu0
      %v866 = vpop.f32.mrf.mxu0
      %v867 = vadd.f32 0.0, %v866
      %v868 = vpop.f32.mrf.mxu0
      %869 = vmatprep.mubr.bf16.mxu0 %v514
      %870 = vmatmul.mubr.bf16.gmra.mxu0 %v513
      %v871 = vpop.f32.mrf.mxu0
      %v872 = vadd.f32 0.0, %v871
      %v873 = vpop.f32.mrf.mxu0
      %v874 = vpop.f32.mrf.mxu0
      %v875 = vadd.f32 0.0, %v874
      %v876 = vpop.f32.mrf.mxu0
      %877 = vmatprep.mubr.bf16.mxu0 %v518
      %878 = vmatmul.mubr.bf16.gmra.mxu0 %v517
      %v879 = vpop.f32.mrf.mxu0
      %v880 = vadd.f32 0.0, %v879
      %v881 = vpop.f32.mrf.mxu0
      %v882 = vpop.f32.mrf.mxu0
      %v883 = vadd.f32 0.0, %v882
      %v884 = vpop.f32.mrf.mxu0
      %885 = vmatprep.mubr.bf16.mxu0 %v522
      %886 = vmatmul.mubr.bf16.gmra.mxu0 %v521
      %v887 = vpop.f32.mrf.mxu0
      %v888 = vadd.f32 0.0, %v887
      %v889 = vpop.f32.mrf.mxu0
      %v890 = vpop.f32.mrf.mxu0
      %v891 = vadd.f32 0.0, %v890
      %v892 = vpop.f32.mrf.mxu0
      %893 = vmatprep.mubr.bf16.mxu0 %v526
      %894 = vmatmul.mubr.bf16.gmra.mxu0 %v525
      %v895 = vpop.f32.mrf.mxu0
      %v896 = vadd.f32 0.0, %v895
      %v897 = vpop.f32.mrf.mxu0
      %v898 = vpop.f32.mrf.mxu0
      %v899 = vadd.f32 0.0, %v898
      %v900 = vpop.f32.mrf.mxu0
      %901 = vmatprep.mubr.bf16.mxu0 %v530
      %902 = vmatmul.mubr.bf16.gmra.mxu0 %v529
      %v903 = vpop.f32.mrf.mxu0
      %v904 = vadd.f32 0.0, %v903
      %v905 = vpop.f32.mrf.mxu0
      %v906 = vpop.f32.mrf.mxu0
      %v907 = vadd.f32 0.0, %v906
      %v908 = vpop.f32.mrf.mxu0
      %909 = vmatprep.mubr.bf16.mxu0 %v534
      %910 = vmatmul.mubr.bf16.gmra.mxu0 %v533
      %v911 = vpop.f32.mrf.mxu0
      %v912 = vadd.f32 0.0, %v911
      %v913 = vpop.f32.mrf.mxu0
      %v914 = vpop.f32.mrf.mxu0
      %v915 = vadd.f32 0.0, %v914
      %v916 = vpop.f32.mrf.mxu0
      %917 = vmatprep.mubr.bf16.mxu0 %v538
      %918 = vmatmul.mubr.bf16.gmra.mxu0 %v537
      %v919 = vpop.f32.mrf.mxu0
      %v920 = vadd.f32 0.0, %v919
      %v921 = vpop.f32.mrf.mxu0
      %v922 = vpop.f32.mrf.mxu0
      %v923 = vadd.f32 0.0, %v922
      %v924 = vpop.f32.mrf.mxu0
      %925 = vmatprep.mubr.bf16.mxu0 %v542
      %926 = vmatmul.mubr.bf16.gmra.mxu0 %v541
      %v927 = vpop.f32.mrf.mxu0
      %v928 = vadd.f32 0.0, %v927
      %v929 = vpop.f32.mrf.mxu0
      %v930 = vpop.f32.mrf.mxu0
      %v931 = vadd.f32 0.0, %v930
      %v932 = vpop.f32.mrf.mxu0
      %933 = vmatprep.mubr.bf16.mxu0 %v546
      %934 = vmatmul.mubr.bf16.gmra.mxu0 %v545
      %v935 = vpop.f32.mrf.mxu0
      %v936 = vadd.f32 0.0, %v935
      %v937 = vpop.f32.mrf.mxu0
      %v938 = vpop.f32.mrf.mxu0
      %v939 = vadd.f32 0.0, %v938
      %v940 = vpop.f32.mrf.mxu0
      %941 = vmatprep.mubr.bf16.mxu0 %v550
      %942 = vmatmul.mubr.bf16.gmra.mxu0 %v549
      %v943 = vpop.f32.mrf.mxu0
      %v944 = vadd.f32 0.0, %v943
      %v945 = vpop.f32.mrf.mxu0
      %v946 = vpop.f32.mrf.mxu0
      %v947 = vadd.f32 0.0, %v946
      %v948 = vpop.f32.mrf.mxu0
      %949 = vmatprep.mubr.bf16.mxu0 %v554
      %950 = vmatmul.mubr.bf16.gmra.mxu0 %v553
      %v951 = vpop.f32.mrf.mxu0
      %v952 = vadd.f32 0.0, %v951
      %v953 = vpop.f32.mrf.mxu0
      %v954 = vpop.f32.mrf.mxu0
      %v955 = vadd.f32 0.0, %v954
      %v956 = vpop.f32.mrf.mxu0
      %957 = vmatprep.mubr.bf16.mxu0 %v558
      %958 = vmatmul.mubr.bf16.gmra.mxu0 %v557
      %v959 = vpop.f32.mrf.mxu0
      %v960 = vadd.f32 0.0, %v959
      %v961 = vpop.f32.mrf.mxu0
      %v962 = vpop.f32.mrf.mxu0
      %v963 = vadd.f32 0.0, %v962
      %v964 = vpop.f32.mrf.mxu0
      %965 = vmatprep.mubr.bf16.mxu0 %v562
      %966 = vmatmul.mubr.bf16.gmra.mxu0 %v561
      %v967 = vpop.f32.mrf.mxu0
      %v968 = vadd.f32 0.0, %v967
      %v969 = vpop.f32.mrf.mxu0
      %v970 = vpop.f32.mrf.mxu0
      %v971 = vadd.f32 0.0, %v970
      %v972 = vpop.f32.mrf.mxu0
      %973 = vmatprep.mubr.bf16.mxu0 %v566
      %974 = vmatmul.mubr.bf16.gmra.mxu0 %v565
      %v975 = vpop.f32.mrf.mxu0
      %v976 = vadd.f32 0.0, %v975
      %v977 = vpop.f32.mrf.mxu0
      %v978 = vpop.f32.mrf.mxu0
      %v979 = vadd.f32 0.0, %v978
      %v980 = vpop.f32.mrf.mxu0
      %981 = vmatprep.mubr.bf16.mxu0 %v570
      %982 = vmatmul.mubr.bf16.gmra.mxu0 %v569
      %v983 = vpop.f32.mrf.mxu0
      %v984 = vadd.f32 0.0, %v983
      %v985 = vpop.f32.mrf.mxu0
      %v986 = vpop.f32.mrf.mxu0
      %v987 = vadd.f32 0.0, %v986
      %v988 = vpop.f32.mrf.mxu0
      %989 = vdwg.mxu0
      %990 = vmatprep.subr.bf16.mxu0 0
      %991 = vmatpush1.bf16.msra.mxu0 %v788
      %992 = vmatprep.subr.bf16.mxu0 0
      %993 = vmatpush1.bf16.msra.mxu0 %v787
      %994 = vmatprep.subr.bf16.mxu0 0
      %995 = vmatpush1.bf16.msra.mxu0 %v786
      %996 = vmatprep.subr.bf16.mxu0 0
      %997 = vmatpush1.bf16.msra.mxu0 %v785
      %998 = vmatprep.subr.bf16.mxu0 0
      %999 = vmatpush1.bf16.msra.mxu0 %v784
      %1000 = vmatprep.subr.bf16.mxu0 0
      %1001 = vmatpush1.bf16.msra.mxu0 %v783
      %1002 = vmatprep.subr.bf16.mxu0 0
      %1003 = vmatpush1.bf16.msra.mxu0 %v782
      %1004 = vmatprep.subr.bf16.mxu0 0
      %1005 = vmatpush1.bf16.msra.mxu0 %v781
      %1006 = vmatprep.subr.bf16.mxu0 0
      %1007 = vmatpush2.bf16.msra.mxu0 %v796
      %1008 = vmatprep.subr.bf16.mxu0 0
      %1009 = vmatpush2.bf16.msra.mxu0 %v795
      %1010 = vmatprep.subr.bf16.mxu0 0
      %1011 = vmatpush2.bf16.msra.mxu0 %v794
      %1012 = vmatprep.subr.bf16.mxu0 0
      %1013 = vmatpush2.bf16.msra.mxu0 %v793
      %1014 = vmatprep.subr.bf16.mxu0 0
      %1015 = vmatpush2.bf16.msra.mxu0 %v792
      %1016 = vmatprep.subr.bf16.mxu0 0
      %1017 = vmatpush2.bf16.msra.mxu0 %v791
      %1018 = vmatprep.subr.bf16.mxu0 0
      %1019 = vmatpush2.bf16.msra.mxu0 %v790
      %1020 = vmatprep.subr.bf16.mxu0 0
      %1021 = vmatpush2.bf16.msra.mxu0 %v789
      %1022 = vmatprep.mubr.bf16.mxu0 %v512
      %1023 = vmatmul.mubr.bf16.gmra.mxu0 %v511
      %v1024 = vpop.f32.mrf.mxu0
      %v1025 = vadd.f32 %v864, %v1024
      %v1026 = vpop.f32.mrf.mxu0
      %v1027 = vpop.f32.mrf.mxu0
      %v1028 = vadd.f32 %v867, %v1027
      %v1029 = vpop.f32.mrf.mxu0
      %1030 = vmatprep.mubr.bf16.mxu0 %v516
      %1031 = vmatmul.mubr.bf16.gmra.mxu0 %v515
      %v1032 = vpop.f32.mrf.mxu0
      %v1033 = vadd.f32 %v872, %v1032
      %v1034 = vpop.f32.mrf.mxu0
      %v1035 = vpop.f32.mrf.mxu0
      %v1036 = vadd.f32 %v875, %v1035
      %v1037 = vpop.f32.mrf.mxu0
      %1038 = vmatprep.mubr.bf16.mxu0 %v520
      %1039 = vmatmul.mubr.bf16.gmra.mxu0 %v519
      %v1040 = vpop.f32.mrf.mxu0
      %v1041 = vadd.f32 %v880, %v1040
      %v1042 = vpop.f32.mrf.mxu0
      %v1043 = vpop.f32.mrf.mxu0
      %v1044 = vadd.f32 %v883, %v1043
      %v1045 = vpop.f32.mrf.mxu0
      %1046 = vmatprep.mubr.bf16.mxu0 %v524
      %1047 = vmatmul.mubr.bf16.gmra.mxu0 %v523
      %v1048 = vpop.f32.mrf.mxu0
      %v1049 = vadd.f32 %v888, %v1048
      %v1050 = vpop.f32.mrf.mxu0
      %v1051 = vpop.f32.mrf.mxu0
      %v1052 = vadd.f32 %v891, %v1051
      %v1053 = vpop.f32.mrf.mxu0
      %1054 = vmatprep.mubr.bf16.mxu0 %v528
      %1055 = vmatmul.mubr.bf16.gmra.mxu0 %v527
      %v1056 = vpop.f32.mrf.mxu0
      %v1057 = vadd.f32 %v896, %v1056
      %v1058 = vpop.f32.mrf.mxu0
      %v1059 = vpop.f32.mrf.mxu0
      %v1060 = vadd.f32 %v899, %v1059
      %v1061 = vpop.f32.mrf.mxu0
      %1062 = vmatprep.mubr.bf16.mxu0 %v532
      %1063 = vmatmul.mubr.bf16.gmra.mxu0 %v531
      %v1064 = vpop.f32.mrf.mxu0
      %v1065 = vadd.f32 %v904, %v1064
      %v1066 = vpop.f32.mrf.mxu0
      %v1067 = vpop.f32.mrf.mxu0
      %v1068 = vadd.f32 %v907, %v1067
      %v1069 = vpop.f32.mrf.mxu0
      %1070 = vmatprep.mubr.bf16.mxu0 %v536
      %1071 = vmatmul.mubr.bf16.gmra.mxu0 %v535
      %v1072 = vpop.f32.mrf.mxu0
      %v1073 = vadd.f32 %v912, %v1072
      %v1074 = vpop.f32.mrf.mxu0
      %v1075 = vpop.f32.mrf.mxu0
      %v1076 = vadd.f32 %v915, %v1075
      %v1077 = vpop.f32.mrf.mxu0
      %1078 = vmatprep.mubr.bf16.mxu0 %v540
      %1079 = vmatmul.mubr.bf16.gmra.mxu0 %v539
      %v1080 = vpop.f32.mrf.mxu0
      %v1081 = vadd.f32 %v920, %v1080
      %v1082 = vpop.f32.mrf.mxu0
      %v1083 = vpop.f32.mrf.mxu0
      %v1084 = vadd.f32 %v923, %v1083
      %v1085 = vpop.f32.mrf.mxu0
      %1086 = vmatprep.mubr.bf16.mxu0 %v544
      %1087 = vmatmul.mubr.bf16.gmra.mxu0 %v543
      %v1088 = vpop.f32.mrf.mxu0
      %v1089 = vadd.f32 %v928, %v1088
      %v1090 = vpop.f32.mrf.mxu0
      %v1091 = vpop.f32.mrf.mxu0
      %v1092 = vadd.f32 %v931, %v1091
      %v1093 = vpop.f32.mrf.mxu0
      %1094 = vmatprep.mubr.bf16.mxu0 %v548
      %1095 = vmatmul.mubr.bf16.gmra.mxu0 %v547
      %v1096 = vpop.f32.mrf.mxu0
      %v1097 = vadd.f32 %v936, %v1096
      %v1098 = vpop.f32.mrf.mxu0
      %v1099 = vpop.f32.mrf.mxu0
      %v1100 = vadd.f32 %v939, %v1099
      %v1101 = vpop.f32.mrf.mxu0
      %1102 = vmatprep.mubr.bf16.mxu0 %v552
      %1103 = vmatmul.mubr.bf16.gmra.mxu0 %v551
      %v1104 = vpop.f32.mrf.mxu0
      %v1105 = vadd.f32 %v944, %v1104
      %v1106 = vpop.f32.mrf.mxu0
      %v1107 = vpop.f32.mrf.mxu0
      %v1108 = vadd.f32 %v947, %v1107
      %v1109 = vpop.f32.mrf.mxu0
      %1110 = vmatprep.mubr.bf16.mxu0 %v556
      %1111 = vmatmul.mubr.bf16.gmra.mxu0 %v555
      %v1112 = vpop.f32.mrf.mxu0
      %v1113 = vadd.f32 %v952, %v1112
      %v1114 = vpop.f32.mrf.mxu0
      %v1115 = vpop.f32.mrf.mxu0
      %v1116 = vadd.f32 %v955, %v1115
      %v1117 = vpop.f32.mrf.mxu0
      %1118 = vmatprep.mubr.bf16.mxu0 %v560
      %1119 = vmatmul.mubr.bf16.gmra.mxu0 %v559
      %v1120 = vpop.f32.mrf.mxu0
      %v1121 = vadd.f32 %v960, %v1120
      %v1122 = vpop.f32.mrf.mxu0
      %v1123 = vpop.f32.mrf.mxu0
      %v1124 = vadd.f32 %v963, %v1123
      %v1125 = vpop.f32.mrf.mxu0
      %1126 = vmatprep.mubr.bf16.mxu0 %v564
      %1127 = vmatmul.mubr.bf16.gmra.mxu0 %v563
      %v1128 = vpop.f32.mrf.mxu0
      %v1129 = vadd.f32 %v968, %v1128
      %v1130 = vpop.f32.mrf.mxu0
      %v1131 = vpop.f32.mrf.mxu0
      %v1132 = vadd.f32 %v971, %v1131
      %v1133 = vpop.f32.mrf.mxu0
      %1134 = vmatprep.mubr.bf16.mxu0 %v568
      %1135 = vmatmul.mubr.bf16.gmra.mxu0 %v567
      %v1136 = vpop.f32.mrf.mxu0
      %v1137 = vadd.f32 %v976, %v1136
      %v1138 = vpop.f32.mrf.mxu0
      %v1139 = vpop.f32.mrf.mxu0
      %v1140 = vadd.f32 %v979, %v1139
      %v1141 = vpop.f32.mrf.mxu0
      %1142 = vmatprep.mubr.bf16.mxu0 %v572
      %1143 = vmatmul.mubr.bf16.gmra.mxu0 %v571
      %v1144 = vpop.f32.mrf.mxu0
      %v1145 = vadd.f32 %v984, %v1144
      %v1146 = vpop.f32.mrf.mxu0
      %v1147 = vpop.f32.mrf.mxu0
      %v1148 = vadd.f32 %v987, %v1147
      %v1149 = vpop.f32.mrf.mxu0
      %1150 = vdwg.mxu0
      %1151 = vst [vmem:[%s182] sm:$0xff] %v1025
      %1152 = vst [vmem:[%s182 + $0x8] sm:$0xff] %v1028
      %1153 = vst [vmem:[%s182 + $0x10] sm:$0xff] %v1033
      %1154 = vst [vmem:[%s182 + $0x18] sm:$0xff] %v1036
      %1155 = vst [vmem:[%s182 + $0x20] sm:$0xff] %v1041
      %1156 = vst [vmem:[%s182 + $0x28] sm:$0xff] %v1044
      %1157 = vst [vmem:[%s182 + $0x30] sm:$0xff] %v1049
      %1158 = vst [vmem:[%s182 + $0x38] sm:$0xff] %v1052
      %1159 = vst [vmem:[%s182 + $0x40] sm:$0xff] %v1057
      %1160 = vst [vmem:[%s182 + $0x48] sm:$0xff] %v1060
      %1161 = vst [vmem:[%s182 + $0x50] sm:$0xff] %v1065
      %1162 = vst [vmem:[%s182 + $0x58] sm:$0xff] %v1068
      %1163 = vst [vmem:[%s182 + $0x60] sm:$0xff] %v1073
      %1164 = vst [vmem:[%s182 + $0x68] sm:$0xff] %v1076
      %1165 = vst [vmem:[%s182 + $0x70] sm:$0xff] %v1081
      %1166 = vst [vmem:[%s182 + $0x78] sm:$0xff] %v1084
      %1167 = vst [vmem:[%s182 + $0x80] sm:$0xff] %v1089
      %1168 = vst [vmem:[%s182 + $0x88] sm:$0xff] %v1092
      %1169 = vst [vmem:[%s182 + $0x90] sm:$0xff] %v1097
      %1170 = vst [vmem:[%s182 + $0x98] sm:$0xff] %v1100
      %1171 = vst [vmem:[%s182 + $0xa0] sm:$0xff] %v1105
      %1172 = vst [vmem:[%s182 + $0xa8] sm:$0xff] %v1108
      %1173 = vst [vmem:[%s182 + $0xb0] sm:$0xff] %v1113
      %1174 = vst [vmem:[%s182 + $0xb8] sm:$0xff] %v1116
      %1175 = vst [vmem:[%s182 + $0xc0] sm:$0xff] %v1121
      %1176 = vst [vmem:[%s182 + $0xc8] sm:$0xff] %v1124
      %1177 = vst [vmem:[%s182 + $0xd0] sm:$0xff] %v1129
      %1178 = vst [vmem:[%s182 + $0xd8] sm:$0xff] %v1132
      %1179 = vst [vmem:[%s182 + $0xe0] sm:$0xff] %v1137
      %1180 = vst [vmem:[%s182 + $0xe8] sm:$0xff] %v1140
      %1181 = vst [vmem:[%s182 + $0xf0] sm:$0xff] %v1145
      %1182 = vst [vmem:[%s182 + $0xf8] sm:$0xff] %v1148
      %v1183 = vadd.f32 %v1025, %v1028
      %v1184 = vadd.f32 %v1183, %v1033
      %v1185 = vadd.f32 %v1184, %v1036
      %v1186 = vadd.f32 %v1185, %v1041
      %v1187 = vadd.f32 %v1186, %v1044
      %v1188 = vadd.f32 %v1187, %v1049
      %v1189 = vadd.f32 %v1188, %v1052
      %v1190 = vadd.f32 %v1189, %v1057
      %v1191 = vadd.f32 %v1190, %v1060
      %v1192 = vadd.f32 %v1191, %v1065
      %v1193 = vadd.f32 %v1192, %v1068
      %v1194 = vadd.f32 %v1193, %v1073
      %v1195 = vadd.f32 %v1194, %v1076
      %v1196 = vadd.f32 %v1195, %v1081
      %v1197 = vadd.f32 %v1196, %v1084
      %v1198 = vadd.f32 %v1197, %v1089
      %v1199 = vadd.f32 %v1198, %v1092
      %v1200 = vadd.f32 %v1199, %v1097
      %v1201 = vadd.f32 %v1200, %v1100
      %v1202 = vadd.f32 %v1201, %v1105
      %v1203 = vadd.f32 %v1202, %v1108
      %v1204 = vadd.f32 %v1203, %v1113
      %v1205 = vadd.f32 %v1204, %v1116
      %v1206 = vadd.f32 %v1205, %v1121
      %v1207 = vadd.f32 %v1206, %v1124
      %v1208 = vadd.f32 %v1207, %v1129
      %v1209 = vadd.f32 %v1208, %v1132
      %v1210 = vadd.f32 %v1209, %v1137
      %v1211 = vadd.f32 %v1210, %v1140
      %v1212 = vadd.f32 %v1211, %v1145
      %v1213 = vadd.f32 %v1212, %v1148
      %v1214 = vrot.slane %v1213, 4
      %v1215 = vadd.f32 %v1213, %v1214
      %v1216 = vrot.slane %v1215, 2
      %v1217 = vadd.f32 %v1215, %v1216
      %v1218 = vrot.slane %v1217, 1
      %v1219 = vadd.f32 %v1217, %v1218
      %v1220 = vmul.f32 %v1025, %v1025
      %v1221 = vmul.f32 %v1028, %v1028
      %v1222 = vmul.f32 %v1033, %v1033
      %v1223 = vmul.f32 %v1036, %v1036
      %v1224 = vmul.f32 %v1041, %v1041
      %v1225 = vmul.f32 %v1044, %v1044
      %v1226 = vmul.f32 %v1049, %v1049
      %v1227 = vmul.f32 %v1052, %v1052
      %v1228 = vmul.f32 %v1057, %v1057
      %v1229 = vmul.f32 %v1060, %v1060
      %v1230 = vmul.f32 %v1065, %v1065
      %v1231 = vmul.f32 %v1068, %v1068
      %v1232 = vmul.f32 %v1073, %v1073
      %v1233 = vmul.f32 %v1076, %v1076
      %v1234 = vmul.f32 %v1081, %v1081
      %v1235 = vmul.f32 %v1084, %v1084
      %v1236 = vmul.f32 %v1089, %v1089
      %v1237 = vmul.f32 %v1092, %v1092
      %v1238 = vmul.f32 %v1097, %v1097
      %v1239 = vmul.f32 %v1100, %v1100
      %v1240 = vmul.f32 %v1105, %v1105
      %v1241 = vmul.f32 %v1108, %v1108
      %v1242 = vmul.f32 %v1113, %v1113
      %v1243 = vmul.f32 %v1116, %v1116
      %v1244 = vmul.f32 %v1121, %v1121
      %v1245 = vmul.f32 %v1124, %v1124
      %v1246 = vmul.f32 %v1129, %v1129
      %v1247 = vmul.f32 %v1132, %v1132
      %v1248 = vmul.f32 %v1137, %v1137
      %v1249 = vmul.f32 %v1140, %v1140
      %v1250 = vmul.f32 %v1145, %v1145
      %v1251 = vmul.f32 %v1148, %v1148
      %v1252 = vadd.f32 %v1220, %v1221
      %v1253 = vadd.f32 %v1252, %v1222
      %v1254 = vadd.f32 %v1253, %v1223
      %v1255 = vadd.f32 %v1254, %v1224
      %v1256 = vadd.f32 %v1255, %v1225
      %v1257 = vadd.f32 %v1256, %v1226
      %v1258 = vadd.f32 %v1257, %v1227
      %v1259 = vadd.f32 %v1258, %v1228
      %v1260 = vadd.f32 %v1259, %v1229
      %v1261 = vadd.f32 %v1260, %v1230
      %v1262 = vadd.f32 %v1261, %v1231
      %v1263 = vadd.f32 %v1262, %v1232
      %v1264 = vadd.f32 %v1263, %v1233
      %v1265 = vadd.f32 %v1264, %v1234
      %v1266 = vadd.f32 %v1265, %v1235
      %v1267 = vadd.f32 %v1266, %v1236
      %v1268 = vadd.f32 %v1267, %v1237
      %v1269 = vadd.f32 %v1268, %v1238
      %v1270 = vadd.f32 %v1269, %v1239
      %v1271 = vadd.f32 %v1270, %v1240
      %v1272 = vadd.f32 %v1271, %v1241
      %v1273 = vadd.f32 %v1272, %v1242
      %v1274 = vadd.f32 %v1273, %v1243
      %v1275 = vadd.f32 %v1274, %v1244
      %v1276 = vadd.f32 %v1275, %v1245
      %v1277 = vadd.f32 %v1276, %v1246
      %v1278 = vadd.f32 %v1277, %v1247
      %v1279 = vadd.f32 %v1278, %v1248
      %v1280 = vadd.f32 %v1279, %v1249
      %v1281 = vadd.f32 %v1280, %v1250
      %v1282 = vadd.f32 %v1281, %v1251
      %v1283 = vrot.slane %v1282, 4
      %v1284 = vadd.f32 %v1282, %v1283
      %v1285 = vrot.slane %v1284, 2
      %v1286 = vadd.f32 %v1284, %v1285
      %v1287 = vrot.slane %v1286, 1
      %v1288 = vadd.f32 %v1286, %v1287
      %vm1289 = vcmask 1040384
      %v1290 = vsel %vm1289, %v1219, %v1288
      %1291 = vst [vmem:[%s187] sm:$0x3] %v1290
      %s1292 = smul.u32 32, %s15
      %p1293 = scmp.lt.s32.totalorder %s1292, 63
      %s1294 = scalar_select %p1293, %s1292, 63
      %s1295 = smul.addr %s1294, 8
      %s1296 = scalar_lea.vmem %s2, %s1295
      %p1297 = scmp.lt.s32.totalorder %s15, 1
      %s1298 = scalar_select %p1297, %s15, 1
      %s1299 = smul.addr %s1298, 2
      %s1300 = scalar_lea.vmem %s3, %s1299
      // Predicated region
      $region29: #{discriminator_forward.9} parent=27 // pred_check
        %p1301 = pneg %p80
      $region30: #{discriminator_forward.9} parent=27 // pred_check_branch
        %1303 = sbr.rel (%p1301) target = $region32
      $region31: #{discriminator_forward.9} parent=27 // pred_region
        %s1304 = smul.u32 32, %s15
      $region32: #{discriminator_forward.9} parent=27 // pred_fallthru
        _
      // Predicated region
      $region33: #{discriminator_forward.9} parent=27 // pred_check
        %p1305 = pneg %p106
      $region34: #{discriminator_forward.9} parent=27 // pred_check_branch
        %1307 = sbr.rel (%p1305) target = $region36
      $region35: #{discriminator_forward.9} parent=27 // pred_region
        _
      $region36: #{discriminator_forward.9} parent=27 // pred_fallthru
        _
    $region28: #{discriminator_forward.9} parent=5 // pred_fallthru
      _
    %p1308 = scmp.le.s32.totalorder 2, %s10
    // Predicated region
    $region37: #{discriminator_forward.9} parent=5 // pred_check
      %p1309 = pneg %p1308
    $region38: #{discriminator_forward.9} parent=5 // pred_check_branch
      %1311 = sbr.rel (%p1309) target = $region40
    $region39: #{discriminator_forward.9} parent=5 // pred_region
      %s1312 = ssub.s32 %s10, 2
      // Predicated region
      $region41: #{discriminator_forward.9} parent=39 // pred_check
        %p1313 = pneg %p86
      $region42: #{discriminator_forward.9} parent=39 // pred_check_branch
        %1315 = sbr.rel (%p1313) target = $region44
      $region43: #{discriminator_forward.9} parent=39 // pred_region
        %s1316 = smul.u32 32, %s16
        %p1317 = scmp.lt.s32.totalorder %s1316, 63
        %s1318 = scalar_select %p1317, %s1316, 63
        %s1319 = smul.addr %s1318, 8
        %s1320 = scalar_lea.vmem %s2, %s1319
      $region44: #{discriminator_forward.9} parent=39 // pred_fallthru
        _
      // Predicated region
      $region45: #{discriminator_forward.9} parent=39 // pred_check
        %p1321 = pneg %p112
      $region46: #{discriminator_forward.9} parent=39 // pred_check_branch
        %1323 = sbr.rel (%p1321) target = $region48
      $region47: #{discriminator_forward.9} parent=39 // pred_region
        %p1324 = scmp.lt.s32.totalorder %s16, 1
        %s1325 = scalar_select %p1324, %s16, 1
        %s1326 = smul.addr %s1325, 2
        %s1327 = scalar_lea.vmem %s3, %s1326
      $region48: #{discriminator_forward.9} parent=39 // pred_fallthru
        _
    $region40: #{discriminator_forward.9} parent=5 // pred_fallthru
      _
  $region6: #{discriminator_forward.9} parent=0 // loop_footer
    %s14 = sadd.s32 1, %s10
  $region7: #{discriminator_forward.9} parent=0 // loop_footer_branch
    %9 = sbr.rel target = $region3
  $region8: #{discriminator_forward.9} parent=0 // loop_exit
    _

// kernel: discriminator_forward.10
$region0: #{discriminator_forward.10}
  #allocation0 [shape = 'u32[]', space=smem, size = 0x4, offset = 0x4, fixed_abs, tag = 'smem constant byte address 0x4 - core index']
  #allocation1 [shape = 'u32[144,128]{1,0:T(1,128)}', space=vmem, size = 0x12000, scoped, tag = 'internal scratch']
  %s0 = inlined_call_operand.vmem [shape: f32[512,128], index: 0, kind: input, shape index: {}]
  %s1 = inlined_call_operand.vmem [shape: f32[1,128], index: 1, kind: input, shape index: {}]
  %s2 = inlined_call_operand.vmem [shape: f32[1,128], index: 2, kind: input, shape index: {}]
  %s3 = inlined_call_operand.vmem [shape: bf16[512,128], index: 3, kind: output, shape index: {}]
  %s4 = sld [smem:[#allocation0]]
  $region45: #{discriminator_forward.10} parent=0
    _
  %s6 = ssub.s32 1, %s4
  %s7 = scalar_select 0, %s6, %s4
  loop: start=0, step=1, limit=4
  $region2: #{discriminator_forward.10} parent=0 // loop_pre_header
    _
  $region3: #{discriminator_forward.10} parent=0 // loop_header
    %s9 = sphi 0, %s13
    %p10 = scmp.ge.s32.totalorder %s9, 4
    %s19 = sphi 0, %s21
    %s22 = sphi 0, %s19
    %s23 = sphi 0, %s22
    %s39 = sphi 0, %s23
    %s43 = sphi 0, %s43
    %s45 = sphi 0, %s43
    %s46 = sphi 0, %s45
    %s60 = sphi 0, %s46
    %s64 = sphi 0, %s64
    %s66 = sphi 0, %s64
    %s67 = sphi 0, %s66
    %s81 = sphi 0, %s67
    %s87 = sphi 0, %s89
    %s90 = sphi 0, %s87
    %s91 = sphi 0, %s90
    %s107 = sphi 0, %s91
  $region4: #{discriminator_forward.10} parent=0 // loop_header_branch
    %12 = sbr.rel (%p10) target = $region8
  $region5: #{discriminator_forward.10} parent=0 // loop_body
    %s14 = ssub.s32 %s9, 1
    %s15 = ssub.s32 %s9, 2
    %s16 = sadd.s32 %s9, 1
    %s17 = ssub.s32 %s9, %s16
    %p18 = scmp.eq.s32.totalorder %s17, 0
    %s20 = sadd.s32 %s19, 1
    %s21 = scalar_select %p18, %s19, %s20
    %p24 = pneg %p18
    %p25 = scmp.eq.s32.totalorder %s9, 1
    %p26 = por %p24, %p25
    %p27 = scmp.ne.s32.totalorder %s19, %s22
    %p28 = scmp.eq.s32.totalorder %s9, 0
    %p29 = por %p27, %p28
    %p30 = scmp.ne.s32.totalorder %s19, %s22
    %p31 = scmp.eq.s32.totalorder %s14, 1
    %p32 = por %p30, %p31
    %p33 = scmp.ne.s32.totalorder %s22, %s23
    %p34 = scmp.eq.s32.totalorder %s14, 0
    %p35 = por %p33, %p34
    %p36 = scmp.ne.s32.totalorder %s22, %s23
    %p37 = scmp.eq.s32.totalorder %s15, 1
    %p38 = por %p36, %p37
    %p40 = scmp.ne.s32.totalorder %s23, %s39
    %p41 = scmp.eq.s32.totalorder %s15, 0
    %p42 = por %p40, %p41
    %s44 = sadd.s32 %s43, 1
    %p47 = scmp.eq.s32.totalorder %s9, 1
    %p48 = scmp.ne.s32.totalorder %s43, %s45
    %p49 = scmp.eq.s32.totalorder %s9, 0
    %p50 = por %p48, %p49
    %p51 = scmp.ne.s32.totalorder %s43, %s45
    %p52 = scmp.eq.s32.totalorder %s14, 1
    %p53 = por %p51, %p52
    %p54 = scmp.ne.s32.totalorder %s45, %s46
    %p55 = scmp.eq.s32.totalorder %s14, 0
    %p56 = por %p54, %p55
    %p57 = scmp.ne.s32.totalorder %s45, %s46
    %p58 = scmp.eq.s32.totalorder %s15, 1
    %p59 = por %p57, %p58
    %p61 = scmp.ne.s32.totalorder %s46, %s60
    %p62 = scmp.eq.s32.totalorder %s15, 0
    %p63 = por %p61, %p62
    %s65 = sadd.s32 %s64, 1
    %p68 = scmp.eq.s32.totalorder %s9, 1
    %p69 = scmp.ne.s32.totalorder %s64, %s66
    %p70 = scmp.eq.s32.totalorder %s9, 0
    %p71 = por %p69, %p70
    %p72 = scmp.ne.s32.totalorder %s64, %s66
    %p73 = scmp.eq.s32.totalorder %s14, 1
    %p74 = por %p72, %p73
    %p75 = scmp.ne.s32.totalorder %s66, %s67
    %p76 = scmp.eq.s32.totalorder %s14, 0
    %p77 = por %p75, %p76
    %p78 = scmp.ne.s32.totalorder %s66, %s67
    %p79 = scmp.eq.s32.totalorder %s15, 1
    %p80 = por %p78, %p79
    %p82 = scmp.ne.s32.totalorder %s67, %s81
    %p83 = scmp.eq.s32.totalorder %s15, 0
    %p84 = por %p82, %p83
    %s85 = ssub.s32 %s9, %s16
    %p86 = scmp.eq.s32.totalorder %s85, 0
    %s88 = sadd.s32 %s87, 1
    %s89 = scalar_select %p86, %s87, %s88
    %p92 = pneg %p86
    %p93 = scmp.eq.s32.totalorder %s9, 1
    %p94 = por %p92, %p93
    %p95 = scmp.ne.s32.totalorder %s87, %s90
    %p96 = scmp.eq.s32.totalorder %s9, 0
    %p97 = por %p95, %p96
    %p98 = scmp.ne.s32.totalorder %s87, %s90
    %p99 = scmp.eq.s32.totalorder %s14, 1
    %p100 = por %p98, %p99
    %p101 = scmp.ne.s32.totalorder %s90, %s91
    %p102 = scmp.eq.s32.totalorder %s14, 0
    %p103 = por %p101, %p102
    %p104 = scmp.ne.s32.totalorder %s90, %s91
    %p105 = scmp.eq.s32.totalorder %s15, 1
    %p106 = por %p104, %p105
    %p108 = scmp.ne.s32.totalorder %s91, %s107
    %p109 = scmp.eq.s32.totalorder %s15, 0
    %p110 = por %p108, %p109
    %p111 = scmp.le.s32.totalorder 1, %s9
    %p112 = scmp.lt.s32.totalorder %s9, 3
    %p113 = pnand %p111, %p112
    %p114 = pneg %p113
    // Predicated region
    $region9: #{discriminator_forward.10} parent=5 // pred_check
      _
    $region10: #{discriminator_forward.10} parent=5 // pred_check_branch
      %116 = sbr.rel (%p113) target = $region12
    $region11: #{discriminator_forward.10} parent=5 // pred_region
      %s117 = ssub.s32 %s9, 1
      // Predicated region
      $region13: #{discriminator_forward.10} parent=11 // pred_check
        %p118 = pneg %p56
      $region14: #{discriminator_forward.10} parent=11 // pred_check_branch
        %120 = sbr.rel (%p118) target = $region16
      $region15: #{discriminator_forward.10} parent=11 // pred_region
        _
      $region16: #{discriminator_forward.10} parent=11 // pred_fallthru
        _
      // Predicated region
      $region17: #{discriminator_forward.10} parent=11 // pred_check
        %p121 = pneg %p77
      $region18: #{discriminator_forward.10} parent=11 // pred_check_branch
        %123 = sbr.rel (%p121) target = $region20
      $region19: #{discriminator_forward.10} parent=11 // pred_region
        _
      $region20: #{discriminator_forward.10} parent=11 // pred_fallthru
        _
    $region12: #{discriminator_forward.10} parent=5 // pred_fallthru
      _
    %p124 = scmp.lt.s32.totalorder %s9, 2
    // Predicated region
    $region21: #{discriminator_forward.10} parent=5 // pred_check
      %p125 = pneg %p124
    $region22: #{discriminator_forward.10} parent=5 // pred_check_branch
      %127 = sbr.rel (%p125) target = $region24
    $region23: #{discriminator_forward.10} parent=5 // pred_region
      // Predicated region
      $region25: #{discriminator_forward.10} parent=23 // pred_check
        %p128 = pneg %p29
      $region26: #{discriminator_forward.10} parent=23 // pred_check_branch
        %130 = sbr.rel (%p128) target = $region28
      $region27: #{discriminator_forward.10} parent=23 // pred_region
        %s131 = smul.u32 32, %s9
        %p132 = scmp.lt.s32.totalorder %s131, 63
        %s133 = scalar_select %p132, %s131, 63
        %s134 = smul.addr %s133, 8
        %s135 = scalar_lea.vmem %s0, %s134
        %s136 = smul.u32 32, %s9
      $region28: #{discriminator_forward.10} parent=23 // pred_fallthru
        _
    $region24: #{discriminator_forward.10} parent=5 // pred_fallthru
      _
    %p137 = scmp.le.s32.totalorder 1, %s9
    %p138 = scmp.lt.s32.totalorder %s9, 3
    %p139 = pnand %p137, %p138
    %p140 = pneg %p139
    // Predicated region
    $region29: #{discriminator_forward.10} parent=5 // pred_check
      _
    $region30: #{discriminator_forward.10} parent=5 // pred_check_branch
      %142 = sbr.rel (%p139) target = $region32
    $region31: #{discriminator_forward.10} parent=5 // pred_region
      %s143 = ssub.s32 %s9, 1
      %s144 = smul.u32 32, %s14
      %p145 = scmp.lt.s32.totalorder %s144, 63
      %s146 = scalar_select %p145, %s144, 63
      %s147 = smul.addr %s146, 8
      %s148 = scalar_lea.vmem %s0, %s147
      %p149 = pneg %p35
      %p150 = pneg %p32
      %p151 = pneg %p56
      %p152 = pneg %p53
      %p153 = pneg %p77
      %p154 = pneg %p74
      %p155 = pneg %p103
      %p156 = pneg %p100
      %s157 = smul.u32 32, %s14
      %p158 = scmp.lt.s32.totalorder %s157, 63
      %s159 = scalar_select %p158, %s157, 63
      %s160 = smul.addr %s159, 4
      %s161 = scalar_lea.vmem %s3, %s160
      %s162 = smul.u32 32, %s14
      %p163 = scmp.lt.s32.totalorder %s162, 63
      %s164 = scalar_select %p163, %s162, 63
      %s165 = smul.addr %s164, 8
      %s166 = scalar_lea.vmem %s0, %s165
      %s167 = smul.u32 32, %s14
      %s168 = smul.u32 32, %s14
      %p169 = scmp.lt.s32.totalorder %s168, 63
      %s170 = scalar_select %p169, %s168, 63
      %s171 = smul.addr %s170, 4
      %s172 = scalar_lea.vmem %s3, %s171
      %s173 = smul.u32 32, %s14
      %v174 = vld [vmem:[%s166] sm:$0xff]
      %v175 = vld [vmem:[%s166 + $0x8] sm:$0xff]
      %v176 = vld [vmem:[%s166 + $0x10] sm:$0xff]
      %v177 = vld [vmem:[%s166 + $0x18] sm:$0xff]
      %v178 = vld [vmem:[%s166 + $0x20] sm:$0xff]
      %v179 = vld [vmem:[%s166 + $0x28] sm:$0xff]
      %v180 = vld [vmem:[%s166 + $0x30] sm:$0xff]
      %v181 = vld [vmem:[%s166 + $0x38] sm:$0xff]
      %v182 = vld [vmem:[%s166 + $0x40] sm:$0xff]
      %v183 = vld [vmem:[%s166 + $0x48] sm:$0xff]
      %v184 = vld [vmem:[%s166 + $0x50] sm:$0xff]
      %v185 = vld [vmem:[%s166 + $0x58] sm:$0xff]
      %v186 = vld [vmem:[%s166 + $0x60] sm:$0xff]
      %v187 = vld [vmem:[%s166 + $0x68] sm:$0xff]
      %v188 = vld [vmem:[%s166 + $0x70] sm:$0xff]
      %v189 = vld [vmem:[%s166 + $0x78] sm:$0xff]
      %v190 = vld [vmem:[%s166 + $0x80] sm:$0xff]
      %v191 = vld [vmem:[%s166 + $0x88] sm:$0xff]
      %v192 = vld [vmem:[%s166 + $0x90] sm:$0xff]
      %v193 = vld [vmem:[%s166 + $0x98] sm:$0xff]
      %v194 = vld [vmem:[%s166 + $0xa0] sm:$0xff]
      %v195 = vld [vmem:[%s166 + $0xa8] sm:$0xff]
      %v196 = vld [vmem:[%s166 + $0xb0] sm:$0xff]
      %v197 = vld [vmem:[%s166 + $0xb8] sm:$0xff]
      %v198 = vld [vmem:[%s166 + $0xc0] sm:$0xff]
      %v199 = vld [vmem:[%s166 + $0xc8] sm:$0xff]
      %v200 = vld [vmem:[%s166 + $0xd0] sm:$0xff]
      %v201 = vld [vmem:[%s166 + $0xd8] sm:$0xff]
      %v202 = vld [vmem:[%s166 + $0xe0] sm:$0xff]
      %v203 = vld [vmem:[%s166 + $0xe8] sm:$0xff]
      %v204 = vld [vmem:[%s166 + $0xf0] sm:$0xff]
      %v205 = vld [vmem:[%s166 + $0xf8] sm:$0xff]
      %v206 = vld [vmem:[%s1] sm:$0x1]
      %v208 = vlaneseq
      %v209 = vshrl.u32 %v208, 7
      %v210 = vsub.s32 0, %v209
      %v211 = vrot.slane %v206, %v210
      %v213 = vmul.f32 %v174, %v211
      %v214 = vmul.f32 %v175, %v211
      %v215 = vmul.f32 %v176, %v211
      %v216 = vmul.f32 %v177, %v211
      %v217 = vmul.f32 %v178, %v211
      %v218 = vmul.f32 %v179, %v211
      %v219 = vmul.f32 %v180, %v211
      %v220 = vmul.f32 %v181, %v211
      %v221 = vmul.f32 %v182, %v211
      %v222 = vmul.f32 %v183, %v211
      %v223 = vmul.f32 %v184, %v211
      %v224 = vmul.f32 %v185, %v211
      %v225 = vmul.f32 %v186, %v211
      %v226 = vmul.f32 %v187, %v211
      %v227 = vmul.f32 %v188, %v211
      %v228 = vmul.f32 %v189, %v211
      %v229 = vmul.f32 %v190, %v211
      %v230 = vmul.f32 %v191, %v211
      %v231 = vmul.f32 %v192, %v211
      %v232 = vmul.f32 %v193, %v211
      %v233 = vmul.f32 %v194, %v211
      %v234 = vmul.f32 %v195, %v211
      %v235 = vmul.f32 %v196, %v211
      %v236 = vmul.f32 %v197, %v211
      %v237 = vmul.f32 %v198, %v211
      %v238 = vmul.f32 %v199, %v211
      %v239 = vmul.f32 %v200, %v211
      %v240 = vmul.f32 %v201, %v211
      %v241 = vmul.f32 %v202, %v211
      %v242 = vmul.f32 %v203, %v211
      %v243 = vmul.f32 %v204, %v211
      %v244 = vmul.f32 %v205, %v211
      %v245 = vld [vmem:[%s2] sm:$0x1]
      %v247 = vlaneseq
      %v248 = vshrl.u32 %v247, 7
      %v249 = vsub.s32 0, %v248
      %v250 = vrot.slane %v245, %v249
      %v252 = vadd.f32 %v213, %v250
      %v253 = vadd.f32 %v214, %v250
      %v254 = vadd.f32 %v215, %v250
      %v255 = vadd.f32 %v216, %v250
      %v256 = vadd.f32 %v217, %v250
      %v257 = vadd.f32 %v218, %v250
      %v258 = vadd.f32 %v219, %v250
      %v259 = vadd.f32 %v220, %v250
      %v260 = vadd.f32 %v221, %v250
      %v261 = vadd.f32 %v222, %v250
      %v262 = vadd.f32 %v223, %v250
      %v263 = vadd.f32 %v224, %v250
      %v264 = vadd.f32 %v225, %v250
      %v265 = vadd.f32 %v226, %v250
      %v266 = vadd.f32 %v227, %v250
      %v267 = vadd.f32 %v228, %v250
      %v268 = vadd.f32 %v229, %v250
      %v269 = vadd.f32 %v230, %v250
      %v270 = vadd.f32 %v231, %v250
      %v271 = vadd.f32 %v232, %v250
      %v272 = vadd.f32 %v233, %v250
      %v273 = vadd.f32 %v234, %v250
      %v274 = vadd.f32 %v235, %v250
      %v275 = vadd.f32 %v236, %v250
      %v276 = vadd.f32 %v237, %v250
      %v277 = vadd.f32 %v238, %v250
      %v278 = vadd.f32 %v239, %v250
      %v279 = vadd.f32 %v240, %v250
      %v280 = vadd.f32 %v241, %v250
      %v281 = vadd.f32 %v242, %v250
      %v282 = vadd.f32 %v243, %v250
      %v283 = vadd.f32 %v244, %v250
      %vm284 = vcmp.ge.f32.partialorder %v252, 0.0
      %vm285 = vcmp.ge.f32.partialorder %v253, 0.0
      %vm286 = vcmp.ge.f32.partialorder %v254, 0.0
      %vm287 = vcmp.ge.f32.partialorder %v255, 0.0
      %vm288 = vcmp.ge.f32.partialorder %v256, 0.0
      %vm289 = vcmp.ge.f32.partialorder %v257, 0.0
      %vm290 = vcmp.ge.f32.partialorder %v258, 0.0
      %vm291 = vcmp.ge.f32.partialorder %v259, 0.0
      %vm292 = vcmp.ge.f32.partialorder %v260, 0.0
      %vm293 = vcmp.ge.f32.partialorder %v261, 0.0
      %vm294 = vcmp.ge.f32.partialorder %v262, 0.0
      %vm295 = vcmp.ge.f32.partialorder %v263, 0.0
      %vm296 = vcmp.ge.f32.partialorder %v264, 0.0
      %vm297 = vcmp.ge.f32.partialorder %v265, 0.0
      %vm298 = vcmp.ge.f32.partialorder %v266, 0.0
      %vm299 = vcmp.ge.f32.partialorder %v267, 0.0
      %vm300 = vcmp.ge.f32.partialorder %v268, 0.0
      %vm301 = vcmp.ge.f32.partialorder %v269, 0.0
      %vm302 = vcmp.ge.f32.partialorder %v270, 0.0
      %vm303 = vcmp.ge.f32.partialorder %v271, 0.0
      %vm304 = vcmp.ge.f32.partialorder %v272, 0.0
      %vm305 = vcmp.ge.f32.partialorder %v273, 0.0
      %vm306 = vcmp.ge.f32.partialorder %v274, 0.0
      %vm307 = vcmp.ge.f32.partialorder %v275, 0.0
      %vm308 = vcmp.ge.f32.partialorder %v276, 0.0
      %vm309 = vcmp.ge.f32.partialorder %v277, 0.0
      %vm310 = vcmp.ge.f32.partialorder %v278, 0.0
      %vm311 = vcmp.ge.f32.partialorder %v279, 0.0
      %vm312 = vcmp.ge.f32.partialorder %v280, 0.0
      %vm313 = vcmp.ge.f32.partialorder %v281, 0.0
      %vm314 = vcmp.ge.f32.partialorder %v282, 0.0
      %vm315 = vcmp.ge.f32.partialorder %v283, 0.0
      %v316 = vmul.f32 %v252, 0.2
      %v317 = vmul.f32 %v253, 0.2
      %v318 = vmul.f32 %v254, 0.2
      %v319 = vmul.f32 %v255, 0.2
      %v320 = vmul.f32 %v256, 0.2
      %v321 = vmul.f32 %v257, 0.2
      %v322 = vmul.f32 %v258, 0.2
      %v323 = vmul.f32 %v259, 0.2
      %v324 = vmul.f32 %v260, 0.2
      %v325 = vmul.f32 %v261, 0.2
      %v326 = vmul.f32 %v262, 0.2
      %v327 = vmul.f32 %v263, 0.2
      %v328 = vmul.f32 %v264, 0.2
      %v329 = vmul.f32 %v265, 0.2
      %v330 = vmul.f32 %v266, 0.2
      %v331 = vmul.f32 %v267, 0.2
      %v332 = vmul.f32 %v268, 0.2
      %v333 = vmul.f32 %v269, 0.2
      %v334 = vmul.f32 %v270, 0.2
      %v335 = vmul.f32 %v271, 0.2
      %v336 = vmul.f32 %v272, 0.2
      %v337 = vmul.f32 %v273, 0.2
      %v338 = vmul.f32 %v274, 0.2
      %v339 = vmul.f32 %v275, 0.2
      %v340 = vmul.f32 %v276, 0.2
      %v341 = vmul.f32 %v277, 0.2
      %v342 = vmul.f32 %v278, 0.2
      %v343 = vmul.f32 %v279, 0.2
      %v344 = vmul.f32 %v280, 0.2
      %v345 = vmul.f32 %v281, 0.2
      %v346 = vmul.f32 %v282, 0.2
      %v347 = vmul.f32 %v283, 0.2
      %v348 = vsel %vm284, %v252, %v316
      %v349 = vsel %vm285, %v253, %v317
      %v350 = vsel %vm286, %v254, %v318
      %v351 = vsel %vm287, %v255, %v319
      %v352 = vsel %vm288, %v256, %v320
      %v353 = vsel %vm289, %v257, %v321
      %v354 = vsel %vm290, %v258, %v322
      %v355 = vsel %vm291, %v259, %v323
      %v356 = vsel %vm292, %v260, %v324
      %v357 = vsel %vm293, %v261, %v325
      %v358 = vsel %vm294, %v262, %v326
      %v359 = vsel %vm295, %v263, %v327
      %v360 = vsel %vm296, %v264, %v328
      %v361 = vsel %vm297, %v265, %v329
      %v362 = vsel %vm298, %v266, %v330
      %v363 = vsel %vm299, %v267, %v331
      %v364 = vsel %vm300, %v268, %v332
      %v365 = vsel %vm301, %v269, %v333
      %v366 = vsel %vm302, %v270, %v334
      %v367 = vsel %vm303, %v271, %v335
      %v368 = vsel %vm304, %v272, %v336
      %v369 = vsel %vm305, %v273, %v337
      %v370 = vsel %vm306, %v274, %v338
      %v371 = vsel %vm307, %v275, %v339
      %v372 = vsel %vm308, %v276, %v340
      %v373 = vsel %vm309, %v277, %v341
      %v374 = vsel %vm310, %v278, %v342
      %v375 = vsel %vm311, %v279, %v343
      %v376 = vsel %vm312, %v280, %v344
      %v377 = vsel %vm313, %v281, %v345
      %v378 = vsel %vm314, %v282, %v346
      %v379 = vsel %vm315, %v283, %v347
      %v380 = vpack.c.bf16 %v349, %v348
      %v381 = vpack.c.bf16 %v351, %v350
      %v382 = vpack.c.bf16 %v353, %v352
      %v383 = vpack.c.bf16 %v355, %v354
      %v384 = vpack.c.bf16 %v357, %v356
      %v385 = vpack.c.bf16 %v359, %v358
      %v386 = vpack.c.bf16 %v361, %v360
      %v387 = vpack.c.bf16 %v363, %v362
      %v388 = vpack.c.bf16 %v365, %v364
      %v389 = vpack.c.bf16 %v367, %v366
      %v390 = vpack.c.bf16 %v369, %v368
      %v391 = vpack.c.bf16 %v371, %v370
      %v392 = vpack.c.bf16 %v373, %v372
      %v393 = vpack.c.bf16 %v375, %v374
      %v394 = vpack.c.bf16 %v377, %v376
      %v395 = vpack.c.bf16 %v379, %v378
      %v412 = vunpack.c.l.b16 %v380
      %v413 = vunpack.c.h.b16 %v380
      %v414 = vunpack.c.l.b16 %v381
      %v415 = vunpack.c.h.b16 %v381
      %v416 = vunpack.c.l.b16 %v382
      %v417 = vunpack.c.h.b16 %v382
      %v418 = vunpack.c.l.b16 %v383
      %v419 = vunpack.c.h.b16 %v383
      %v420 = vunpack.c.l.b16 %v384
      %v421 = vunpack.c.h.b16 %v384
      %v422 = vunpack.c.l.b16 %v385
      %v423 = vunpack.c.h.b16 %v385
      %v424 = vunpack.c.l.b16 %v386
      %v425 = vunpack.c.h.b16 %v386
      %v426 = vunpack.c.l.b16 %v387
      %v427 = vunpack.c.h.b16 %v387
      %v428 = vunpack.c.l.b16 %v388
      %v429 = vunpack.c.h.b16 %v388
      %v430 = vunpack.c.l.b16 %v389
      %v431 = vunpack.c.h.b16 %v389
      %v432 = vunpack.c.l.b16 %v390
      %v433 = vunpack.c.h.b16 %v390
      %v434 = vunpack.c.l.b16 %v391
      %v435 = vunpack.c.h.b16 %v391
      %v436 = vunpack.c.l.b16 %v392
      %v437 = vunpack.c.h.b16 %v392
      %v438 = vunpack.c.l.b16 %v393
      %v439 = vunpack.c.h.b16 %v393
      %v440 = vunpack.c.l.b16 %v394
      %v441 = vunpack.c.h.b16 %v394
      %v442 = vunpack.c.l.b16 %v395
      %v443 = vunpack.c.h.b16 %v395
      %v444 = vpack.c.b16 %v412, %v412
      %v445 = vpack.c.b16 %v413, %v413
      %v446 = vpack.c.b16 %v414, %v414
      %v447 = vpack.c.b16 %v415, %v415
      %v448 = vpack.c.b16 %v416, %v416
      %v449 = vpack.c.b16 %v417, %v417
      %v450 = vpack.c.b16 %v418, %v418
      %v451 = vpack.c.b16 %v419, %v419
      %v452 = vpack.c.b16 %v420, %v420
      %v453 = vpack.c.b16 %v421, %v421
      %v454 = vpack.c.b16 %v422, %v422
      %v455 = vpack.c.b16 %v423, %v423
      %v456 = vpack.c.b16 %v424, %v424
      %v457 = vpack.c.b16 %v425, %v425
      %v458 = vpack.c.b16 %v426, %v426
      %v459 = vpack.c.b16 %v427, %v427
      %v460 = vpack.c.b16 %v428, %v428
      %v461 = vpack.c.b16 %v429, %v429
      %v462 = vpack.c.b16 %v430, %v430
      %v463 = vpack.c.b16 %v431, %v431
      %v464 = vpack.c.b16 %v432, %v432
      %v465 = vpack.c.b16 %v433, %v433
      %v466 = vpack.c.b16 %v434, %v434
      %v467 = vpack.c.b16 %v435, %v435
      %v468 = vpack.c.b16 %v436, %v436
      %v469 = vpack.c.b16 %v437, %v437
      %v470 = vpack.c.b16 %v438, %v438
      %v471 = vpack.c.b16 %v439, %v439
      %v472 = vpack.c.b16 %v440, %v440
      %v473 = vpack.c.b16 %v441, %v441
      %v474 = vpack.c.b16 %v442, %v442
      %v475 = vpack.c.b16 %v443, %v443
      %508 = vst [vmem:[%s172] sm:$0xf] %v444
      %509 = vst [vmem:[%s172 + $0x4] sm:$0xf] %v445
      %510 = vst [vmem:[%s172 + $0x8] sm:$0xf] %v446
      %511 = vst [vmem:[%s172 + $0xc] sm:$0xf] %v447
      %512 = vst [vmem:[%s172 + $0x10] sm:$0xf] %v448
      %513 = vst [vmem:[%s172 + $0x14] sm:$0xf] %v449
      %514 = vst [vmem:[%s172 + $0x18] sm:$0xf] %v450
      %515 = vst [vmem:[%s172 + $0x1c] sm:$0xf] %v451
      %516 = vst [vmem:[%s172 + $0x20] sm:$0xf] %v452
      %517 = vst [vmem:[%s172 + $0x24] sm:$0xf] %v453
      %518 = vst [vmem:[%s172 + $0x28] sm:$0xf] %v454
      %519 = vst [vmem:[%s172 + $0x2c] sm:$0xf] %v455
      %520 = vst [vmem:[%s172 + $0x30] sm:$0xf] %v456
      %521 = vst [vmem:[%s172 + $0x34] sm:$0xf] %v457
      %522 = vst [vmem:[%s172 + $0x38] sm:$0xf] %v458
      %523 = vst [vmem:[%s172 + $0x3c] sm:$0xf] %v459
      %524 = vst [vmem:[%s172 + $0x40] sm:$0xf] %v460
      %525 = vst [vmem:[%s172 + $0x44] sm:$0xf] %v461
      %526 = vst [vmem:[%s172 + $0x48] sm:$0xf] %v462
      %527 = vst [vmem:[%s172 + $0x4c] sm:$0xf] %v463
      %528 = vst [vmem:[%s172 + $0x50] sm:$0xf] %v464
      %529 = vst [vmem:[%s172 + $0x54] sm:$0xf] %v465
      %530 = vst [vmem:[%s172 + $0x58] sm:$0xf] %v466
      %531 = vst [vmem:[%s172 + $0x5c] sm:$0xf] %v467
      %532 = vst [vmem:[%s172 + $0x60] sm:$0xf] %v468
      %533 = vst [vmem:[%s172 + $0x64] sm:$0xf] %v469
      %534 = vst [vmem:[%s172 + $0x68] sm:$0xf] %v470
      %535 = vst [vmem:[%s172 + $0x6c] sm:$0xf] %v471
      %536 = vst [vmem:[%s172 + $0x70] sm:$0xf] %v472
      %537 = vst [vmem:[%s172 + $0x74] sm:$0xf] %v473
      %538 = vst [vmem:[%s172 + $0x78] sm:$0xf] %v474
      %539 = vst [vmem:[%s172 + $0x7c] sm:$0xf] %v475
      %s540 = smul.u32 32, %s14
      %p541 = scmp.lt.s32.totalorder %s540, 63
      %s542 = scalar_select %p541, %s540, 63
      %s543 = smul.addr %s542, 4
      %s544 = scalar_lea.vmem %s3, %s543
      // Predicated region
      $region33: #{discriminator_forward.10} parent=31 // pred_check
        %p545 = pneg %p100
      $region34: #{discriminator_forward.10} parent=31 // pred_check_branch
        %547 = sbr.rel (%p545) target = $region36
      $region35: #{discriminator_forward.10} parent=31 // pred_region
        %s548 = smul.u32 32, %s14
      $region36: #{discriminator_forward.10} parent=31 // pred_fallthru
        _
    $region32: #{discriminator_forward.10} parent=5 // pred_fallthru
      _
    %p549 = scmp.le.s32.totalorder 2, %s9
    // Predicated region
    $region37: #{discriminator_forward.10} parent=5 // pred_check
      %p550 = pneg %p549
    $region38: #{discriminator_forward.10} parent=5 // pred_check_branch
      %552 = sbr.rel (%p550) target = $region40
    $region39: #{discriminator_forward.10} parent=5 // pred_region
      %s553 = ssub.s32 %s9, 2
      // Predicated region
      $region41: #{discriminator_forward.10} parent=39 // pred_check
        %p554 = pneg %p106
      $region42: #{discriminator_forward.10} parent=39 // pred_check_branch
        %556 = sbr.rel (%p554) target = $region44
      $region43: #{discriminator_forward.10} parent=39 // pred_region
        %s557 = smul.u32 32, %s15
        %p558 = scmp.lt.s32.totalorder %s557, 63
        %s559 = scalar_select %p558, %s557, 63
        %s560 = smul.addr %s559, 4
        %s561 = scalar_lea.vmem %s3, %s560
      $region44: #{discriminator_forward.10} parent=39 // pred_fallthru
        _
    $region40: #{discriminator_forward.10} parent=5 // pred_fallthru
      _
  $region6: #{discriminator_forward.10} parent=0 // loop_footer
    %s13 = sadd.s32 1, %s9
  $region7: #{discriminator_forward.10} parent=0 // loop_footer_branch
    %8 = sbr.rel target = $region3
  $region8: #{discriminator_forward.10} parent=0 // loop_exit
    _

// kernel: discriminator_forward.11
$region0: #{discriminator_forward.11}
  #allocation0 [shape = 'u32[]', space=smem, size = 0x4, offset = 0x4, fixed_abs, tag = 'smem constant byte address 0x4 - core index']
  #allocation1 [shape = 'u32[144,128]{1,0:T(1,128)}', space=vmem, size = 0x12000, scoped, tag = 'internal scratch']
  %s0 = inlined_call_operand.vmem [shape: bf16[128,1024], index: 0, kind: input, shape index: {}]
  %s1 = inlined_call_operand.vmem [shape: bf16[1024,128], index: 1, kind: input, shape index: {}]
  %s2 = inlined_call_operand.vmem [shape: f32[128,128], index: 2, kind: output, shape index: {0}]
  %s3 = inlined_call_operand.vmem [shape: f32[1,2,128], index: 3, kind: output, shape index: {1}]
  %4 = xla_tuple %s2, %s3
  %s5 = sld [smem:[#allocation0]]
  $region26: #{discriminator_forward.11} parent=0
    _
  %s7 = ssub.s32 1, %s5
  %s8 = scalar_select 0, %s7, %s5
  // Predicated region
  $region2: #{discriminator_forward.11} parent=0 // pred_check
    _
  $region3: #{discriminator_forward.11} parent=0 // pred_check_branch
    %10 = sbr.rel (0) target = $region5
  $region4: #{discriminator_forward.11} parent=0 // pred_region
    _
  $region5: #{discriminator_forward.11} parent=0 // pred_fallthru
    _
  // Predicated region
  $region6: #{discriminator_forward.11} parent=0 // pred_check
    _
  $region7: #{discriminator_forward.11} parent=0 // pred_check_branch
    %12 = sbr.rel (0) target = $region9
  $region8: #{discriminator_forward.11} parent=0 // pred_region
    _
  $region9: #{discriminator_forward.11} parent=0 // pred_fallthru
    _
  %v14 = vld [vmem:[%s0] sm:$0xff]
  %v15 = vld [vmem:[%s0 + $0x8] sm:$0xff]
  %v16 = vld [vmem:[%s0 + $0x10] sm:$0xff]
  %v17 = vld [vmem:[%s0 + $0x18] sm:$0xff]
  %v18 = vld [vmem:[%s0 + $0x20] sm:$0xff]
  %v19 = vld [vmem:[%s0 + $0x28] sm:$0xff]
  %v20 = vld [vmem:[%s0 + $0x30] sm:$0xff]
  %v21 = vld [vmem:[%s0 + $0x38] sm:$0xff]
  %v22 = vld [vmem:[%s0 + $0x40] sm:$0xff]
  %v23 = vld [vmem:[%s0 + $0x48] sm:$0xff]
  %v24 = vld [vmem:[%s0 + $0x50] sm:$0xff]
  %v25 = vld [vmem:[%s0 + $0x58] sm:$0xff]
  %v26 = vld [vmem:[%s0 + $0x60] sm:$0xff]
  %v27 = vld [vmem:[%s0 + $0x68] sm:$0xff]
  %v28 = vld [vmem:[%s0 + $0x70] sm:$0xff]
  %v29 = vld [vmem:[%s0 + $0x78] sm:$0xff]
  %v30 = vld [vmem:[%s0 + $0x80] sm:$0xff]
  %v31 = vld [vmem:[%s0 + $0x88] sm:$0xff]
  %v32 = vld [vmem:[%s0 + $0x90] sm:$0xff]
  %v33 = vld [vmem:[%s0 + $0x98] sm:$0xff]
  %v34 = vld [vmem:[%s0 + $0xa0] sm:$0xff]
  %v35 = vld [vmem:[%s0 + $0xa8] sm:$0xff]
  %v36 = vld [vmem:[%s0 + $0xb0] sm:$0xff]
  %v37 = vld [vmem:[%s0 + $0xb8] sm:$0xff]
  %v38 = vld [vmem:[%s0 + $0xc0] sm:$0xff]
  %v39 = vld [vmem:[%s0 + $0xc8] sm:$0xff]
  %v40 = vld [vmem:[%s0 + $0xd0] sm:$0xff]
  %v41 = vld [vmem:[%s0 + $0xd8] sm:$0xff]
  %v42 = vld [vmem:[%s0 + $0xe0] sm:$0xff]
  %v43 = vld [vmem:[%s0 + $0xe8] sm:$0xff]
  %v44 = vld [vmem:[%s0 + $0xf0] sm:$0xff]
  %v45 = vld [vmem:[%s0 + $0xf8] sm:$0xff]
  %v46 = vld [vmem:[%s0 + $0x100] sm:$0xff]
  %v47 = vld [vmem:[%s0 + $0x108] sm:$0xff]
  %v48 = vld [vmem:[%s0 + $0x110] sm:$0xff]
  %v49 = vld [vmem:[%s0 + $0x118] sm:$0xff]
  %v50 = vld [vmem:[%s0 + $0x120] sm:$0xff]
  %v51 = vld [vmem:[%s0 + $0x128] sm:$0xff]
  %v52 = vld [vmem:[%s0 + $0x130] sm:$0xff]
  %v53 = vld [vmem:[%s0 + $0x138] sm:$0xff]
  %v54 = vld [vmem:[%s0 + $0x140] sm:$0xff]
  %v55 = vld [vmem:[%s0 + $0x148] sm:$0xff]
  %v56 = vld [vmem:[%s0 + $0x150] sm:$0xff]
  %v57 = vld [vmem:[%s0 + $0x158] sm:$0xff]
  %v58 = vld [vmem:[%s0 + $0x160] sm:$0xff]
  %v59 = vld [vmem:[%s0 + $0x168] sm:$0xff]
  %v60 = vld [vmem:[%s0 + $0x170] sm:$0xff]
  %v61 = vld [vmem:[%s0 + $0x178] sm:$0xff]
  %v62 = vld [vmem:[%s0 + $0x180] sm:$0xff]
  %v63 = vld [vmem:[%s0 + $0x188] sm:$0xff]
  %v64 = vld [vmem:[%s0 + $0x190] sm:$0xff]
  %v65 = vld [vmem:[%s0 + $0x198] sm:$0xff]
  %v66 = vld [vmem:[%s0 + $0x1a0] sm:$0xff]
  %v67 = vld [vmem:[%s0 + $0x1a8] sm:$0xff]
  %v68 = vld [vmem:[%s0 + $0x1b0] sm:$0xff]
  %v69 = vld [vmem:[%s0 + $0x1b8] sm:$0xff]
  %v70 = vld [vmem:[%s0 + $0x1c0] sm:$0xff]
  %v71 = vld [vmem:[%s0 + $0x1c8] sm:$0xff]
  %v72 = vld [vmem:[%s0 + $0x1d0] sm:$0xff]
  %v73 = vld [vmem:[%s0 + $0x1d8] sm:$0xff]
  %v74 = vld [vmem:[%s0 + $0x1e0] sm:$0xff]
  %v75 = vld [vmem:[%s0 + $0x1e8] sm:$0xff]
  %v76 = vld [vmem:[%s0 + $0x1f0] sm:$0xff]
  %v77 = vld [vmem:[%s0 + $0x1f8] sm:$0xff]
  %v78 = vld [vmem:[%s1] sm:$0xf]
  %v79 = vld [vmem:[%s1 + $0x4] sm:$0xf]
  %v80 = vld [vmem:[%s1 + $0x8] sm:$0xf]
  %v81 = vld [vmem:[%s1 + $0xc] sm:$0xf]
  %v82 = vld [vmem:[%s1 + $0x10] sm:$0xf]
  %v83 = vld [vmem:[%s1 + $0x14] sm:$0xf]
  %v84 = vld [vmem:[%s1 + $0x18] sm:$0xf]
  %v85 = vld [vmem:[%s1 + $0x1c] sm:$0xf]
  %v86 = vld [vmem:[%s1 + $0x20] sm:$0xf]
  %v87 = vld [vmem:[%s1 + $0x24] sm:$0xf]
  %v88 = vld [vmem:[%s1 + $0x28] sm:$0xf]
  %v89 = vld [vmem:[%s1 + $0x2c] sm:$0xf]
  %v90 = vld [vmem:[%s1 + $0x30] sm:$0xf]
  %v91 = vld [vmem:[%s1 + $0x34] sm:$0xf]
  %v92 = vld [vmem:[%s1 + $0x38] sm:$0xf]
  %v93 = vld [vmem:[%s1 + $0x3c] sm:$0xf]
  %v94 = vld [vmem:[%s1 + $0x40] sm:$0xf]
  %v95 = vld [vmem:[%s1 + $0x44] sm:$0xf]
  %v96 = vld [vmem:[%s1 + $0x48] sm:$0xf]
  %v97 = vld [vmem:[%s1 + $0x4c] sm:$0xf]
  %v98 = vld [vmem:[%s1 + $0x50] sm:$0xf]
  %v99 = vld [vmem:[%s1 + $0x54] sm:$0xf]
  %v100 = vld [vmem:[%s1 + $0x58] sm:$0xf]
  %v101 = vld [vmem:[%s1 + $0x5c] sm:$0xf]
  %v102 = vld [vmem:[%s1 + $0x60] sm:$0xf]
  %v103 = vld [vmem:[%s1 + $0x64] sm:$0xf]
  %v104 = vld [vmem:[%s1 + $0x68] sm:$0xf]
  %v105 = vld [vmem:[%s1 + $0x6c] sm:$0xf]
  %v106 = vld [vmem:[%s1 + $0x70] sm:$0xf]
  %v107 = vld [vmem:[%s1 + $0x74] sm:$0xf]
  %v108 = vld [vmem:[%s1 + $0x78] sm:$0xf]
  %v109 = vld [vmem:[%s1 + $0x7c] sm:$0xf]
  %v110 = vld [vmem:[%s1 + $0x80] sm:$0xf]
  %v111 = vld [vmem:[%s1 + $0x84] sm:$0xf]
  %v112 = vld [vmem:[%s1 + $0x88] sm:$0xf]
  %v113 = vld [vmem:[%s1 + $0x8c] sm:$0xf]
  %v114 = vld [vmem:[%s1 + $0x90] sm:$0xf]
  %v115 = vld [vmem:[%s1 + $0x94] sm:$0xf]
  %v116 = vld [vmem:[%s1 + $0x98] sm:$0xf]
  %v117 = vld [vmem:[%s1 + $0x9c] sm:$0xf]
  %v118 = vld [vmem:[%s1 + $0xa0] sm:$0xf]
  %v119 = vld [vmem:[%s1 + $0xa4] sm:$0xf]
  %v120 = vld [vmem:[%s1 + $0xa8] sm:$0xf]
  %v121 = vld [vmem:[%s1 + $0xac] sm:$0xf]
  %v122 = vld [vmem:[%s1 + $0xb0] sm:$0xf]
  %v123 = vld [vmem:[%s1 + $0xb4] sm:$0xf]
  %v124 = vld [vmem:[%s1 + $0xb8] sm:$0xf]
  %v125 = vld [vmem:[%s1 + $0xbc] sm:$0xf]
  %v126 = vld [vmem:[%s1 + $0xc0] sm:$0xf]
  %v127 = vld [vmem:[%s1 + $0xc4] sm:$0xf]
  %v128 = vld [vmem:[%s1 + $0xc8] sm:$0xf]
  %v129 = vld [vmem:[%s1 + $0xcc] sm:$0xf]
  %v130 = vld [vmem:[%s1 + $0xd0] sm:$0xf]
  %v131 = vld [vmem:[%s1 + $0xd4] sm:$0xf]
  %v132 = vld [vmem:[%s1 + $0xd8] sm:$0xf]
  %v133 = vld [vmem:[%s1 + $0xdc] sm:$0xf]
  %v134 = vld [vmem:[%s1 + $0xe0] sm:$0xf]
  %v135 = vld [vmem:[%s1 + $0xe4] sm:$0xf]
  %v136 = vld [vmem:[%s1 + $0xe8] sm:$0xf]
  %v137 = vld [vmem:[%s1 + $0xec] sm:$0xf]
  %v138 = vld [vmem:[%s1 + $0xf0] sm:$0xf]
  %v139 = vld [vmem:[%s1 + $0xf4] sm:$0xf]
  %v140 = vld [vmem:[%s1 + $0xf8] sm:$0xf]
  %v141 = vld [vmem:[%s1 + $0xfc] sm:$0xf]
  %v142 = vld [vmem:[%s1 + $0x100] sm:$0xf]
  %v143 = vld [vmem:[%s1 + $0x104] sm:$0xf]
  %v144 = vld [vmem:[%s1 + $0x108] sm:$0xf]
  %v145 = vld [vmem:[%s1 + $0x10c] sm:$0xf]
  %v146 = vld [vmem:[%s1 + $0x110] sm:$0xf]
  %v147 = vld [vmem:[%s1 + $0x114] sm:$0xf]
  %v148 = vld [vmem:[%s1 + $0x118] sm:$0xf]
  %v149 = vld [vmem:[%s1 + $0x11c] sm:$0xf]
  %v150 = vld [vmem:[%s1 + $0x120] sm:$0xf]
  %v151 = vld [vmem:[%s1 + $0x124] sm:$0xf]
  %v152 = vld [vmem:[%s1 + $0x128] sm:$0xf]
  %v153 = vld [vmem:[%s1 + $0x12c] sm:$0xf]
  %v154 = vld [vmem:[%s1 + $0x130] sm:$0xf]
  %v155 = vld [vmem:[%s1 + $0x134] sm:$0xf]
  %v156 = vld [vmem:[%s1 + $0x138] sm:$0xf]
  %v157 = vld [vmem:[%s1 + $0x13c] sm:$0xf]
  %v158 = vld [vmem:[%s1 + $0x140] sm:$0xf]
  %v159 = vld [vmem:[%s1 + $0x144] sm:$0xf]
  %v160 = vld [vmem:[%s1 + $0x148] sm:$0xf]
  %v161 = vld [vmem:[%s1 + $0x14c] sm:$0xf]
  %v162 = vld [vmem:[%s1 + $0x150] sm:$0xf]
  %v163 = vld [vmem:[%s1 + $0x154] sm:$0xf]
  %v164 = vld [vmem:[%s1 + $0x158] sm:$0xf]
  %v165 = vld [vmem:[%s1 + $0x15c] sm:$0xf]
  %v166 = vld [vmem:[%s1 + $0x160] sm:$0xf]
  %v167 = vld [vmem:[%s1 + $0x164] sm:$0xf]
  %v168 = vld [vmem:[%s1 + $0x168] sm:$0xf]
  %v169 = vld [vmem:[%s1 + $0x16c] sm:$0xf]
  %v170 = vld [vmem:[%s1 + $0x170] sm:$0xf]
  %v171 = vld [vmem:[%s1 + $0x174] sm:$0xf]
  %v172 = vld [vmem:[%s1 + $0x178] sm:$0xf]
  %v173 = vld [vmem:[%s1 + $0x17c] sm:$0xf]
  %v174 = vld [vmem:[%s1 + $0x180] sm:$0xf]
  %v175 = vld [vmem:[%s1 + $0x184] sm:$0xf]
  %v176 = vld [vmem:[%s1 + $0x188] sm:$0xf]
  %v177 = vld [vmem:[%s1 + $0x18c] sm:$0xf]
  %v178 = vld [vmem:[%s1 + $0x190] sm:$0xf]
  %v179 = vld [vmem:[%s1 + $0x194] sm:$0xf]
  %v180 = vld [vmem:[%s1 + $0x198] sm:$0xf]
  %v181 = vld [vmem:[%s1 + $0x19c] sm:$0xf]
  %v182 = vld [vmem:[%s1 + $0x1a0] sm:$0xf]
  %v183 = vld [vmem:[%s1 + $0x1a4] sm:$0xf]
  %v184 = vld [vmem:[%s1 + $0x1a8] sm:$0xf]
  %v185 = vld [vmem:[%s1 + $0x1ac] sm:$0xf]
  %v186 = vld [vmem:[%s1 + $0x1b0] sm:$0xf]
  %v187 = vld [vmem:[%s1 + $0x1b4] sm:$0xf]
  %v188 = vld [vmem:[%s1 + $0x1b8] sm:$0xf]
  %v189 = vld [vmem:[%s1 + $0x1bc] sm:$0xf]
  %v190 = vld [vmem:[%s1 + $0x1c0] sm:$0xf]
  %v191 = vld [vmem:[%s1 + $0x1c4] sm:$0xf]
  %v192 = vld [vmem:[%s1 + $0x1c8] sm:$0xf]
  %v193 = vld [vmem:[%s1 + $0x1cc] sm:$0xf]
  %v194 = vld [vmem:[%s1 + $0x1d0] sm:$0xf]
  %v195 = vld [vmem:[%s1 + $0x1d4] sm:$0xf]
  %v196 = vld [vmem:[%s1 + $0x1d8] sm:$0xf]
  %v197 = vld [vmem:[%s1 + $0x1dc] sm:$0xf]
  %v198 = vld [vmem:[%s1 + $0x1e0] sm:$0xf]
  %v199 = vld [vmem:[%s1 + $0x1e4] sm:$0xf]
  %v200 = vld [vmem:[%s1 + $0x1e8] sm:$0xf]
  %v201 = vld [vmem:[%s1 + $0x1ec] sm:$0xf]
  %v202 = vld [vmem:[%s1 + $0x1f0] sm:$0xf]
  %v203 = vld [vmem:[%s1 + $0x1f4] sm:$0xf]
  %v204 = vld [vmem:[%s1 + $0x1f8] sm:$0xf]
  %v205 = vld [vmem:[%s1 + $0x1fc] sm:$0xf]
  %v270 = vunpack.c.l.b16 %v14
  %v271 = vunpack.c.h.b16 %v14
  %v272 = vunpack.c.l.b16 %v15
  %v273 = vunpack.c.h.b16 %v15
  %v274 = vunpack.c.l.b16 %v16
  %v275 = vunpack.c.h.b16 %v16
  %v276 = vunpack.c.l.b16 %v17
  %v277 = vunpack.c.h.b16 %v17
  %v278 = vunpack.c.l.b16 %v18
  %v279 = vunpack.c.h.b16 %v18
  %v280 = vunpack.c.l.b16 %v19
  %v281 = vunpack.c.h.b16 %v19
  %v282 = vunpack.c.l.b16 %v20
  %v283 = vunpack.c.h.b16 %v20
  %v284 = vunpack.c.l.b16 %v21
  %v285 = vunpack.c.h.b16 %v21
  %v286 = vunpack.c.l.b16 %v22
  %v287 = vunpack.c.h.b16 %v22
  %v288 = vunpack.c.l.b16 %v23
  %v289 = vunpack.c.h.b16 %v23
  %v290 = vunpack.c.l.b16 %v24
  %v291 = vunpack.c.h.b16 %v24
  %v292 = vunpack.c.l.b16 %v25
  %v293 = vunpack.c.h.b16 %v25
  %v294 = vunpack.c.l.b16 %v26
  %v295 = vunpack.c.h.b16 %v26
  %v296 = vunpack.c.l.b16 %v27
  %v297 = vunpack.c.h.b16 %v27
  %v298 = vunpack.c.l.b16 %v28
  %v299 = vunpack.c.h.b16 %v28
  %v300 = vunpack.c.l.b16 %v29
  %v301 = vunpack.c.h.b16 %v29
  %v302 = vunpack.c.l.b16 %v30
  %v303 = vunpack.c.h.b16 %v30
  %v304 = vunpack.c.l.b16 %v31
  %v305 = vunpack.c.h.b16 %v31
  %v306 = vunpack.c.l.b16 %v32
  %v307 = vunpack.c.h.b16 %v32
  %v308 = vunpack.c.l.b16 %v33
  %v309 = vunpack.c.h.b16 %v33
  %v310 = vunpack.c.l.b16 %v34
  %v311 = vunpack.c.h.b16 %v34
  %v312 = vunpack.c.l.b16 %v35
  %v313 = vunpack.c.h.b16 %v35
  %v314 = vunpack.c.l.b16 %v36
  %v315 = vunpack.c.h.b16 %v36
  %v316 = vunpack.c.l.b16 %v37
  %v317 = vunpack.c.h.b16 %v37
  %v318 = vunpack.c.l.b16 %v38
  %v319 = vunpack.c.h.b16 %v38
  %v320 = vunpack.c.l.b16 %v39
  %v321 = vunpack.c.h.b16 %v39
  %v322 = vunpack.c.l.b16 %v40
  %v323 = vunpack.c.h.b16 %v40
  %v324 = vunpack.c.l.b16 %v41
  %v325 = vunpack.c.h.b16 %v41
  %v326 = vunpack.c.l.b16 %v42
  %v327 = vunpack.c.h.b16 %v42
  %v328 = vunpack.c.l.b16 %v43
  %v329 = vunpack.c.h.b16 %v43
  %v330 = vunpack.c.l.b16 %v44
  %v331 = vunpack.c.h.b16 %v44
  %v332 = vunpack.c.l.b16 %v45
  %v333 = vunpack.c.h.b16 %v45
  %v334 = vunpack.c.l.b16 %v46
  %v335 = vunpack.c.h.b16 %v46
  %v336 = vunpack.c.l.b16 %v47
  %v337 = vunpack.c.h.b16 %v47
  %v338 = vunpack.c.l.b16 %v48
  %v339 = vunpack.c.h.b16 %v48
  %v340 = vunpack.c.l.b16 %v49
  %v341 = vunpack.c.h.b16 %v49
  %v342 = vunpack.c.l.b16 %v50
  %v343 = vunpack.c.h.b16 %v50
  %v344 = vunpack.c.l.b16 %v51
  %v345 = vunpack.c.h.b16 %v51
  %v346 = vunpack.c.l.b16 %v52
  %v347 = vunpack.c.h.b16 %v52
  %v348 = vunpack.c.l.b16 %v53
  %v349 = vunpack.c.h.b16 %v53
  %v350 = vunpack.c.l.b16 %v54
  %v351 = vunpack.c.h.b16 %v54
  %v352 = vunpack.c.l.b16 %v55
  %v353 = vunpack.c.h.b16 %v55
  %v354 = vunpack.c.l.b16 %v56
  %v355 = vunpack.c.h.b16 %v56
  %v356 = vunpack.c.l.b16 %v57
  %v357 = vunpack.c.h.b16 %v57
  %v358 = vunpack.c.l.b16 %v58
  %v359 = vunpack.c.h.b16 %v58
  %v360 = vunpack.c.l.b16 %v59
  %v361 = vunpack.c.h.b16 %v59
  %v362 = vunpack.c.l.b16 %v60
  %v363 = vunpack.c.h.b16 %v60
  %v364 = vunpack.c.l.b16 %v61
  %v365 = vunpack.c.h.b16 %v61
  %v366 = vunpack.c.l.b16 %v62
  %v367 = vunpack.c.h.b16 %v62
  %v368 = vunpack.c.l.b16 %v63
  %v369 = vunpack.c.h.b16 %v63
  %v370 = vunpack.c.l.b16 %v64
  %v371 = vunpack.c.h.b16 %v64
  %v372 = vunpack.c.l.b16 %v65
  %v373 = vunpack.c.h.b16 %v65
  %v374 = vunpack.c.l.b16 %v66
  %v375 = vunpack.c.h.b16 %v66
  %v376 = vunpack.c.l.b16 %v67
  %v377 = vunpack.c.h.b16 %v67
  %v378 = vunpack.c.l.b16 %v68
  %v379 = vunpack.c.h.b16 %v68
  %v380 = vunpack.c.l.b16 %v69
  %v381 = vunpack.c.h.b16 %v69
  %v382 = vunpack.c.l.b16 %v70
  %v383 = vunpack.c.h.b16 %v70
  %v384 = vunpack.c.l.b16 %v71
  %v385 = vunpack.c.h.b16 %v71
  %v386 = vunpack.c.l.b16 %v72
  %v387 = vunpack.c.h.b16 %v72
  %v388 = vunpack.c.l.b16 %v73
  %v389 = vunpack.c.h.b16 %v73
  %v390 = vunpack.c.l.b16 %v74
  %v391 = vunpack.c.h.b16 %v74
  %v392 = vunpack.c.l.b16 %v75
  %v393 = vunpack.c.h.b16 %v75
  %v394 = vunpack.c.l.b16 %v76
  %v395 = vunpack.c.h.b16 %v76
  %v396 = vunpack.c.l.b16 %v77
  %v397 = vunpack.c.h.b16 %v77
  %v398 = vpack.c.b16 %v278, %v270
  %v399 = vpack.c.b16 %v279, %v271
  %v400 = vpack.c.b16 %v280, %v272
  %v401 = vpack.c.b16 %v281, %v273
  %v402 = vpack.c.b16 %v282, %v274
  %v403 = vpack.c.b16 %v283, %v275
  %v404 = vpack.c.b16 %v284, %v276
  %v405 = vpack.c.b16 %v285, %v277
  %v406 = vpack.c.b16 %v294, %v286
  %v407 = vpack.c.b16 %v295, %v287
  %v408 = vpack.c.b16 %v296, %v288
  %v409 = vpack.c.b16 %v297, %v289
  %v410 = vpack.c.b16 %v298, %v290
  %v411 = vpack.c.b16 %v299, %v291
  %v412 = vpack.c.b16 %v300, %v292
  %v413 = vpack.c.b16 %v301, %v293
  %v414 = vpack.c.b16 %v310, %v302
  %v415 = vpack.c.b16 %v311, %v303
  %v416 = vpack.c.b16 %v312, %v304
  %v417 = vpack.c.b16 %v313, %v305
  %v418 = vpack.c.b16 %v314, %v306
  %v419 = vpack.c.b16 %v315, %v307
  %v420 = vpack.c.b16 %v316, %v308
  %v421 = vpack.c.b16 %v317, %v309
  %v422 = vpack.c.b16 %v326, %v318
  %v423 = vpack.c.b16 %v327, %v319
  %v424 = vpack.c.b16 %v328, %v320
  %v425 = vpack.c.b16 %v329, %v321
  %v426 = vpack.c.b16 %v330, %v322
  %v427 = vpack.c.b16 %v331, %v323
  %v428 = vpack.c.b16 %v332, %v324
  %v429 = vpack.c.b16 %v333, %v325
  %v430 = vpack.c.b16 %v342, %v334
  %v431 = vpack.c.b16 %v343, %v335
  %v432 = vpack.c.b16 %v344, %v336
  %v433 = vpack.c.b16 %v345, %v337
  %v434 = vpack.c.b16 %v346, %v338
  %v435 = vpack.c.b16 %v347, %v339
  %v436 = vpack.c.b16 %v348, %v340
  %v437 = vpack.c.b16 %v349, %v341
  %v438 = vpack.c.b16 %v358, %v350
  %v439 = vpack.c.b16 %v359, %v351
  %v440 = vpack.c.b16 %v360, %v352
  %v441 = vpack.c.b16 %v361, %v353
  %v442 = vpack.c.b16 %v362, %v354
  %v443 = vpack.c.b16 %v363, %v355
  %v444 = vpack.c.b16 %v364, %v356
  %v445 = vpack.c.b16 %v365, %v357
  %v446 = vpack.c.b16 %v374, %v366
  %v447 = vpack.c.b16 %v375, %v367
  %v448 = vpack.c.b16 %v376, %v368
  %v449 = vpack.c.b16 %v377, %v369
  %v450 = vpack.c.b16 %v378, %v370
  %v451 = vpack.c.b16 %v379, %v371
  %v452 = vpack.c.b16 %v380, %v372
  %v453 = vpack.c.b16 %v381, %v373
  %v454 = vpack.c.b16 %v390, %v382
  %v455 = vpack.c.b16 %v391, %v383
  %v456 = vpack.c.b16 %v392, %v384
  %v457 = vpack.c.b16 %v393, %v385
  %v458 = vpack.c.b16 %v394, %v386
  %v459 = vpack.c.b16 %v395, %v387
  %v460 = vpack.c.b16 %v396, %v388
  %v461 = vpack.c.b16 %v397, %v389
  %v654 = vunpack.c.l.b16 %v78
  %v655 = vunpack.c.l.b16 %v79
  %v656 = vunpack.c.l.b16 %v80
  %v657 = vunpack.c.l.b16 %v81
  %v658 = vunpack.c.l.b16 %v82
  %v659 = vunpack.c.l.b16 %v83
  %v660 = vunpack.c.l.b16 %v84
  %v661 = vunpack.c.l.b16 %v85
  %v662 = vunpack.c.l.b16 %v86
  %v663 = vunpack.c.l.b16 %v87
  %v664 = vunpack.c.l.b16 %v88
  %v665 = vunpack.c.l.b16 %v89
  %v666 = vunpack.c.l.b16 %v90
  %v667 = vunpack.c.l.b16 %v91
  %v668 = vunpack.c.l.b16 %v92
  %v669 = vunpack.c.l.b16 %v93
  %v670 = vunpack.c.l.b16 %v94
  %v671 = vunpack.c.l.b16 %v95
  %v672 = vunpack.c.l.b16 %v96
  %v673 = vunpack.c.l.b16 %v97
  %v674 = vunpack.c.l.b16 %v98
  %v675 = vunpack.c.l.b16 %v99
  %v676 = vunpack.c.l.b16 %v100
  %v677 = vunpack.c.l.b16 %v101
  %v678 = vunpack.c.l.b16 %v102
  %v679 = vunpack.c.l.b16 %v103
  %v680 = vunpack.c.l.b16 %v104
  %v681 = vunpack.c.l.b16 %v105
  %v682 = vunpack.c.l.b16 %v106
  %v683 = vunpack.c.l.b16 %v107
  %v684 = vunpack.c.l.b16 %v108
  %v685 = vunpack.c.l.b16 %v109
  %v686 = vunpack.c.l.b16 %v110
  %v687 = vunpack.c.l.b16 %v111
  %v688 = vunpack.c.l.b16 %v112
  %v689 = vunpack.c.l.b16 %v113
  %v690 = vunpack.c.l.b16 %v114
  %v691 = vunpack.c.l.b16 %v115
  %v692 = vunpack.c.l.b16 %v116
  %v693 = vunpack.c.l.b16 %v117
  %v694 = vunpack.c.l.b16 %v118
  %v695 = vunpack.c.l.b16 %v119
  %v696 = vunpack.c.l.b16 %v120
  %v697 = vunpack.c.l.b16 %v121
  %v698 = vunpack.c.l.b16 %v122
  %v699 = vunpack.c.l.b16 %v123
  %v700 = vunpack.c.l.b16 %v124
  %v701 = vunpack.c.l.b16 %v125
  %v702 = vunpack.c.l.b16 %v126
  %v703 = vunpack.c.l.b16 %v127
  %v704 = vunpack.c.l.b16 %v128
  %v705 = vunpack.c.l.b16 %v129
  %v706 = vunpack.c.l.b16 %v130
  %v707 = vunpack.c.l.b16 %v131
  %v708 = vunpack.c.l.b16 %v132
  %v709 = vunpack.c.l.b16 %v133
  %v710 = vunpack.c.l.b16 %v134
  %v711 = vunpack.c.l.b16 %v135
  %v712 = vunpack.c.l.b16 %v136
  %v713 = vunpack.c.l.b16 %v137
  %v714 = vunpack.c.l.b16 %v138
  %v715 = vunpack.c.l.b16 %v139
  %v716 = vunpack.c.l.b16 %v140
  %v717 = vunpack.c.l.b16 %v141
  %v718 = vunpack.c.l.b16 %v142
  %v719 = vunpack.c.l.b16 %v143
  %v720 = vunpack.c.l.b16 %v144
  %v721 = vunpack.c.l.b16 %v145
  %v722 = vunpack.c.l.b16 %v146
  %v723 = vunpack.c.l.b16 %v147
  %v724 = vunpack.c.l.b16 %v148
  %v725 = vunpack.c.l.b16 %v149
  %v726 = vunpack.c.l.b16 %v150
  %v727 = vunpack.c.l.b16 %v151
  %v728 = vunpack.c.l.b16 %v152
  %v729 = vunpack.c.l.b16 %v153
  %v730 = vunpack.c.l.b16 %v154
  %v731 = vunpack.c.l.b16 %v155
  %v732 = vunpack.c.l.b16 %v156
  %v733 = vunpack.c.l.b16 %v157
  %v734 = vunpack.c.l.b16 %v158
  %v735 = vunpack.c.l.b16 %v159
  %v736 = vunpack.c.l.b16 %v160
  %v737 = vunpack.c.l.b16 %v161
  %v738 = vunpack.c.l.b16 %v162
  %v739 = vunpack.c.l.b16 %v163
  %v740 = vunpack.c.l.b16 %v164
  %v741 = vunpack.c.l.b16 %v165
  %v742 = vunpack.c.l.b16 %v166
  %v743 = vunpack.c.l.b16 %v167
  %v744 = vunpack.c.l.b16 %v168
  %v745 = vunpack.c.l.b16 %v169
  %v746 = vunpack.c.l.b16 %v170
  %v747 = vunpack.c.l.b16 %v171
  %v748 = vunpack.c.l.b16 %v172
  %v749 = vunpack.c.l.b16 %v173
  %v750 = vunpack.c.l.b16 %v174
  %v751 = vunpack.c.l.b16 %v175
  %v752 = vunpack.c.l.b16 %v176
  %v753 = vunpack.c.l.b16 %v177
  %v754 = vunpack.c.l.b16 %v178
  %v755 = vunpack.c.l.b16 %v179
  %v756 = vunpack.c.l.b16 %v180
  %v757 = vunpack.c.l.b16 %v181
  %v758 = vunpack.c.l.b16 %v182
  %v759 = vunpack.c.l.b16 %v183
  %v760 = vunpack.c.l.b16 %v184
  %v761 = vunpack.c.l.b16 %v185
  %v762 = vunpack.c.l.b16 %v186
  %v763 = vunpack.c.l.b16 %v187
  %v764 = vunpack.c.l.b16 %v188
  %v765 = vunpack.c.l.b16 %v189
  %v766 = vunpack.c.l.b16 %v190
  %v767 = vunpack.c.l.b16 %v191
  %v768 = vunpack.c.l.b16 %v192
  %v769 = vunpack.c.l.b16 %v193
  %v770 = vunpack.c.l.b16 %v194
  %v771 = vunpack.c.l.b16 %v195
  %v772 = vunpack.c.l.b16 %v196
  %v773 = vunpack.c.l.b16 %v197
  %v774 = vunpack.c.l.b16 %v198
  %v775 = vunpack.c.l.b16 %v199
  %v776 = vunpack.c.l.b16 %v200
  %v777 = vunpack.c.l.b16 %v201
  %v778 = vunpack.c.l.b16 %v202
  %v779 = vunpack.c.l.b16 %v203
  %v780 = vunpack.c.l.b16 %v204
  %v781 = vunpack.c.l.b16 %v205
  %v782 = vpack.c.b16 %v655, %v654
  %v783 = vpack.c.b16 %v657, %v656
  %v784 = vpack.c.b16 %v659, %v658
  %v785 = vpack.c.b16 %v661, %v660
  %v786 = vpack.c.b16 %v663, %v662
  %v787 = vpack.c.b16 %v665, %v664
  %v788 = vpack.c.b16 %v667, %v666
  %v789 = vpack.c.b16 %v669, %v668
  %v790 = vpack.c.b16 %v671, %v670
  %v791 = vpack.c.b16 %v673, %v672
  %v792 = vpack.c.b16 %v675, %v674
  %v793 = vpack.c.b16 %v677, %v676
  %v794 = vpack.c.b16 %v679, %v678
  %v795 = vpack.c.b16 %v681, %v680
  %v796 = vpack.c.b16 %v683, %v682
  %v797 = vpack.c.b16 %v685, %v684
  %v798 = vpack.c.b16 %v687, %v686
  %v799 = vpack.c.b16 %v689, %v688
  %v800 = vpack.c.b16 %v691, %v690
  %v801 = vpack.c.b16 %v693, %v692
  %v802 = vpack.c.b16 %v695, %v694
  %v803 = vpack.c.b16 %v697, %v696
  %v804 = vpack.c.b16 %v699, %v698
  %v805 = vpack.c.b16 %v701, %v700
  %v806 = vpack.c.b16 %v703, %v702
  %v807 = vpack.c.b16 %v705, %v704
  %v808 = vpack.c.b16 %v707, %v706
  %v809 = vpack.c.b16 %v709, %v708
  %v810 = vpack.c.b16 %v711, %v710
  %v811 = vpack.c.b16 %v713, %v712
  %v812 = vpack.c.b16 %v715, %v714
  %v813 = vpack.c.b16 %v717, %v716
  %v814 = vpack.c.b16 %v719, %v718
  %v815 = vpack.c.b16 %v721, %v720
  %v816 = vpack.c.b16 %v723, %v722
  %v817 = vpack.c.b16 %v725, %v724
  %v818 = vpack.c.b16 %v727, %v726
  %v819 = vpack.c.b16 %v729, %v728
  %v820 = vpack.c.b16 %v731, %v730
  %v821 = vpack.c.b16 %v733, %v732
  %v822 = vpack.c.b16 %v735, %v734
  %v823 = vpack.c.b16 %v737, %v736
  %v824 = vpack.c.b16 %v739, %v738
  %v825 = vpack.c.b16 %v741, %v740
  %v826 = vpack.c.b16 %v743, %v742
  %v827 = vpack.c.b16 %v745, %v744
  %v828 = vpack.c.b16 %v747, %v746
  %v829 = vpack.c.b16 %v749, %v748
  %v830 = vpack.c.b16 %v751, %v750
  %v831 = vpack.c.b16 %v753, %v752
  %v832 = vpack.c.b16 %v755, %v754
  %v833 = vpack.c.b16 %v757, %v756
  %v834 = vpack.c.b16 %v759, %v758
  %v835 = vpack.c.b16 %v761, %v760
  %v836 = vpack.c.b16 %v763, %v762
  %v837 = vpack.c.b16 %v765, %v764
  %v838 = vpack.c.b16 %v767, %v766
  %v839 = vpack.c.b16 %v769, %v768
  %v840 = vpack.c.b16 %v771, %v770
  %v841 = vpack.c.b16 %v773, %v772
  %v842 = vpack.c.b16 %v775, %v774
  %v843 = vpack.c.b16 %v777, %v776
  %v844 = vpack.c.b16 %v779, %v778
  %v845 = vpack.c.b16 %v781, %v780
  %910 = vmatprep.subr.bf16.mxu0 0
  %911 = vmatpush1.bf16.msra.mxu0 %v789
  %912 = vmatprep.subr.bf16.mxu0 0
  %913 = vmatpush1.bf16.msra.mxu0 %v788
  %914 = vmatprep.subr.bf16.mxu0 0
  %915 = vmatpush1.bf16.msra.mxu0 %v787
  %916 = vmatprep.subr.bf16.mxu0 0
  %917 = vmatpush1.bf16.msra.mxu0 %v786
  %918 = vmatprep.subr.bf16.mxu0 0
  %919 = vmatpush1.bf16.msra.mxu0 %v785
  %920 = vmatprep.subr.bf16.mxu0 0
  %921 = vmatpush1.bf16.msra.mxu0 %v784
  %922 = vmatprep.subr.bf16.mxu0 0
  %923 = vmatpush1.bf16.msra.mxu0 %v783
  %924 = vmatprep.subr.bf16.mxu0 0
  %925 = vmatpush1.bf16.msra.mxu0 %v782
  %926 = vmatprep.subr.bf16.mxu0 0
  %927 = vmatpush2.bf16.msra.mxu0 %v797
  %928 = vmatprep.subr.bf16.mxu0 0
  %929 = vmatpush2.bf16.msra.mxu0 %v796
  %930 = vmatprep.subr.bf16.mxu0 0
  %931 = vmatpush2.bf16.msra.mxu0 %v795
  %932 = vmatprep.subr.bf16.mxu0 0
  %933 = vmatpush2.bf16.msra.mxu0 %v794
  %934 = vmatprep.subr.bf16.mxu0 0
  %935 = vmatpush2.bf16.msra.mxu0 %v793
  %936 = vmatprep.subr.bf16.mxu0 0
  %937 = vmatpush2.bf16.msra.mxu0 %v792
  %938 = vmatprep.subr.bf16.mxu0 0
  %939 = vmatpush2.bf16.msra.mxu0 %v791
  %940 = vmatprep.subr.bf16.mxu0 0
  %941 = vmatpush2.bf16.msra.mxu0 %v790
  %942 = vmatprep.mubr.bf16.mxu0 %v399
  %943 = vmatmul.mubr.bf16.gmra.mxu0 %v398
  %v944 = vpop.f32.mrf.mxu0
  %v945 = vadd.f32 0.0, %v944
  %v946 = vpop.f32.mrf.mxu0
  %v947 = vpop.f32.mrf.mxu0
  %v948 = vadd.f32 0.0, %v947
  %v949 = vpop.f32.mrf.mxu0
  %950 = vmatprep.mubr.bf16.mxu0 %v407
  %951 = vmatmul.mubr.bf16.gmra.mxu0 %v406
  %v952 = vpop.f32.mrf.mxu0
  %v953 = vadd.f32 0.0, %v952
  %v954 = vpop.f32.mrf.mxu0
  %v955 = vpop.f32.mrf.mxu0
  %v956 = vadd.f32 0.0, %v955
  %v957 = vpop.f32.mrf.mxu0
  %958 = vmatprep.mubr.bf16.mxu0 %v415
  %959 = vmatmul.mubr.bf16.gmra.mxu0 %v414
  %v960 = vpop.f32.mrf.mxu0
  %v961 = vadd.f32 0.0, %v960
  %v962 = vpop.f32.mrf.mxu0
  %v963 = vpop.f32.mrf.mxu0
  %v964 = vadd.f32 0.0, %v963
  %v965 = vpop.f32.mrf.mxu0
  %966 = vmatprep.mubr.bf16.mxu0 %v423
  %967 = vmatmul.mubr.bf16.gmra.mxu0 %v422
  %v968 = vpop.f32.mrf.mxu0
  %v969 = vadd.f32 0.0, %v968
  %v970 = vpop.f32.mrf.mxu0
  %v971 = vpop.f32.mrf.mxu0
  %v972 = vadd.f32 0.0, %v971
  %v973 = vpop.f32.mrf.mxu0
  %974 = vmatprep.mubr.bf16.mxu0 %v431
  %975 = vmatmul.mubr.bf16.gmra.mxu0 %v430
  %v976 = vpop.f32.mrf.mxu0
  %v977 = vadd.f32 0.0, %v976
  %v978 = vpop.f32.mrf.mxu0
  %v979 = vpop.f32.mrf.mxu0
  %v980 = vadd.f32 0.0, %v979
  %v981 = vpop.f32.mrf.mxu0
  %982 = vmatprep.mubr.bf16.mxu0 %v439
  %983 = vmatmul.mubr.bf16.gmra.mxu0 %v438
  %v984 = vpop.f32.mrf.mxu0
  %v985 = vadd.f32 0.0, %v984
  %v986 = vpop.f32.mrf.mxu0
  %v987 = vpop.f32.mrf.mxu0
  %v988 = vadd.f32 0.0, %v987
  %v989 = vpop.f32.mrf.mxu0
  %990 = vmatprep.mubr.bf16.mxu0 %v447
  %991 = vmatmul.mubr.bf16.gmra.mxu0 %v446
  %v992 = vpop.f32.mrf.mxu0
  %v993 = vadd.f32 0.0, %v992
  %v994 = vpop.f32.mrf.mxu0
  %v995 = vpop.f32.mrf.mxu0
  %v996 = vadd.f32 0.0, %v995
  %v997 = vpop.f32.mrf.mxu0
  %998 = vmatprep.mubr.bf16.mxu0 %v455
  %999 = vmatmul.mubr.bf16.gmra.mxu0 %v454
  %v1000 = vpop.f32.mrf.mxu0
  %v1001 = vadd.f32 0.0, %v1000
  %v1002 = vpop.f32.mrf.mxu0
  %v1003 = vpop.f32.mrf.mxu0
  %v1004 = vadd.f32 0.0, %v1003
  %v1005 = vpop.f32.mrf.mxu0
  %1006 = vdwg.mxu0
  %1007 = vmatprep.subr.bf16.mxu0 0
  %1008 = vmatpush1.bf16.msra.mxu0 %v805
  %1009 = vmatprep.subr.bf16.mxu0 0
  %1010 = vmatpush1.bf16.msra.mxu0 %v804
  %1011 = vmatprep.subr.bf16.mxu0 0
  %1012 = vmatpush1.bf16.msra.mxu0 %v803
  %1013 = vmatprep.subr.bf16.mxu0 0
  %1014 = vmatpush1.bf16.msra.mxu0 %v802
  %1015 = vmatprep.subr.bf16.mxu0 0
  %1016 = vmatpush1.bf16.msra.mxu0 %v801
  %1017 = vmatprep.subr.bf16.mxu0 0
  %1018 = vmatpush1.bf16.msra.mxu0 %v800
  %1019 = vmatprep.subr.bf16.mxu0 0
  %1020 = vmatpush1.bf16.msra.mxu0 %v799
  %1021 = vmatprep.subr.bf16.mxu0 0
  %1022 = vmatpush1.bf16.msra.mxu0 %v798
  %1023 = vmatprep.subr.bf16.mxu0 0
  %1024 = vmatpush2.bf16.msra.mxu0 %v813
  %1025 = vmatprep.subr.bf16.mxu0 0
  %1026 = vmatpush2.bf16.msra.mxu0 %v812
  %1027 = vmatprep.subr.bf16.mxu0 0
  %1028 = vmatpush2.bf16.msra.mxu0 %v811
  %1029 = vmatprep.subr.bf16.mxu0 0
  %1030 = vmatpush2.bf16.msra.mxu0 %v810
  %1031 = vmatprep.subr.bf16.mxu0 0
  %1032 = vmatpush2.bf16.msra.mxu0 %v809
  %1033 = vmatprep.subr.bf16.mxu0 0
  %1034 = vmatpush2.bf16.msra.mxu0 %v808
  %1035 = vmatprep.subr.bf16.mxu0 0
  %1036 = vmatpush2.bf16.msra.mxu0 %v807
  %1037 = vmatprep.subr.bf16.mxu0 0
  %1038 = vmatpush2.bf16.msra.mxu0 %v806
  %1039 = vmatprep.mubr.bf16.mxu0 %v401
  %1040 = vmatmul.mubr.bf16.gmra.mxu0 %v400
  %v1041 = vpop.f32.mrf.mxu0
  %v1042 = vadd.f32 %v945, %v1041
  %v1043 = vpop.f32.mrf.mxu0
  %v1044 = vpop.f32.mrf.mxu0
  %v1045 = vadd.f32 %v948, %v1044
  %v1046 = vpop.f32.mrf.mxu0
  %1047 = vmatprep.mubr.bf16.mxu0 %v409
  %1048 = vmatmul.mubr.bf16.gmra.mxu0 %v408
  %v1049 = vpop.f32.mrf.mxu0
  %v1050 = vadd.f32 %v953, %v1049
  %v1051 = vpop.f32.mrf.mxu0
  %v1052 = vpop.f32.mrf.mxu0
  %v1053 = vadd.f32 %v956, %v1052
  %v1054 = vpop.f32.mrf.mxu0
  %1055 = vmatprep.mubr.bf16.mxu0 %v417
  %1056 = vmatmul.mubr.bf16.gmra.mxu0 %v416
  %v1057 = vpop.f32.mrf.mxu0
  %v1058 = vadd.f32 %v961, %v1057
  %v1059 = vpop.f32.mrf.mxu0
  %v1060 = vpop.f32.mrf.mxu0
  %v1061 = vadd.f32 %v964, %v1060
  %v1062 = vpop.f32.mrf.mxu0
  %1063 = vmatprep.mubr.bf16.mxu0 %v425
  %1064 = vmatmul.mubr.bf16.gmra.mxu0 %v424
  %v1065 = vpop.f32.mrf.mxu0
  %v1066 = vadd.f32 %v969, %v1065
  %v1067 = vpop.f32.mrf.mxu0
  %v1068 = vpop.f32.mrf.mxu0
  %v1069 = vadd.f32 %v972, %v1068
  %v1070 = vpop.f32.mrf.mxu0
  %1071 = vmatprep.mubr.bf16.mxu0 %v433
  %1072 = vmatmul.mubr.bf16.gmra.mxu0 %v432
  %v1073 = vpop.f32.mrf.mxu0
  %v1074 = vadd.f32 %v977, %v1073
  %v1075 = vpop.f32.mrf.mxu0
  %v1076 = vpop.f32.mrf.mxu0
  %v1077 = vadd.f32 %v980, %v1076
  %v1078 = vpop.f32.mrf.mxu0
  %1079 = vmatprep.mubr.bf16.mxu0 %v441
  %1080 = vmatmul.mubr.bf16.gmra.mxu0 %v440
  %v1081 = vpop.f32.mrf.mxu0
  %v1082 = vadd.f32 %v985, %v1081
  %v1083 = vpop.f32.mrf.mxu0
  %v1084 = vpop.f32.mrf.mxu0
  %v1085 = vadd.f32 %v988, %v1084
  %v1086 = vpop.f32.mrf.mxu0
  %1087 = vmatprep.mubr.bf16.mxu0 %v449
  %1088 = vmatmul.mubr.bf16.gmra.mxu0 %v448
  %v1089 = vpop.f32.mrf.mxu0
  %v1090 = vadd.f32 %v993, %v1089
  %v1091 = vpop.f32.mrf.mxu0
  %v1092 = vpop.f32.mrf.mxu0
  %v1093 = vadd.f32 %v996, %v1092
  %v1094 = vpop.f32.mrf.mxu0
  %1095 = vmatprep.mubr.bf16.mxu0 %v457
  %1096 = vmatmul.mubr.bf16.gmra.mxu0 %v456
  %v1097 = vpop.f32.mrf.mxu0
  %v1098 = vadd.f32 %v1001, %v1097
  %v1099 = vpop.f32.mrf.mxu0
  %v1100 = vpop.f32.mrf.mxu0
  %v1101 = vadd.f32 %v1004, %v1100
  %v1102 = vpop.f32.mrf.mxu0
  %1103 = vdwg.mxu0
  %1104 = vmatprep.subr.bf16.mxu0 0
  %1105 = vmatpush1.bf16.msra.mxu0 %v821
  %1106 = vmatprep.subr.bf16.mxu0 0
  %1107 = vmatpush1.bf16.msra.mxu0 %v820
  %1108 = vmatprep.subr.bf16.mxu0 0
  %1109 = vmatpush1.bf16.msra.mxu0 %v819
  %1110 = vmatprep.subr.bf16.mxu0 0
  %1111 = vmatpush1.bf16.msra.mxu0 %v818
  %1112 = vmatprep.subr.bf16.mxu0 0
  %1113 = vmatpush1.bf16.msra.mxu0 %v817
  %1114 = vmatprep.subr.bf16.mxu0 0
  %1115 = vmatpush1.bf16.msra.mxu0 %v816
  %1116 = vmatprep.subr.bf16.mxu0 0
  %1117 = vmatpush1.bf16.msra.mxu0 %v815
  %1118 = vmatprep.subr.bf16.mxu0 0
  %1119 = vmatpush1.bf16.msra.mxu0 %v814
  %1120 = vmatprep.subr.bf16.mxu0 0
  %1121 = vmatpush2.bf16.msra.mxu0 %v829
  %1122 = vmatprep.subr.bf16.mxu0 0
  %1123 = vmatpush2.bf16.msra.mxu0 %v828
  %1124 = vmatprep.subr.bf16.mxu0 0
  %1125 = vmatpush2.bf16.msra.mxu0 %v827
  %1126 = vmatprep.subr.bf16.mxu0 0
  %1127 = vmatpush2.bf16.msra.mxu0 %v826
  %1128 = vmatprep.subr.bf16.mxu0 0
  %1129 = vmatpush2.bf16.msra.mxu0 %v825
  %1130 = vmatprep.subr.bf16.mxu0 0
  %1131 = vmatpush2.bf16.msra.mxu0 %v824
  %1132 = vmatprep.subr.bf16.mxu0 0
  %1133 = vmatpush2.bf16.msra.mxu0 %v823
  %1134 = vmatprep.subr.bf16.mxu0 0
  %1135 = vmatpush2.bf16.msra.mxu0 %v822
  %1136 = vmatprep.mubr.bf16.mxu0 %v403
  %1137 = vmatmul.mubr.bf16.gmra.mxu0 %v402
  %v1138 = vpop.f32.mrf.mxu0
  %v1139 = vadd.f32 %v1042, %v1138
  %v1140 = vpop.f32.mrf.mxu0
  %v1141 = vpop.f32.mrf.mxu0
  %v1142 = vadd.f32 %v1045, %v1141
  %v1143 = vpop.f32.mrf.mxu0
  %1144 = vmatprep.mubr.bf16.mxu0 %v411
  %1145 = vmatmul.mubr.bf16.gmra.mxu0 %v410
  %v1146 = vpop.f32.mrf.mxu0
  %v1147 = vadd.f32 %v1050, %v1146
  %v1148 = vpop.f32.mrf.mxu0
  %v1149 = vpop.f32.mrf.mxu0
  %v1150 = vadd.f32 %v1053, %v1149
  %v1151 = vpop.f32.mrf.mxu0
  %1152 = vmatprep.mubr.bf16.mxu0 %v419
  %1153 = vmatmul.mubr.bf16.gmra.mxu0 %v418
  %v1154 = vpop.f32.mrf.mxu0
  %v1155 = vadd.f32 %v1058, %v1154
  %v1156 = vpop.f32.mrf.mxu0
  %v1157 = vpop.f32.mrf.mxu0
  %v1158 = vadd.f32 %v1061, %v1157
  %v1159 = vpop.f32.mrf.mxu0
  %1160 = vmatprep.mubr.bf16.mxu0 %v427
  %1161 = vmatmul.mubr.bf16.gmra.mxu0 %v426
  %v1162 = vpop.f32.mrf.mxu0
  %v1163 = vadd.f32 %v1066, %v1162
  %v1164 = vpop.f32.mrf.mxu0
  %v1165 = vpop.f32.mrf.mxu0
  %v1166 = vadd.f32 %v1069, %v1165
  %v1167 = vpop.f32.mrf.mxu0
  %1168 = vmatprep.mubr.bf16.mxu0 %v435
  %1169 = vmatmul.mubr.bf16.gmra.mxu0 %v434
  %v1170 = vpop.f32.mrf.mxu0
  %v1171 = vadd.f32 %v1074, %v1170
  %v1172 = vpop.f32.mrf.mxu0
  %v1173 = vpop.f32.mrf.mxu0
  %v1174 = vadd.f32 %v1077, %v1173
  %v1175 = vpop.f32.mrf.mxu0
  %1176 = vmatprep.mubr.bf16.mxu0 %v443
  %1177 = vmatmul.mubr.bf16.gmra.mxu0 %v442
  %v1178 = vpop.f32.mrf.mxu0
  %v1179 = vadd.f32 %v1082, %v1178
  %v1180 = vpop.f32.mrf.mxu0
  %v1181 = vpop.f32.mrf.mxu0
  %v1182 = vadd.f32 %v1085, %v1181
  %v1183 = vpop.f32.mrf.mxu0
  %1184 = vmatprep.mubr.bf16.mxu0 %v451
  %1185 = vmatmul.mubr.bf16.gmra.mxu0 %v450
  %v1186 = vpop.f32.mrf.mxu0
  %v1187 = vadd.f32 %v1090, %v1186
  %v1188 = vpop.f32.mrf.mxu0
  %v1189 = vpop.f32.mrf.mxu0
  %v1190 = vadd.f32 %v1093, %v1189
  %v1191 = vpop.f32.mrf.mxu0
  %1192 = vmatprep.mubr.bf16.mxu0 %v459
  %1193 = vmatmul.mubr.bf16.gmra.mxu0 %v458
  %v1194 = vpop.f32.mrf.mxu0
  %v1195 = vadd.f32 %v1098, %v1194
  %v1196 = vpop.f32.mrf.mxu0
  %v1197 = vpop.f32.mrf.mxu0
  %v1198 = vadd.f32 %v1101, %v1197
  %v1199 = vpop.f32.mrf.mxu0
  %1200 = vdwg.mxu0
  %1201 = vmatprep.subr.bf16.mxu0 0
  %1202 = vmatpush1.bf16.msra.mxu0 %v837
  %1203 = vmatprep.subr.bf16.mxu0 0
  %1204 = vmatpush1.bf16.msra.mxu0 %v836
  %1205 = vmatprep.subr.bf16.mxu0 0
  %1206 = vmatpush1.bf16.msra.mxu0 %v835
  %1207 = vmatprep.subr.bf16.mxu0 0
  %1208 = vmatpush1.bf16.msra.mxu0 %v834
  %1209 = vmatprep.subr.bf16.mxu0 0
  %1210 = vmatpush1.bf16.msra.mxu0 %v833
  %1211 = vmatprep.subr.bf16.mxu0 0
  %1212 = vmatpush1.bf16.msra.mxu0 %v832
  %1213 = vmatprep.subr.bf16.mxu0 0
  %1214 = vmatpush1.bf16.msra.mxu0 %v831
  %1215 = vmatprep.subr.bf16.mxu0 0
  %1216 = vmatpush1.bf16.msra.mxu0 %v830
  %1217 = vmatprep.subr.bf16.mxu0 0
  %1218 = vmatpush2.bf16.msra.mxu0 %v845
  %1219 = vmatprep.subr.bf16.mxu0 0
  %1220 = vmatpush2.bf16.msra.mxu0 %v844
  %1221 = vmatprep.subr.bf16.mxu0 0
  %1222 = vmatpush2.bf16.msra.mxu0 %v843
  %1223 = vmatprep.subr.bf16.mxu0 0
  %1224 = vmatpush2.bf16.msra.mxu0 %v842
  %1225 = vmatprep.subr.bf16.mxu0 0
  %1226 = vmatpush2.bf16.msra.mxu0 %v841
  %1227 = vmatprep.subr.bf16.mxu0 0
  %1228 = vmatpush2.bf16.msra.mxu0 %v840
  %1229 = vmatprep.subr.bf16.mxu0 0
  %1230 = vmatpush2.bf16.msra.mxu0 %v839
  %1231 = vmatprep.subr.bf16.mxu0 0
  %1232 = vmatpush2.bf16.msra.mxu0 %v838
  %1233 = vmatprep.mubr.bf16.mxu0 %v405
  %1234 = vmatmul.mubr.bf16.gmra.mxu0 %v404
  %v1235 = vpop.f32.mrf.mxu0
  %v1236 = vadd.f32 %v1139, %v1235
  %v1237 = vpop.f32.mrf.mxu0
  %v1238 = vpop.f32.mrf.mxu0
  %v1239 = vadd.f32 %v1142, %v1238
  %v1240 = vpop.f32.mrf.mxu0
  %1241 = vmatprep.mubr.bf16.mxu0 %v413
  %1242 = vmatmul.mubr.bf16.gmra.mxu0 %v412
  %v1243 = vpop.f32.mrf.mxu0
  %v1244 = vadd.f32 %v1147, %v1243
  %v1245 = vpop.f32.mrf.mxu0
  %v1246 = vpop.f32.mrf.mxu0
  %v1247 = vadd.f32 %v1150, %v1246
  %v1248 = vpop.f32.mrf.mxu0
  %1249 = vmatprep.mubr.bf16.mxu0 %v421
  %1250 = vmatmul.mubr.bf16.gmra.mxu0 %v420
  %v1251 = vpop.f32.mrf.mxu0
  %v1252 = vadd.f32 %v1155, %v1251
  %v1253 = vpop.f32.mrf.mxu0
  %v1254 = vpop.f32.mrf.mxu0
  %v1255 = vadd.f32 %v1158, %v1254
  %v1256 = vpop.f32.mrf.mxu0
  %1257 = vmatprep.mubr.bf16.mxu0 %v429
  %1258 = vmatmul.mubr.bf16.gmra.mxu0 %v428
  %v1259 = vpop.f32.mrf.mxu0
  %v1260 = vadd.f32 %v1163, %v1259
  %v1261 = vpop.f32.mrf.mxu0
  %v1262 = vpop.f32.mrf.mxu0
  %v1263 = vadd.f32 %v1166, %v1262
  %v1264 = vpop.f32.mrf.mxu0
  %1265 = vmatprep.mubr.bf16.mxu0 %v437
  %1266 = vmatmul.mubr.bf16.gmra.mxu0 %v436
  %v1267 = vpop.f32.mrf.mxu0
  %v1268 = vadd.f32 %v1171, %v1267
  %v1269 = vpop.f32.mrf.mxu0
  %v1270 = vpop.f32.mrf.mxu0
  %v1271 = vadd.f32 %v1174, %v1270
  %v1272 = vpop.f32.mrf.mxu0
  %1273 = vmatprep.mubr.bf16.mxu0 %v445
  %1274 = vmatmul.mubr.bf16.gmra.mxu0 %v444
  %v1275 = vpop.f32.mrf.mxu0
  %v1276 = vadd.f32 %v1179, %v1275
  %v1277 = vpop.f32.mrf.mxu0
  %v1278 = vpop.f32.mrf.mxu0
  %v1279 = vadd.f32 %v1182, %v1278
  %v1280 = vpop.f32.mrf.mxu0
  %1281 = vmatprep.mubr.bf16.mxu0 %v453
  %1282 = vmatmul.mubr.bf16.gmra.mxu0 %v452
  %v1283 = vpop.f32.mrf.mxu0
  %v1284 = vadd.f32 %v1187, %v1283
  %v1285 = vpop.f32.mrf.mxu0
  %v1286 = vpop.f32.mrf.mxu0
  %v1287 = vadd.f32 %v1190, %v1286
  %v1288 = vpop.f32.mrf.mxu0
  %1289 = vmatprep.mubr.bf16.mxu0 %v461
  %1290 = vmatmul.mubr.bf16.gmra.mxu0 %v460
  %v1291 = vpop.f32.mrf.mxu0
  %v1292 = vadd.f32 %v1195, %v1291
  %v1293 = vpop.f32.mrf.mxu0
  %v1294 = vpop.f32.mrf.mxu0
  %v1295 = vadd.f32 %v1198, %v1294
  %v1296 = vpop.f32.mrf.mxu0
  %1297 = vdwg.mxu0
  %1298 = vst [vmem:[%s2] sm:$0xff] %v1236
  %1299 = vst [vmem:[%s2 + $0x8] sm:$0xff] %v1239
  %1300 = vst [vmem:[%s2 + $0x10] sm:$0xff] %v1244
  %1301 = vst [vmem:[%s2 + $0x18] sm:$0xff] %v1247
  %1302 = vst [vmem:[%s2 + $0x20] sm:$0xff] %v1252
  %1303 = vst [vmem:[%s2 + $0x28] sm:$0xff] %v1255
  %1304 = vst [vmem:[%s2 + $0x30] sm:$0xff] %v1260
  %1305 = vst [vmem:[%s2 + $0x38] sm:$0xff] %v1263
  %1306 = vst [vmem:[%s2 + $0x40] sm:$0xff] %v1268
  %1307 = vst [vmem:[%s2 + $0x48] sm:$0xff] %v1271
  %1308 = vst [vmem:[%s2 + $0x50] sm:$0xff] %v1276
  %1309 = vst [vmem:[%s2 + $0x58] sm:$0xff] %v1279
  %1310 = vst [vmem:[%s2 + $0x60] sm:$0xff] %v1284
  %1311 = vst [vmem:[%s2 + $0x68] sm:$0xff] %v1287
  %1312 = vst [vmem:[%s2 + $0x70] sm:$0xff] %v1292
  %1313 = vst [vmem:[%s2 + $0x78] sm:$0xff] %v1295
  %v1314 = vadd.f32 %v1236, %v1239
  %v1315 = vadd.f32 %v1314, %v1244
  %v1316 = vadd.f32 %v1315, %v1247
  %v1317 = vadd.f32 %v1316, %v1252
  %v1318 = vadd.f32 %v1317, %v1255
  %v1319 = vadd.f32 %v1318, %v1260
  %v1320 = vadd.f32 %v1319, %v1263
  %v1321 = vadd.f32 %v1320, %v1268
  %v1322 = vadd.f32 %v1321, %v1271
  %v1323 = vadd.f32 %v1322, %v1276
  %v1324 = vadd.f32 %v1323, %v1279
  %v1325 = vadd.f32 %v1324, %v1284
  %v1326 = vadd.f32 %v1325, %v1287
  %v1327 = vadd.f32 %v1326, %v1292
  %v1328 = vadd.f32 %v1327, %v1295
  %v1329 = vrot.slane %v1328, 4
  %v1330 = vadd.f32 %v1328, %v1329
  %v1331 = vrot.slane %v1330, 2
  %v1332 = vadd.f32 %v1330, %v1331
  %v1333 = vrot.slane %v1332, 1
  %v1334 = vadd.f32 %v1332, %v1333
  %v1335 = vmul.f32 %v1236, %v1236
  %v1336 = vmul.f32 %v1239, %v1239
  %v1337 = vmul.f32 %v1244, %v1244
  %v1338 = vmul.f32 %v1247, %v1247
  %v1339 = vmul.f32 %v1252, %v1252
  %v1340 = vmul.f32 %v1255, %v1255
  %v1341 = vmul.f32 %v1260, %v1260
  %v1342 = vmul.f32 %v1263, %v1263
  %v1343 = vmul.f32 %v1268, %v1268
  %v1344 = vmul.f32 %v1271, %v1271
  %v1345 = vmul.f32 %v1276, %v1276
  %v1346 = vmul.f32 %v1279, %v1279
  %v1347 = vmul.f32 %v1284, %v1284
  %v1348 = vmul.f32 %v1287, %v1287
  %v1349 = vmul.f32 %v1292, %v1292
  %v1350 = vmul.f32 %v1295, %v1295
  %v1351 = vadd.f32 %v1335, %v1336
  %v1352 = vadd.f32 %v1351, %v1337
  %v1353 = vadd.f32 %v1352, %v1338
  %v1354 = vadd.f32 %v1353, %v1339
  %v1355 = vadd.f32 %v1354, %v1340
  %v1356 = vadd.f32 %v1355, %v1341
  %v1357 = vadd.f32 %v1356, %v1342
  %v1358 = vadd.f32 %v1357, %v1343
  %v1359 = vadd.f32 %v1358, %v1344
  %v1360 = vadd.f32 %v1359, %v1345
  %v1361 = vadd.f32 %v1360, %v1346
  %v1362 = vadd.f32 %v1361, %v1347
  %v1363 = vadd.f32 %v1362, %v1348
  %v1364 = vadd.f32 %v1363, %v1349
  %v1365 = vadd.f32 %v1364, %v1350
  %v1366 = vrot.slane %v1365, 4
  %v1367 = vadd.f32 %v1365, %v1366
  %v1368 = vrot.slane %v1367, 2
  %v1369 = vadd.f32 %v1367, %v1368
  %v1370 = vrot.slane %v1369, 1
  %v1371 = vadd.f32 %v1369, %v1370
  %vm1372 = vcmask 1040384
  %v1373 = vsel %vm1372, %v1334, %v1371
  %1374 = vst [vmem:[%s3] sm:$0x3] %v1373
  // Predicated region
  $region10: #{discriminator_forward.11} parent=0 // pred_check
    _
  $region11: #{discriminator_forward.11} parent=0 // pred_check_branch
    %1376 = sbr.rel (0) target = $region13
  $region12: #{discriminator_forward.11} parent=0 // pred_region
    _
  $region13: #{discriminator_forward.11} parent=0 // pred_fallthru
    _
  // Predicated region
  $region14: #{discriminator_forward.11} parent=0 // pred_check
    _
  $region15: #{discriminator_forward.11} parent=0 // pred_check_branch
    %1378 = sbr.rel (0) target = $region17
  $region16: #{discriminator_forward.11} parent=0 // pred_region
    _
  $region17: #{discriminator_forward.11} parent=0 // pred_fallthru
    _
  // Predicated region
  $region18: #{discriminator_forward.11} parent=0 // pred_check
    _
  $region19: #{discriminator_forward.11} parent=0 // pred_check_branch
    %1380 = sbr.rel (0) target = $region21
  $region20: #{discriminator_forward.11} parent=0 // pred_region
    _
  $region21: #{discriminator_forward.11} parent=0 // pred_fallthru
    _
  // Predicated region
  $region22: #{discriminator_forward.11} parent=0 // pred_check
    _
  $region23: #{discriminator_forward.11} parent=0 // pred_check_branch
    %1382 = sbr.rel (0) target = $region25
  $region24: #{discriminator_forward.11} parent=0 // pred_region
    _
  $region25: #{discriminator_forward.11} parent=0 // pred_fallthru
    _

// kernel: discriminator_forward.12
$region0: #{discriminator_forward.12}
  #allocation0 [shape = 'u32[]', space=smem, size = 0x4, offset = 0x4, fixed_abs, tag = 'smem constant byte address 0x4 - core index']
  #allocation1 [shape = 'u32[144,128]{1,0:T(1,128)}', space=vmem, size = 0x12000, scoped, tag = 'internal scratch']
  %s0 = inlined_call_operand.vmem [shape: f32[128,128], index: 0, kind: input, shape index: {}]
  %s1 = inlined_call_operand.vmem [shape: f32[1,128], index: 1, kind: input, shape index: {}]
  %s2 = inlined_call_operand.vmem [shape: f32[1,128], index: 2, kind: input, shape index: {}]
  %s3 = inlined_call_operand.vmem [shape: bf16[128,128], index: 3, kind: output, shape index: {}]
  %s4 = sld [smem:[#allocation0]]
  $region22: #{discriminator_forward.12} parent=0
    _
  %s6 = ssub.s32 1, %s4
  %s7 = scalar_select 0, %s6, %s4
  // Predicated region
  $region2: #{discriminator_forward.12} parent=0 // pred_check
    _
  $region3: #{discriminator_forward.12} parent=0 // pred_check_branch
    %9 = sbr.rel (0) target = $region5
  $region4: #{discriminator_forward.12} parent=0 // pred_region
    _
  $region5: #{discriminator_forward.12} parent=0 // pred_fallthru
    _
  // Predicated region
  $region6: #{discriminator_forward.12} parent=0 // pred_check
    _
  $region7: #{discriminator_forward.12} parent=0 // pred_check_branch
    %11 = sbr.rel (0) target = $region9
  $region8: #{discriminator_forward.12} parent=0 // pred_region
    _
  $region9: #{discriminator_forward.12} parent=0 // pred_fallthru
    _
  // Predicated region
  $region10: #{discriminator_forward.12} parent=0 // pred_check
    _
  $region11: #{discriminator_forward.12} parent=0 // pred_check_branch
    %13 = sbr.rel (0) target = $region13
  $region12: #{discriminator_forward.12} parent=0 // pred_region
    _
  $region13: #{discriminator_forward.12} parent=0 // pred_fallthru
    _
  %v14 = vld [vmem:[%s0] sm:$0xff]
  %v15 = vld [vmem:[%s0 + $0x8] sm:$0xff]
  %v16 = vld [vmem:[%s0 + $0x10] sm:$0xff]
  %v17 = vld [vmem:[%s0 + $0x18] sm:$0xff]
  %v18 = vld [vmem:[%s0 + $0x20] sm:$0xff]
  %v19 = vld [vmem:[%s0 + $0x28] sm:$0xff]
  %v20 = vld [vmem:[%s0 + $0x30] sm:$0xff]
  %v21 = vld [vmem:[%s0 + $0x38] sm:$0xff]
  %v22 = vld [vmem:[%s0 + $0x40] sm:$0xff]
  %v23 = vld [vmem:[%s0 + $0x48] sm:$0xff]
  %v24 = vld [vmem:[%s0 + $0x50] sm:$0xff]
  %v25 = vld [vmem:[%s0 + $0x58] sm:$0xff]
  %v26 = vld [vmem:[%s0 + $0x60] sm:$0xff]
  %v27 = vld [vmem:[%s0 + $0x68] sm:$0xff]
  %v28 = vld [vmem:[%s0 + $0x70] sm:$0xff]
  %v29 = vld [vmem:[%s0 + $0x78] sm:$0xff]
  %v30 = vld [vmem:[%s1] sm:$0x1]
  %v32 = vlaneseq
  %v33 = vshrl.u32 %v32, 7
  %v34 = vsub.s32 0, %v33
  %v35 = vrot.slane %v30, %v34
  %v37 = vmul.f32 %v14, %v35
  %v38 = vmul.f32 %v15, %v35
  %v39 = vmul.f32 %v16, %v35
  %v40 = vmul.f32 %v17, %v35
  %v41 = vmul.f32 %v18, %v35
  %v42 = vmul.f32 %v19, %v35
  %v43 = vmul.f32 %v20, %v35
  %v44 = vmul.f32 %v21, %v35
  %v45 = vmul.f32 %v22, %v35
  %v46 = vmul.f32 %v23, %v35
  %v47 = vmul.f32 %v24, %v35
  %v48 = vmul.f32 %v25, %v35
  %v49 = vmul.f32 %v26, %v35
  %v50 = vmul.f32 %v27, %v35
  %v51 = vmul.f32 %v28, %v35
  %v52 = vmul.f32 %v29, %v35
  %v53 = vld [vmem:[%s2] sm:$0x1]
  %v55 = vlaneseq
  %v56 = vshrl.u32 %v55, 7
  %v57 = vsub.s32 0, %v56
  %v58 = vrot.slane %v53, %v57
  %v60 = vadd.f32 %v37, %v58
  %v61 = vadd.f32 %v38, %v58
  %v62 = vadd.f32 %v39, %v58
  %v63 = vadd.f32 %v40, %v58
  %v64 = vadd.f32 %v41, %v58
  %v65 = vadd.f32 %v42, %v58
  %v66 = vadd.f32 %v43, %v58
  %v67 = vadd.f32 %v44, %v58
  %v68 = vadd.f32 %v45, %v58
  %v69 = vadd.f32 %v46, %v58
  %v70 = vadd.f32 %v47, %v58
  %v71 = vadd.f32 %v48, %v58
  %v72 = vadd.f32 %v49, %v58
  %v73 = vadd.f32 %v50, %v58
  %v74 = vadd.f32 %v51, %v58
  %v75 = vadd.f32 %v52, %v58
  %vm76 = vcmp.ge.f32.partialorder %v60, 0.0
  %vm77 = vcmp.ge.f32.partialorder %v61, 0.0
  %vm78 = vcmp.ge.f32.partialorder %v62, 0.0
  %vm79 = vcmp.ge.f32.partialorder %v63, 0.0
  %vm80 = vcmp.ge.f32.partialorder %v64, 0.0
  %vm81 = vcmp.ge.f32.partialorder %v65, 0.0
  %vm82 = vcmp.ge.f32.partialorder %v66, 0.0
  %vm83 = vcmp.ge.f32.partialorder %v67, 0.0
  %vm84 = vcmp.ge.f32.partialorder %v68, 0.0
  %vm85 = vcmp.ge.f32.partialorder %v69, 0.0
  %vm86 = vcmp.ge.f32.partialorder %v70, 0.0
  %vm87 = vcmp.ge.f32.partialorder %v71, 0.0
  %vm88 = vcmp.ge.f32.partialorder %v72, 0.0
  %vm89 = vcmp.ge.f32.partialorder %v73, 0.0
  %vm90 = vcmp.ge.f32.partialorder %v74, 0.0
  %vm91 = vcmp.ge.f32.partialorder %v75, 0.0
  %v92 = vmul.f32 %v60, 0.2
  %v93 = vmul.f32 %v61, 0.2
  %v94 = vmul.f32 %v62, 0.2
  %v95 = vmul.f32 %v63, 0.2
  %v96 = vmul.f32 %v64, 0.2
  %v97 = vmul.f32 %v65, 0.2
  %v98 = vmul.f32 %v66, 0.2
  %v99 = vmul.f32 %v67, 0.2
  %v100 = vmul.f32 %v68, 0.2
  %v101 = vmul.f32 %v69, 0.2
  %v102 = vmul.f32 %v70, 0.2
  %v103 = vmul.f32 %v71, 0.2
  %v104 = vmul.f32 %v72, 0.2
  %v105 = vmul.f32 %v73, 0.2
  %v106 = vmul.f32 %v74, 0.2
  %v107 = vmul.f32 %v75, 0.2
  %v108 = vsel %vm76, %v60, %v92
  %v109 = vsel %vm77, %v61, %v93
  %v110 = vsel %vm78, %v62, %v94
  %v111 = vsel %vm79, %v63, %v95
  %v112 = vsel %vm80, %v64, %v96
  %v113 = vsel %vm81, %v65, %v97
  %v114 = vsel %vm82, %v66, %v98
  %v115 = vsel %vm83, %v67, %v99
  %v116 = vsel %vm84, %v68, %v100
  %v117 = vsel %vm85, %v69, %v101
  %v118 = vsel %vm86, %v70, %v102
  %v119 = vsel %vm87, %v71, %v103
  %v120 = vsel %vm88, %v72, %v104
  %v121 = vsel %vm89, %v73, %v105
  %v122 = vsel %vm90, %v74, %v106
  %v123 = vsel %vm91, %v75, %v107
  %v124 = vpack.c.bf16 %v109, %v108
  %v125 = vpack.c.bf16 %v111, %v110
  %v126 = vpack.c.bf16 %v113, %v112
  %v127 = vpack.c.bf16 %v115, %v114
  %v128 = vpack.c.bf16 %v117, %v116
  %v129 = vpack.c.bf16 %v119, %v118
  %v130 = vpack.c.bf16 %v121, %v120
  %v131 = vpack.c.bf16 %v123, %v122
  %v140 = vunpack.c.l.b16 %v124
  %v141 = vunpack.c.h.b16 %v124
  %v142 = vunpack.c.l.b16 %v125
  %v143 = vunpack.c.h.b16 %v125
  %v144 = vunpack.c.l.b16 %v126
  %v145 = vunpack.c.h.b16 %v126
  %v146 = vunpack.c.l.b16 %v127
  %v147 = vunpack.c.h.b16 %v127
  %v148 = vunpack.c.l.b16 %v128
  %v149 = vunpack.c.h.b16 %v128
  %v150 = vunpack.c.l.b16 %v129
  %v151 = vunpack.c.h.b16 %v129
  %v152 = vunpack.c.l.b16 %v130
  %v153 = vunpack.c.h.b16 %v130
  %v154 = vunpack.c.l.b16 %v131
  %v155 = vunpack.c.h.b16 %v131
  %v156 = vpack.c.b16 %v140, %v140
  %v157 = vpack.c.b16 %v141, %v141
  %v158 = vpack.c.b16 %v142, %v142
  %v159 = vpack.c.b16 %v143, %v143
  %v160 = vpack.c.b16 %v144, %v144
  %v161 = vpack.c.b16 %v145, %v145
  %v162 = vpack.c.b16 %v146, %v146
  %v163 = vpack.c.b16 %v147, %v147
  %v164 = vpack.c.b16 %v148, %v148
  %v165 = vpack.c.b16 %v149, %v149
  %v166 = vpack.c.b16 %v150, %v150
  %v167 = vpack.c.b16 %v151, %v151
  %v168 = vpack.c.b16 %v152, %v152
  %v169 = vpack.c.b16 %v153, %v153
  %v170 = vpack.c.b16 %v154, %v154
  %v171 = vpack.c.b16 %v155, %v155
  %188 = vst [vmem:[%s3] sm:$0xf] %v156
  %189 = vst [vmem:[%s3 + $0x4] sm:$0xf] %v157
  %190 = vst [vmem:[%s3 + $0x8] sm:$0xf] %v158
  %191 = vst [vmem:[%s3 + $0xc] sm:$0xf] %v159
  %192 = vst [vmem:[%s3 + $0x10] sm:$0xf] %v160
  %193 = vst [vmem:[%s3 + $0x14] sm:$0xf] %v161
  %194 = vst [vmem:[%s3 + $0x18] sm:$0xf] %v162
  %195 = vst [vmem:[%s3 + $0x1c] sm:$0xf] %v163
  %196 = vst [vmem:[%s3 + $0x20] sm:$0xf] %v164
  %197 = vst [vmem:[%s3 + $0x24] sm:$0xf] %v165
  %198 = vst [vmem:[%s3 + $0x28] sm:$0xf] %v166
  %199 = vst [vmem:[%s3 + $0x2c] sm:$0xf] %v167
  %200 = vst [vmem:[%s3 + $0x30] sm:$0xf] %v168
  %201 = vst [vmem:[%s3 + $0x34] sm:$0xf] %v169
  %202 = vst [vmem:[%s3 + $0x38] sm:$0xf] %v170
  %203 = vst [vmem:[%s3 + $0x3c] sm:$0xf] %v171
  // Predicated region
  $region14: #{discriminator_forward.12} parent=0 // pred_check
    _
  $region15: #{discriminator_forward.12} parent=0 // pred_check_branch
    %205 = sbr.rel (0) target = $region17
  $region16: #{discriminator_forward.12} parent=0 // pred_region
    _
  $region17: #{discriminator_forward.12} parent=0 // pred_fallthru
    _
  // Predicated region
  $region18: #{discriminator_forward.12} parent=0 // pred_check
    _
  $region19: #{discriminator_forward.12} parent=0 // pred_check_branch
    %207 = sbr.rel (0) target = $region21
  $region20: #{discriminator_forward.12} parent=0 // pred_region
    _
  $region21: #{discriminator_forward.12} parent=0 // pred_fallthru
    _

// kernel: discriminator_forward.13
$region0: #{discriminator_forward.13}
  #allocation0 [shape = 'u32[]', space=smem, size = 0x4, offset = 0x4, fixed_abs, tag = 'smem constant byte address 0x4 - core index']
  #allocation1 [shape = 'u32[144,128]{1,0:T(1,128)}', space=vmem, size = 0x12000, scoped, tag = 'internal scratch']
  %s0 = inlined_call_operand.vmem [shape: bf16[64,2048], index: 0, kind: input, shape index: {}]
  %s1 = inlined_call_operand.vmem [shape: bf16[2048,128], index: 1, kind: input, shape index: {}]
  %s2 = inlined_call_operand.vmem [shape: f32[1,128], index: 2, kind: input, shape index: {}]
  %s3 = inlined_call_operand.vmem [shape: f32[64,128], index: 3, kind: output, shape index: {}]
  %s4 = sld [smem:[#allocation0]]
  $region22: #{discriminator_forward.13} parent=0
    _
  %s6 = ssub.s32 1, %s4
  %s7 = scalar_select 0, %s6, %s4
  // Predicated region
  $region2: #{discriminator_forward.13} parent=0 // pred_check
    _
  $region3: #{discriminator_forward.13} parent=0 // pred_check_branch
    %9 = sbr.rel (0) target = $region5
  $region4: #{discriminator_forward.13} parent=0 // pred_region
    _
  $region5: #{discriminator_forward.13} parent=0 // pred_fallthru
    _
  // Predicated region
  $region6: #{discriminator_forward.13} parent=0 // pred_check
    _
  $region7: #{discriminator_forward.13} parent=0 // pred_check_branch
    %11 = sbr.rel (0) target = $region9
  $region8: #{discriminator_forward.13} parent=0 // pred_region
    _
  $region9: #{discriminator_forward.13} parent=0 // pred_fallthru
    _
  // Predicated region
  $region10: #{discriminator_forward.13} parent=0 // pred_check
    _
  $region11: #{discriminator_forward.13} parent=0 // pred_check_branch
    %13 = sbr.rel (0) target = $region13
  $region12: #{discriminator_forward.13} parent=0 // pred_region
    _
  $region13: #{discriminator_forward.13} parent=0 // pred_fallthru
    _
  %v15 = vld [vmem:[%s0] sm:$0xff]
  %v16 = vld [vmem:[%s0 + $0x8] sm:$0xff]
  %v17 = vld [vmem:[%s0 + $0x10] sm:$0xff]
  %v18 = vld [vmem:[%s0 + $0x18] sm:$0xff]
  %v19 = vld [vmem:[%s0 + $0x20] sm:$0xff]
  %v20 = vld [vmem:[%s0 + $0x28] sm:$0xff]
  %v21 = vld [vmem:[%s0 + $0x30] sm:$0xff]
  %v22 = vld [vmem:[%s0 + $0x38] sm:$0xff]
  %v23 = vld [vmem:[%s0 + $0x40] sm:$0xff]
  %v24 = vld [vmem:[%s0 + $0x48] sm:$0xff]
  %v25 = vld [vmem:[%s0 + $0x50] sm:$0xff]
  %v26 = vld [vmem:[%s0 + $0x58] sm:$0xff]
  %v27 = vld [vmem:[%s0 + $0x60] sm:$0xff]
  %v28 = vld [vmem:[%s0 + $0x68] sm:$0xff]
  %v29 = vld [vmem:[%s0 + $0x70] sm:$0xff]
  %v30 = vld [vmem:[%s0 + $0x78] sm:$0xff]
  %v31 = vld [vmem:[%s0 + $0x80] sm:$0xff]
  %v32 = vld [vmem:[%s0 + $0x88] sm:$0xff]
  %v33 = vld [vmem:[%s0 + $0x90] sm:$0xff]
  %v34 = vld [vmem:[%s0 + $0x98] sm:$0xff]
  %v35 = vld [vmem:[%s0 + $0xa0] sm:$0xff]
  %v36 = vld [vmem:[%s0 + $0xa8] sm:$0xff]
  %v37 = vld [vmem:[%s0 + $0xb0] sm:$0xff]
  %v38 = vld [vmem:[%s0 + $0xb8] sm:$0xff]
  %v39 = vld [vmem:[%s0 + $0xc0] sm:$0xff]
  %v40 = vld [vmem:[%s0 + $0xc8] sm:$0xff]
  %v41 = vld [vmem:[%s0 + $0xd0] sm:$0xff]
  %v42 = vld [vmem:[%s0 + $0xd8] sm:$0xff]
  %v43 = vld [vmem:[%s0 + $0xe0] sm:$0xff]
  %v44 = vld [vmem:[%s0 + $0xe8] sm:$0xff]
  %v45 = vld [vmem:[%s0 + $0xf0] sm:$0xff]
  %v46 = vld [vmem:[%s0 + $0xf8] sm:$0xff]
  %v47 = vld [vmem:[%s0 + $0x100] sm:$0xff]
  %v48 = vld [vmem:[%s0 + $0x108] sm:$0xff]
  %v49 = vld [vmem:[%s0 + $0x110] sm:$0xff]
  %v50 = vld [vmem:[%s0 + $0x118] sm:$0xff]
  %v51 = vld [vmem:[%s0 + $0x120] sm:$0xff]
  %v52 = vld [vmem:[%s0 + $0x128] sm:$0xff]
  %v53 = vld [vmem:[%s0 + $0x130] sm:$0xff]
  %v54 = vld [vmem:[%s0 + $0x138] sm:$0xff]
  %v55 = vld [vmem:[%s0 + $0x140] sm:$0xff]
  %v56 = vld [vmem:[%s0 + $0x148] sm:$0xff]
  %v57 = vld [vmem:[%s0 + $0x150] sm:$0xff]
  %v58 = vld [vmem:[%s0 + $0x158] sm:$0xff]
  %v59 = vld [vmem:[%s0 + $0x160] sm:$0xff]
  %v60 = vld [vmem:[%s0 + $0x168] sm:$0xff]
  %v61 = vld [vmem:[%s0 + $0x170] sm:$0xff]
  %v62 = vld [vmem:[%s0 + $0x178] sm:$0xff]
  %v63 = vld [vmem:[%s0 + $0x180] sm:$0xff]
  %v64 = vld [vmem:[%s0 + $0x188] sm:$0xff]
  %v65 = vld [vmem:[%s0 + $0x190] sm:$0xff]
  %v66 = vld [vmem:[%s0 + $0x198] sm:$0xff]
  %v67 = vld [vmem:[%s0 + $0x1a0] sm:$0xff]
  %v68 = vld [vmem:[%s0 + $0x1a8] sm:$0xff]
  %v69 = vld [vmem:[%s0 + $0x1b0] sm:$0xff]
  %v70 = vld [vmem:[%s0 + $0x1b8] sm:$0xff]
  %v71 = vld [vmem:[%s0 + $0x1c0] sm:$0xff]
  %v72 = vld [vmem:[%s0 + $0x1c8] sm:$0xff]
  %v73 = vld [vmem:[%s0 + $0x1d0] sm:$0xff]
  %v74 = vld [vmem:[%s0 + $0x1d8] sm:$0xff]
  %v75 = vld [vmem:[%s0 + $0x1e0] sm:$0xff]
  %v76 = vld [vmem:[%s0 + $0x1e8] sm:$0xff]
  %v77 = vld [vmem:[%s0 + $0x1f0] sm:$0xff]
  %v78 = vld [vmem:[%s0 + $0x1f8] sm:$0xff]
  %v79 = vld [vmem:[%s1] sm:$0xf]
  %v80 = vld [vmem:[%s1 + $0x4] sm:$0xf]
  %v81 = vld [vmem:[%s1 + $0x8] sm:$0xf]
  %v82 = vld [vmem:[%s1 + $0xc] sm:$0xf]
  %v83 = vld [vmem:[%s1 + $0x10] sm:$0xf]
  %v84 = vld [vmem:[%s1 + $0x14] sm:$0xf]
  %v85 = vld [vmem:[%s1 + $0x18] sm:$0xf]
  %v86 = vld [vmem:[%s1 + $0x1c] sm:$0xf]
  %v87 = vld [vmem:[%s1 + $0x20] sm:$0xf]
  %v88 = vld [vmem:[%s1 + $0x24] sm:$0xf]
  %v89 = vld [vmem:[%s1 + $0x28] sm:$0xf]
  %v90 = vld [vmem:[%s1 + $0x2c] sm:$0xf]
  %v91 = vld [vmem:[%s1 + $0x30] sm:$0xf]
  %v92 = vld [vmem:[%s1 + $0x34] sm:$0xf]
  %v93 = vld [vmem:[%s1 + $0x38] sm:$0xf]
  %v94 = vld [vmem:[%s1 + $0x3c] sm:$0xf]
  %v95 = vld [vmem:[%s1 + $0x40] sm:$0xf]
  %v96 = vld [vmem:[%s1 + $0x44] sm:$0xf]
  %v97 = vld [vmem:[%s1 + $0x48] sm:$0xf]
  %v98 = vld [vmem:[%s1 + $0x4c] sm:$0xf]
  %v99 = vld [vmem:[%s1 + $0x50] sm:$0xf]
  %v100 = vld [vmem:[%s1 + $0x54] sm:$0xf]
  %v101 = vld [vmem:[%s1 + $0x58] sm:$0xf]
  %v102 = vld [vmem:[%s1 + $0x5c] sm:$0xf]
  %v103 = vld [vmem:[%s1 + $0x60] sm:$0xf]
  %v104 = vld [vmem:[%s1 + $0x64] sm:$0xf]
  %v105 = vld [vmem:[%s1 + $0x68] sm:$0xf]
  %v106 = vld [vmem:[%s1 + $0x6c] sm:$0xf]
  %v107 = vld [vmem:[%s1 + $0x70] sm:$0xf]
  %v108 = vld [vmem:[%s1 + $0x74] sm:$0xf]
  %v109 = vld [vmem:[%s1 + $0x78] sm:$0xf]
  %v110 = vld [vmem:[%s1 + $0x7c] sm:$0xf]
  %v111 = vld [vmem:[%s1 + $0x80] sm:$0xf]
  %v112 = vld [vmem:[%s1 + $0x84] sm:$0xf]
  %v113 = vld [vmem:[%s1 + $0x88] sm:$0xf]
  %v114 = vld [vmem:[%s1 + $0x8c] sm:$0xf]
  %v115 = vld [vmem:[%s1 + $0x90] sm:$0xf]
  %v116 = vld [vmem:[%s1 + $0x94] sm:$0xf]
  %v117 = vld [vmem:[%s1 + $0x98] sm:$0xf]
  %v118 = vld [vmem:[%s1 + $0x9c] sm:$0xf]
  %v119 = vld [vmem:[%s1 + $0xa0] sm:$0xf]
  %v120 = vld [vmem:[%s1 + $0xa4] sm:$0xf]
  %v121 = vld [vmem:[%s1 + $0xa8] sm:$0xf]
  %v122 = vld [vmem:[%s1 + $0xac] sm:$0xf]
  %v123 = vld [vmem:[%s1 + $0xb0] sm:$0xf]
  %v124 = vld [vmem:[%s1 + $0xb4] sm:$0xf]
  %v125 = vld [vmem:[%s1 + $0xb8] sm:$0xf]
  %v126 = vld [vmem:[%s1 + $0xbc] sm:$0xf]
  %v127 = vld [vmem:[%s1 + $0xc0] sm:$0xf]
  %v128 = vld [vmem:[%s1 + $0xc4] sm:$0xf]
  %v129 = vld [vmem:[%s1 + $0xc8] sm:$0xf]
  %v130 = vld [vmem:[%s1 + $0xcc] sm:$0xf]
  %v131 = vld [vmem:[%s1 + $0xd0] sm:$0xf]
  %v132 = vld [vmem:[%s1 + $0xd4] sm:$0xf]
  %v133 = vld [vmem:[%s1 + $0xd8] sm:$0xf]
  %v134 = vld [vmem:[%s1 + $0xdc] sm:$0xf]
  %v135 = vld [vmem:[%s1 + $0xe0] sm:$0xf]
  %v136 = vld [vmem:[%s1 + $0xe4] sm:$0xf]
  %v137 = vld [vmem:[%s1 + $0xe8] sm:$0xf]
  %v138 = vld [vmem:[%s1 + $0xec] sm:$0xf]
  %v139 = vld [vmem:[%s1 + $0xf0] sm:$0xf]
  %v140 = vld [vmem:[%s1 + $0xf4] sm:$0xf]
  %v141 = vld [vmem:[%s1 + $0xf8] sm:$0xf]
  %v142 = vld [vmem:[%s1 + $0xfc] sm:$0xf]
  %v143 = vld [vmem:[%s1 + $0x100] sm:$0xf]
  %v144 = vld [vmem:[%s1 + $0x104] sm:$0xf]
  %v145 = vld [vmem:[%s1 + $0x108] sm:$0xf]
  %v146 = vld [vmem:[%s1 + $0x10c] sm:$0xf]
  %v147 = vld [vmem:[%s1 + $0x110] sm:$0xf]
  %v148 = vld [vmem:[%s1 + $0x114] sm:$0xf]
  %v149 = vld [vmem:[%s1 + $0x118] sm:$0xf]
  %v150 = vld [vmem:[%s1 + $0x11c] sm:$0xf]
  %v151 = vld [vmem:[%s1 + $0x120] sm:$0xf]
  %v152 = vld [vmem:[%s1 + $0x124] sm:$0xf]
  %v153 = vld [vmem:[%s1 + $0x128] sm:$0xf]
  %v154 = vld [vmem:[%s1 + $0x12c] sm:$0xf]
  %v155 = vld [vmem:[%s1 + $0x130] sm:$0xf]
  %v156 = vld [vmem:[%s1 + $0x134] sm:$0xf]
  %v157 = vld [vmem:[%s1 + $0x138] sm:$0xf]
  %v158 = vld [vmem:[%s1 + $0x13c] sm:$0xf]
  %v159 = vld [vmem:[%s1 + $0x140] sm:$0xf]
  %v160 = vld [vmem:[%s1 + $0x144] sm:$0xf]
  %v161 = vld [vmem:[%s1 + $0x148] sm:$0xf]
  %v162 = vld [vmem:[%s1 + $0x14c] sm:$0xf]
  %v163 = vld [vmem:[%s1 + $0x150] sm:$0xf]
  %v164 = vld [vmem:[%s1 + $0x154] sm:$0xf]
  %v165 = vld [vmem:[%s1 + $0x158] sm:$0xf]
  %v166 = vld [vmem:[%s1 + $0x15c] sm:$0xf]
  %v167 = vld [vmem:[%s1 + $0x160] sm:$0xf]
  %v168 = vld [vmem:[%s1 + $0x164] sm:$0xf]
  %v169 = vld [vmem:[%s1 + $0x168] sm:$0xf]
  %v170 = vld [vmem:[%s1 + $0x16c] sm:$0xf]
  %v171 = vld [vmem:[%s1 + $0x170] sm:$0xf]
  %v172 = vld [vmem:[%s1 + $0x174] sm:$0xf]
  %v173 = vld [vmem:[%s1 + $0x178] sm:$0xf]
  %v174 = vld [vmem:[%s1 + $0x17c] sm:$0xf]
  %v175 = vld [vmem:[%s1 + $0x180] sm:$0xf]
  %v176 = vld [vmem:[%s1 + $0x184] sm:$0xf]
  %v177 = vld [vmem:[%s1 + $0x188] sm:$0xf]
  %v178 = vld [vmem:[%s1 + $0x18c] sm:$0xf]
  %v179 = vld [vmem:[%s1 + $0x190] sm:$0xf]
  %v180 = vld [vmem:[%s1 + $0x194] sm:$0xf]
  %v181 = vld [vmem:[%s1 + $0x198] sm:$0xf]
  %v182 = vld [vmem:[%s1 + $0x19c] sm:$0xf]
  %v183 = vld [vmem:[%s1 + $0x1a0] sm:$0xf]
  %v184 = vld [vmem:[%s1 + $0x1a4] sm:$0xf]
  %v185 = vld [vmem:[%s1 + $0x1a8] sm:$0xf]
  %v186 = vld [vmem:[%s1 + $0x1ac] sm:$0xf]
  %v187 = vld [vmem:[%s1 + $0x1b0] sm:$0xf]
  %v188 = vld [vmem:[%s1 + $0x1b4] sm:$0xf]
  %v189 = vld [vmem:[%s1 + $0x1b8] sm:$0xf]
  %v190 = vld [vmem:[%s1 + $0x1bc] sm:$0xf]
  %v191 = vld [vmem:[%s1 + $0x1c0] sm:$0xf]
  %v192 = vld [vmem:[%s1 + $0x1c4] sm:$0xf]
  %v193 = vld [vmem:[%s1 + $0x1c8] sm:$0xf]
  %v194 = vld [vmem:[%s1 + $0x1cc] sm:$0xf]
  %v195 = vld [vmem:[%s1 + $0x1d0] sm:$0xf]
  %v196 = vld [vmem:[%s1 + $0x1d4] sm:$0xf]
  %v197 = vld [vmem:[%s1 + $0x1d8] sm:$0xf]
  %v198 = vld [vmem:[%s1 + $0x1dc] sm:$0xf]
  %v199 = vld [vmem:[%s1 + $0x1e0] sm:$0xf]
  %v200 = vld [vmem:[%s1 + $0x1e4] sm:$0xf]
  %v201 = vld [vmem:[%s1 + $0x1e8] sm:$0xf]
  %v202 = vld [vmem:[%s1 + $0x1ec] sm:$0xf]
  %v203 = vld [vmem:[%s1 + $0x1f0] sm:$0xf]
  %v204 = vld [vmem:[%s1 + $0x1f4] sm:$0xf]
  %v205 = vld [vmem:[%s1 + $0x1f8] sm:$0xf]
  %v206 = vld [vmem:[%s1 + $0x1fc] sm:$0xf]
  %v207 = vld [vmem:[%s1 + $0x200] sm:$0xf]
  %v208 = vld [vmem:[%s1 + $0x204] sm:$0xf]
  %v209 = vld [vmem:[%s1 + $0x208] sm:$0xf]
  %v210 = vld [vmem:[%s1 + $0x20c] sm:$0xf]
  %v211 = vld [vmem:[%s1 + $0x210] sm:$0xf]
  %v212 = vld [vmem:[%s1 + $0x214] sm:$0xf]
  %v213 = vld [vmem:[%s1 + $0x218] sm:$0xf]
  %v214 = vld [vmem:[%s1 + $0x21c] sm:$0xf]
  %v215 = vld [vmem:[%s1 + $0x220] sm:$0xf]
  %v216 = vld [vmem:[%s1 + $0x224] sm:$0xf]
  %v217 = vld [vmem:[%s1 + $0x228] sm:$0xf]
  %v218 = vld [vmem:[%s1 + $0x22c] sm:$0xf]
  %v219 = vld [vmem:[%s1 + $0x230] sm:$0xf]
  %v220 = vld [vmem:[%s1 + $0x234] sm:$0xf]
  %v221 = vld [vmem:[%s1 + $0x238] sm:$0xf]
  %v222 = vld [vmem:[%s1 + $0x23c] sm:$0xf]
  %v223 = vld [vmem:[%s1 + $0x240] sm:$0xf]
  %v224 = vld [vmem:[%s1 + $0x244] sm:$0xf]
  %v225 = vld [vmem:[%s1 + $0x248] sm:$0xf]
  %v226 = vld [vmem:[%s1 + $0x24c] sm:$0xf]
  %v227 = vld [vmem:[%s1 + $0x250] sm:$0xf]
  %v228 = vld [vmem:[%s1 + $0x254] sm:$0xf]
  %v229 = vld [vmem:[%s1 + $0x258] sm:$0xf]
  %v230 = vld [vmem:[%s1 + $0x25c] sm:$0xf]
  %v231 = vld [vmem:[%s1 + $0x260] sm:$0xf]
  %v232 = vld [vmem:[%s1 + $0x264] sm:$0xf]
  %v233 = vld [vmem:[%s1 + $0x268] sm:$0xf]
  %v234 = vld [vmem:[%s1 + $0x26c] sm:$0xf]
  %v235 = vld [vmem:[%s1 + $0x270] sm:$0xf]
  %v236 = vld [vmem:[%s1 + $0x274] sm:$0xf]
  %v237 = vld [vmem:[%s1 + $0x278] sm:$0xf]
  %v238 = vld [vmem:[%s1 + $0x27c] sm:$0xf]
  %v239 = vld [vmem:[%s1 + $0x280] sm:$0xf]
  %v240 = vld [vmem:[%s1 + $0x284] sm:$0xf]
  %v241 = vld [vmem:[%s1 + $0x288] sm:$0xf]
  %v242 = vld [vmem:[%s1 + $0x28c] sm:$0xf]
  %v243 = vld [vmem:[%s1 + $0x290] sm:$0xf]
  %v244 = vld [vmem:[%s1 + $0x294] sm:$0xf]
  %v245 = vld [vmem:[%s1 + $0x298] sm:$0xf]
  %v246 = vld [vmem:[%s1 + $0x29c] sm:$0xf]
  %v247 = vld [vmem:[%s1 + $0x2a0] sm:$0xf]
  %v248 = vld [vmem:[%s1 + $0x2a4] sm:$0xf]
  %v249 = vld [vmem:[%s1 + $0x2a8] sm:$0xf]
  %v250 = vld [vmem:[%s1 + $0x2ac] sm:$0xf]
  %v251 = vld [vmem:[%s1 + $0x2b0] sm:$0xf]
  %v252 = vld [vmem:[%s1 + $0x2b4] sm:$0xf]
  %v253 = vld [vmem:[%s1 + $0x2b8] sm:$0xf]
  %v254 = vld [vmem:[%s1 + $0x2bc] sm:$0xf]
  %v255 = vld [vmem:[%s1 + $0x2c0] sm:$0xf]
  %v256 = vld [vmem:[%s1 + $0x2c4] sm:$0xf]
  %v257 = vld [vmem:[%s1 + $0x2c8] sm:$0xf]
  %v258 = vld [vmem:[%s1 + $0x2cc] sm:$0xf]
  %v259 = vld [vmem:[%s1 + $0x2d0] sm:$0xf]
  %v260 = vld [vmem:[%s1 + $0x2d4] sm:$0xf]
  %v261 = vld [vmem:[%s1 + $0x2d8] sm:$0xf]
  %v262 = vld [vmem:[%s1 + $0x2dc] sm:$0xf]
  %v263 = vld [vmem:[%s1 + $0x2e0] sm:$0xf]
  %v264 = vld [vmem:[%s1 + $0x2e4] sm:$0xf]
  %v265 = vld [vmem:[%s1 + $0x2e8] sm:$0xf]
  %v266 = vld [vmem:[%s1 + $0x2ec] sm:$0xf]
  %v267 = vld [vmem:[%s1 + $0x2f0] sm:$0xf]
  %v268 = vld [vmem:[%s1 + $0x2f4] sm:$0xf]
  %v269 = vld [vmem:[%s1 + $0x2f8] sm:$0xf]
  %v270 = vld [vmem:[%s1 + $0x2fc] sm:$0xf]
  %v271 = vld [vmem:[%s1 + $0x300] sm:$0xf]
  %v272 = vld [vmem:[%s1 + $0x304] sm:$0xf]
  %v273 = vld [vmem:[%s1 + $0x308] sm:$0xf]
  %v274 = vld [vmem:[%s1 + $0x30c] sm:$0xf]
  %v275 = vld [vmem:[%s1 + $0x310] sm:$0xf]
  %v276 = vld [vmem:[%s1 + $0x314] sm:$0xf]
  %v277 = vld [vmem:[%s1 + $0x318] sm:$0xf]
  %v278 = vld [vmem:[%s1 + $0x31c] sm:$0xf]
  %v279 = vld [vmem:[%s1 + $0x320] sm:$0xf]
  %v280 = vld [vmem:[%s1 + $0x324] sm:$0xf]
  %v281 = vld [vmem:[%s1 + $0x328] sm:$0xf]
  %v282 = vld [vmem:[%s1 + $0x32c] sm:$0xf]
  %v283 = vld [vmem:[%s1 + $0x330] sm:$0xf]
  %v284 = vld [vmem:[%s1 + $0x334] sm:$0xf]
  %v285 = vld [vmem:[%s1 + $0x338] sm:$0xf]
  %v286 = vld [vmem:[%s1 + $0x33c] sm:$0xf]
  %v287 = vld [vmem:[%s1 + $0x340] sm:$0xf]
  %v288 = vld [vmem:[%s1 + $0x344] sm:$0xf]
  %v289 = vld [vmem:[%s1 + $0x348] sm:$0xf]
  %v290 = vld [vmem:[%s1 + $0x34c] sm:$0xf]
  %v291 = vld [vmem:[%s1 + $0x350] sm:$0xf]
  %v292 = vld [vmem:[%s1 + $0x354] sm:$0xf]
  %v293 = vld [vmem:[%s1 + $0x358] sm:$0xf]
  %v294 = vld [vmem:[%s1 + $0x35c] sm:$0xf]
  %v295 = vld [vmem:[%s1 + $0x360] sm:$0xf]
  %v296 = vld [vmem:[%s1 + $0x364] sm:$0xf]
  %v297 = vld [vmem:[%s1 + $0x368] sm:$0xf]
  %v298 = vld [vmem:[%s1 + $0x36c] sm:$0xf]
  %v299 = vld [vmem:[%s1 + $0x370] sm:$0xf]
  %v300 = vld [vmem:[%s1 + $0x374] sm:$0xf]
  %v301 = vld [vmem:[%s1 + $0x378] sm:$0xf]
  %v302 = vld [vmem:[%s1 + $0x37c] sm:$0xf]
  %v303 = vld [vmem:[%s1 + $0x380] sm:$0xf]
  %v304 = vld [vmem:[%s1 + $0x384] sm:$0xf]
  %v305 = vld [vmem:[%s1 + $0x388] sm:$0xf]
  %v306 = vld [vmem:[%s1 + $0x38c] sm:$0xf]
  %v307 = vld [vmem:[%s1 + $0x390] sm:$0xf]
  %v308 = vld [vmem:[%s1 + $0x394] sm:$0xf]
  %v309 = vld [vmem:[%s1 + $0x398] sm:$0xf]
  %v310 = vld [vmem:[%s1 + $0x39c] sm:$0xf]
  %v311 = vld [vmem:[%s1 + $0x3a0] sm:$0xf]
  %v312 = vld [vmem:[%s1 + $0x3a4] sm:$0xf]
  %v313 = vld [vmem:[%s1 + $0x3a8] sm:$0xf]
  %v314 = vld [vmem:[%s1 + $0x3ac] sm:$0xf]
  %v315 = vld [vmem:[%s1 + $0x3b0] sm:$0xf]
  %v316 = vld [vmem:[%s1 + $0x3b4] sm:$0xf]
  %v317 = vld [vmem:[%s1 + $0x3b8] sm:$0xf]
  %v318 = vld [vmem:[%s1 + $0x3bc] sm:$0xf]
  %v319 = vld [vmem:[%s1 + $0x3c0] sm:$0xf]
  %v320 = vld [vmem:[%s1 + $0x3c4] sm:$0xf]
  %v321 = vld [vmem:[%s1 + $0x3c8] sm:$0xf]
  %v322 = vld [vmem:[%s1 + $0x3cc] sm:$0xf]
  %v323 = vld [vmem:[%s1 + $0x3d0] sm:$0xf]
  %v324 = vld [vmem:[%s1 + $0x3d4] sm:$0xf]
  %v325 = vld [vmem:[%s1 + $0x3d8] sm:$0xf]
  %v326 = vld [vmem:[%s1 + $0x3dc] sm:$0xf]
  %v327 = vld [vmem:[%s1 + $0x3e0] sm:$0xf]
  %v328 = vld [vmem:[%s1 + $0x3e4] sm:$0xf]
  %v329 = vld [vmem:[%s1 + $0x3e8] sm:$0xf]
  %v330 = vld [vmem:[%s1 + $0x3ec] sm:$0xf]
  %v331 = vld [vmem:[%s1 + $0x3f0] sm:$0xf]
  %v332 = vld [vmem:[%s1 + $0x3f4] sm:$0xf]
  %v333 = vld [vmem:[%s1 + $0x3f8] sm:$0xf]
  %v334 = vld [vmem:[%s1 + $0x3fc] sm:$0xf]
  %v335 = vld [vmem:[%s2] sm:$0x1]
  %v337 = vlaneseq
  %v338 = vshrl.u32 %v337, 7
  %v339 = vsub.s32 0, %v338
  %v340 = vrot.slane %v335, %v339
  %v406 = vunpack.c.l.b16 %v15
  %v407 = vunpack.c.h.b16 %v15
  %v408 = vunpack.c.l.b16 %v16
  %v409 = vunpack.c.h.b16 %v16
  %v410 = vunpack.c.l.b16 %v17
  %v411 = vunpack.c.h.b16 %v17
  %v412 = vunpack.c.l.b16 %v18
  %v413 = vunpack.c.h.b16 %v18
  %v414 = vunpack.c.l.b16 %v19
  %v415 = vunpack.c.h.b16 %v19
  %v416 = vunpack.c.l.b16 %v20
  %v417 = vunpack.c.h.b16 %v20
  %v418 = vunpack.c.l.b16 %v21
  %v419 = vunpack.c.h.b16 %v21
  %v420 = vunpack.c.l.b16 %v22
  %v421 = vunpack.c.h.b16 %v22
  %v422 = vunpack.c.l.b16 %v23
  %v423 = vunpack.c.h.b16 %v23
  %v424 = vunpack.c.l.b16 %v24
  %v425 = vunpack.c.h.b16 %v24
  %v426 = vunpack.c.l.b16 %v25
  %v427 = vunpack.c.h.b16 %v25
  %v428 = vunpack.c.l.b16 %v26
  %v429 = vunpack.c.h.b16 %v26
  %v430 = vunpack.c.l.b16 %v27
  %v431 = vunpack.c.h.b16 %v27
  %v432 = vunpack.c.l.b16 %v28
  %v433 = vunpack.c.h.b16 %v28
  %v434 = vunpack.c.l.b16 %v29
  %v435 = vunpack.c.h.b16 %v29
  %v436 = vunpack.c.l.b16 %v30
  %v437 = vunpack.c.h.b16 %v30
  %v438 = vunpack.c.l.b16 %v31
  %v439 = vunpack.c.h.b16 %v31
  %v440 = vunpack.c.l.b16 %v32
  %v441 = vunpack.c.h.b16 %v32
  %v442 = vunpack.c.l.b16 %v33
  %v443 = vunpack.c.h.b16 %v33
  %v444 = vunpack.c.l.b16 %v34
  %v445 = vunpack.c.h.b16 %v34
  %v446 = vunpack.c.l.b16 %v35
  %v447 = vunpack.c.h.b16 %v35
  %v448 = vunpack.c.l.b16 %v36
  %v449 = vunpack.c.h.b16 %v36
  %v450 = vunpack.c.l.b16 %v37
  %v451 = vunpack.c.h.b16 %v37
  %v452 = vunpack.c.l.b16 %v38
  %v453 = vunpack.c.h.b16 %v38
  %v454 = vunpack.c.l.b16 %v39
  %v455 = vunpack.c.h.b16 %v39
  %v456 = vunpack.c.l.b16 %v40
  %v457 = vunpack.c.h.b16 %v40
  %v458 = vunpack.c.l.b16 %v41
  %v459 = vunpack.c.h.b16 %v41
  %v460 = vunpack.c.l.b16 %v42
  %v461 = vunpack.c.h.b16 %v42
  %v462 = vunpack.c.l.b16 %v43
  %v463 = vunpack.c.h.b16 %v43
  %v464 = vunpack.c.l.b16 %v44
  %v465 = vunpack.c.h.b16 %v44
  %v466 = vunpack.c.l.b16 %v45
  %v467 = vunpack.c.h.b16 %v45
  %v468 = vunpack.c.l.b16 %v46
  %v469 = vunpack.c.h.b16 %v46
  %v470 = vunpack.c.l.b16 %v47
  %v471 = vunpack.c.h.b16 %v47
  %v472 = vunpack.c.l.b16 %v48
  %v473 = vunpack.c.h.b16 %v48
  %v474 = vunpack.c.l.b16 %v49
  %v475 = vunpack.c.h.b16 %v49
  %v476 = vunpack.c.l.b16 %v50
  %v477 = vunpack.c.h.b16 %v50
  %v478 = vunpack.c.l.b16 %v51
  %v479 = vunpack.c.h.b16 %v51
  %v480 = vunpack.c.l.b16 %v52
  %v481 = vunpack.c.h.b16 %v52
  %v482 = vunpack.c.l.b16 %v53
  %v483 = vunpack.c.h.b16 %v53
  %v484 = vunpack.c.l.b16 %v54
  %v485 = vunpack.c.h.b16 %v54
  %v486 = vunpack.c.l.b16 %v55
  %v487 = vunpack.c.h.b16 %v55
  %v488 = vunpack.c.l.b16 %v56
  %v489 = vunpack.c.h.b16 %v56
  %v490 = vunpack.c.l.b16 %v57
  %v491 = vunpack.c.h.b16 %v57
  %v492 = vunpack.c.l.b16 %v58
  %v493 = vunpack.c.h.b16 %v58
  %v494 = vunpack.c.l.b16 %v59
  %v495 = vunpack.c.h.b16 %v59
  %v496 = vunpack.c.l.b16 %v60
  %v497 = vunpack.c.h.b16 %v60
  %v498 = vunpack.c.l.b16 %v61
  %v499 = vunpack.c.h.b16 %v61
  %v500 = vunpack.c.l.b16 %v62
  %v501 = vunpack.c.h.b16 %v62
  %v502 = vunpack.c.l.b16 %v63
  %v503 = vunpack.c.h.b16 %v63
  %v504 = vunpack.c.l.b16 %v64
  %v505 = vunpack.c.h.b16 %v64
  %v506 = vunpack.c.l.b16 %v65
  %v507 = vunpack.c.h.b16 %v65
  %v508 = vunpack.c.l.b16 %v66
  %v509 = vunpack.c.h.b16 %v66
  %v510 = vunpack.c.l.b16 %v67
  %v511 = vunpack.c.h.b16 %v67
  %v512 = vunpack.c.l.b16 %v68
  %v513 = vunpack.c.h.b16 %v68
  %v514 = vunpack.c.l.b16 %v69
  %v515 = vunpack.c.h.b16 %v69
  %v516 = vunpack.c.l.b16 %v70
  %v517 = vunpack.c.h.b16 %v70
  %v518 = vunpack.c.l.b16 %v71
  %v519 = vunpack.c.h.b16 %v71
  %v520 = vunpack.c.l.b16 %v72
  %v521 = vunpack.c.h.b16 %v72
  %v522 = vunpack.c.l.b16 %v73
  %v523 = vunpack.c.h.b16 %v73
  %v524 = vunpack.c.l.b16 %v74
  %v525 = vunpack.c.h.b16 %v74
  %v526 = vunpack.c.l.b16 %v75
  %v527 = vunpack.c.h.b16 %v75
  %v528 = vunpack.c.l.b16 %v76
  %v529 = vunpack.c.h.b16 %v76
  %v530 = vunpack.c.l.b16 %v77
  %v531 = vunpack.c.h.b16 %v77
  %v532 = vunpack.c.l.b16 %v78
  %v533 = vunpack.c.h.b16 %v78
  %v534 = vpack.c.b16 %v422, %v406
  %v535 = vpack.c.b16 %v423, %v407
  %v536 = vpack.c.b16 %v424, %v408
  %v537 = vpack.c.b16 %v425, %v409
  %v538 = vpack.c.b16 %v426, %v410
  %v539 = vpack.c.b16 %v427, %v411
  %v540 = vpack.c.b16 %v428, %v412
  %v541 = vpack.c.b16 %v429, %v413
  %v542 = vpack.c.b16 %v430, %v414
  %v543 = vpack.c.b16 %v431, %v415
  %v544 = vpack.c.b16 %v432, %v416
  %v545 = vpack.c.b16 %v433, %v417
  %v546 = vpack.c.b16 %v434, %v418
  %v547 = vpack.c.b16 %v435, %v419
  %v548 = vpack.c.b16 %v436, %v420
  %v549 = vpack.c.b16 %v437, %v421
  %v550 = vpack.c.b16 %v454, %v438
  %v551 = vpack.c.b16 %v455, %v439
  %v552 = vpack.c.b16 %v456, %v440
  %v553 = vpack.c.b16 %v457, %v441
  %v554 = vpack.c.b16 %v458, %v442
  %v555 = vpack.c.b16 %v459, %v443
  %v556 = vpack.c.b16 %v460, %v444
  %v557 = vpack.c.b16 %v461, %v445
  %v558 = vpack.c.b16 %v462, %v446
  %v559 = vpack.c.b16 %v463, %v447
  %v560 = vpack.c.b16 %v464, %v448
  %v561 = vpack.c.b16 %v465, %v449
  %v562 = vpack.c.b16 %v466, %v450
  %v563 = vpack.c.b16 %v467, %v451
  %v564 = vpack.c.b16 %v468, %v452
  %v565 = vpack.c.b16 %v469, %v453
  %v566 = vpack.c.b16 %v486, %v470
  %v567 = vpack.c.b16 %v487, %v471
  %v568 = vpack.c.b16 %v488, %v472
  %v569 = vpack.c.b16 %v489, %v473
  %v570 = vpack.c.b16 %v490, %v474
  %v571 = vpack.c.b16 %v491, %v475
  %v572 = vpack.c.b16 %v492, %v476
  %v573 = vpack.c.b16 %v493, %v477
  %v574 = vpack.c.b16 %v494, %v478
  %v575 = vpack.c.b16 %v495, %v479
  %v576 = vpack.c.b16 %v496, %v480
  %v577 = vpack.c.b16 %v497, %v481
  %v578 = vpack.c.b16 %v498, %v482
  %v579 = vpack.c.b16 %v499, %v483
  %v580 = vpack.c.b16 %v500, %v484
  %v581 = vpack.c.b16 %v501, %v485
  %v582 = vpack.c.b16 %v518, %v502
  %v583 = vpack.c.b16 %v519, %v503
  %v584 = vpack.c.b16 %v520, %v504
  %v585 = vpack.c.b16 %v521, %v505
  %v586 = vpack.c.b16 %v522, %v506
  %v587 = vpack.c.b16 %v523, %v507
  %v588 = vpack.c.b16 %v524, %v508
  %v589 = vpack.c.b16 %v525, %v509
  %v590 = vpack.c.b16 %v526, %v510
  %v591 = vpack.c.b16 %v527, %v511
  %v592 = vpack.c.b16 %v528, %v512
  %v593 = vpack.c.b16 %v529, %v513
  %v594 = vpack.c.b16 %v530, %v514
  %v595 = vpack.c.b16 %v531, %v515
  %v596 = vpack.c.b16 %v532, %v516
  %v597 = vpack.c.b16 %v533, %v517
  %v918 = vunpack.c.l.b16 %v79
  %v919 = vunpack.c.l.b16 %v80
  %v920 = vunpack.c.l.b16 %v81
  %v921 = vunpack.c.l.b16 %v82
  %v922 = vunpack.c.l.b16 %v83
  %v923 = vunpack.c.l.b16 %v84
  %v924 = vunpack.c.l.b16 %v85
  %v925 = vunpack.c.l.b16 %v86
  %v926 = vunpack.c.l.b16 %v87
  %v927 = vunpack.c.l.b16 %v88
  %v928 = vunpack.c.l.b16 %v89
  %v929 = vunpack.c.l.b16 %v90
  %v930 = vunpack.c.l.b16 %v91
  %v931 = vunpack.c.l.b16 %v92
  %v932 = vunpack.c.l.b16 %v93
  %v933 = vunpack.c.l.b16 %v94
  %v934 = vunpack.c.l.b16 %v95
  %v935 = vunpack.c.l.b16 %v96
  %v936 = vunpack.c.l.b16 %v97
  %v937 = vunpack.c.l.b16 %v98
  %v938 = vunpack.c.l.b16 %v99
  %v939 = vunpack.c.l.b16 %v100
  %v940 = vunpack.c.l.b16 %v101
  %v941 = vunpack.c.l.b16 %v102
  %v942 = vunpack.c.l.b16 %v103
  %v943 = vunpack.c.l.b16 %v104
  %v944 = vunpack.c.l.b16 %v105
  %v945 = vunpack.c.l.b16 %v106
  %v946 = vunpack.c.l.b16 %v107
  %v947 = vunpack.c.l.b16 %v108
  %v948 = vunpack.c.l.b16 %v109
  %v949 = vunpack.c.l.b16 %v110
  %v950 = vunpack.c.l.b16 %v111
  %v951 = vunpack.c.l.b16 %v112
  %v952 = vunpack.c.l.b16 %v113
  %v953 = vunpack.c.l.b16 %v114
  %v954 = vunpack.c.l.b16 %v115
  %v955 = vunpack.c.l.b16 %v116
  %v956 = vunpack.c.l.b16 %v117
  %v957 = vunpack.c.l.b16 %v118
  %v958 = vunpack.c.l.b16 %v119
  %v959 = vunpack.c.l.b16 %v120
  %v960 = vunpack.c.l.b16 %v121
  %v961 = vunpack.c.l.b16 %v122
  %v962 = vunpack.c.l.b16 %v123
  %v963 = vunpack.c.l.b16 %v124
  %v964 = vunpack.c.l.b16 %v125
  %v965 = vunpack.c.l.b16 %v126
  %v966 = vunpack.c.l.b16 %v127
  %v967 = vunpack.c.l.b16 %v128
  %v968 = vunpack.c.l.b16 %v129
  %v969 = vunpack.c.l.b16 %v130
  %v970 = vunpack.c.l.b16 %v131
  %v971 = vunpack.c.l.b16 %v132
  %v972 = vunpack.c.l.b16 %v133
  %v973 = vunpack.c.l.b16 %v134
  %v974 = vunpack.c.l.b16 %v135
  %v975 = vunpack.c.l.b16 %v136
  %v976 = vunpack.c.l.b16 %v137
  %v977 = vunpack.c.l.b16 %v138
  %v978 = vunpack.c.l.b16 %v139
  %v979 = vunpack.c.l.b16 %v140
  %v980 = vunpack.c.l.b16 %v141
  %v981 = vunpack.c.l.b16 %v142
  %v982 = vunpack.c.l.b16 %v143
  %v983 = vunpack.c.l.b16 %v144
  %v984 = vunpack.c.l.b16 %v145
  %v985 = vunpack.c.l.b16 %v146
  %v986 = vunpack.c.l.b16 %v147
  %v987 = vunpack.c.l.b16 %v148
  %v988 = vunpack.c.l.b16 %v149
  %v989 = vunpack.c.l.b16 %v150
  %v990 = vunpack.c.l.b16 %v151
  %v991 = vunpack.c.l.b16 %v152
  %v992 = vunpack.c.l.b16 %v153
  %v993 = vunpack.c.l.b16 %v154
  %v994 = vunpack.c.l.b16 %v155
  %v995 = vunpack.c.l.b16 %v156
  %v996 = vunpack.c.l.b16 %v157
  %v997 = vunpack.c.l.b16 %v158
  %v998 = vunpack.c.l.b16 %v159
  %v999 = vunpack.c.l.b16 %v160
  %v1000 = vunpack.c.l.b16 %v161
  %v1001 = vunpack.c.l.b16 %v162
  %v1002 = vunpack.c.l.b16 %v163
  %v1003 = vunpack.c.l.b16 %v164
  %v1004 = vunpack.c.l.b16 %v165
  %v1005 = vunpack.c.l.b16 %v166
  %v1006 = vunpack.c.l.b16 %v167
  %v1007 = vunpack.c.l.b16 %v168
  %v1008 = vunpack.c.l.b16 %v169
  %v1009 = vunpack.c.l.b16 %v170
  %v1010 = vunpack.c.l.b16 %v171
  %v1011 = vunpack.c.l.b16 %v172
  %v1012 = vunpack.c.l.b16 %v173
  %v1013 = vunpack.c.l.b16 %v174
  %v1014 = vunpack.c.l.b16 %v175
  %v1015 = vunpack.c.l.b16 %v176
  %v1016 = vunpack.c.l.b16 %v177
  %v1017 = vunpack.c.l.b16 %v178
  %v1018 = vunpack.c.l.b16 %v179
  %v1019 = vunpack.c.l.b16 %v180
  %v1020 = vunpack.c.l.b16 %v181
  %v1021 = vunpack.c.l.b16 %v182
  %v1022 = vunpack.c.l.b16 %v183
  %v1023 = vunpack.c.l.b16 %v184
  %v1024 = vunpack.c.l.b16 %v185
  %v1025 = vunpack.c.l.b16 %v186
  %v1026 = vunpack.c.l.b16 %v187
  %v1027 = vunpack.c.l.b16 %v188
  %v1028 = vunpack.c.l.b16 %v189
  %v1029 = vunpack.c.l.b16 %v190
  %v1030 = vunpack.c.l.b16 %v191
  %v1031 = vunpack.c.l.b16 %v192
  %v1032 = vunpack.c.l.b16 %v193
  %v1033 = vunpack.c.l.b16 %v194
  %v1034 = vunpack.c.l.b16 %v195
  %v1035 = vunpack.c.l.b16 %v196
  %v1036 = vunpack.c.l.b16 %v197
  %v1037 = vunpack.c.l.b16 %v198
  %v1038 = vunpack.c.l.b16 %v199
  %v1039 = vunpack.c.l.b16 %v200
  %v1040 = vunpack.c.l.b16 %v201
  %v1041 = vunpack.c.l.b16 %v202
  %v1042 = vunpack.c.l.b16 %v203
  %v1043 = vunpack.c.l.b16 %v204
  %v1044 = vunpack.c.l.b16 %v205
  %v1045 = vunpack.c.l.b16 %v206
  %v1046 = vunpack.c.l.b16 %v207
  %v1047 = vunpack.c.l.b16 %v208
  %v1048 = vunpack.c.l.b16 %v209
  %v1049 = vunpack.c.l.b16 %v210
  %v1050 = vunpack.c.l.b16 %v211
  %v1051 = vunpack.c.l.b16 %v212
  %v1052 = vunpack.c.l.b16 %v213
  %v1053 = vunpack.c.l.b16 %v214
  %v1054 = vunpack.c.l.b16 %v215
  %v1055 = vunpack.c.l.b16 %v216
  %v1056 = vunpack.c.l.b16 %v217
  %v1057 = vunpack.c.l.b16 %v218
  %v1058 = vunpack.c.l.b16 %v219
  %v1059 = vunpack.c.l.b16 %v220
  %v1060 = vunpack.c.l.b16 %v221
  %v1061 = vunpack.c.l.b16 %v222
  %v1062 = vunpack.c.l.b16 %v223
  %v1063 = vunpack.c.l.b16 %v224
  %v1064 = vunpack.c.l.b16 %v225
  %v1065 = vunpack.c.l.b16 %v226
  %v1066 = vunpack.c.l.b16 %v227
  %v1067 = vunpack.c.l.b16 %v228
  %v1068 = vunpack.c.l.b16 %v229
  %v1069 = vunpack.c.l.b16 %v230
  %v1070 = vunpack.c.l.b16 %v231
  %v1071 = vunpack.c.l.b16 %v232
  %v1072 = vunpack.c.l.b16 %v233
  %v1073 = vunpack.c.l.b16 %v234
  %v1074 = vunpack.c.l.b16 %v235
  %v1075 = vunpack.c.l.b16 %v236
  %v1076 = vunpack.c.l.b16 %v237
  %v1077 = vunpack.c.l.b16 %v238
  %v1078 = vunpack.c.l.b16 %v239
  %v1079 = vunpack.c.l.b16 %v240
  %v1080 = vunpack.c.l.b16 %v241
  %v1081 = vunpack.c.l.b16 %v242
  %v1082 = vunpack.c.l.b16 %v243
  %v1083 = vunpack.c.l.b16 %v244
  %v1084 = vunpack.c.l.b16 %v245
  %v1085 = vunpack.c.l.b16 %v246
  %v1086 = vunpack.c.l.b16 %v247
  %v1087 = vunpack.c.l.b16 %v248
  %v1088 = vunpack.c.l.b16 %v249
  %v1089 = vunpack.c.l.b16 %v250
  %v1090 = vunpack.c.l.b16 %v251
  %v1091 = vunpack.c.l.b16 %v252
  %v1092 = vunpack.c.l.b16 %v253
  %v1093 = vunpack.c.l.b16 %v254
  %v1094 = vunpack.c.l.b16 %v255
  %v1095 = vunpack.c.l.b16 %v256
  %v1096 = vunpack.c.l.b16 %v257
  %v1097 = vunpack.c.l.b16 %v258
  %v1098 = vunpack.c.l.b16 %v259
  %v1099 = vunpack.c.l.b16 %v260
  %v1100 = vunpack.c.l.b16 %v261
  %v1101 = vunpack.c.l.b16 %v262
  %v1102 = vunpack.c.l.b16 %v263
  %v1103 = vunpack.c.l.b16 %v264
  %v1104 = vunpack.c.l.b16 %v265
  %v1105 = vunpack.c.l.b16 %v266
  %v1106 = vunpack.c.l.b16 %v267
  %v1107 = vunpack.c.l.b16 %v268
  %v1108 = vunpack.c.l.b16 %v269
  %v1109 = vunpack.c.l.b16 %v270
  %v1110 = vunpack.c.l.b16 %v271
  %v1111 = vunpack.c.l.b16 %v272
  %v1112 = vunpack.c.l.b16 %v273
  %v1113 = vunpack.c.l.b16 %v274
  %v1114 = vunpack.c.l.b16 %v275
  %v1115 = vunpack.c.l.b16 %v276
  %v1116 = vunpack.c.l.b16 %v277
  %v1117 = vunpack.c.l.b16 %v278
  %v1118 = vunpack.c.l.b16 %v279
  %v1119 = vunpack.c.l.b16 %v280
  %v1120 = vunpack.c.l.b16 %v281
  %v1121 = vunpack.c.l.b16 %v282
  %v1122 = vunpack.c.l.b16 %v283
  %v1123 = vunpack.c.l.b16 %v284
  %v1124 = vunpack.c.l.b16 %v285
  %v1125 = vunpack.c.l.b16 %v286
  %v1126 = vunpack.c.l.b16 %v287
  %v1127 = vunpack.c.l.b16 %v288
  %v1128 = vunpack.c.l.b16 %v289
  %v1129 = vunpack.c.l.b16 %v290
  %v1130 = vunpack.c.l.b16 %v291
  %v1131 = vunpack.c.l.b16 %v292
  %v1132 = vunpack.c.l.b16 %v293
  %v1133 = vunpack.c.l.b16 %v294
  %v1134 = vunpack.c.l.b16 %v295
  %v1135 = vunpack.c.l.b16 %v296
  %v1136 = vunpack.c.l.b16 %v297
  %v1137 = vunpack.c.l.b16 %v298
  %v1138 = vunpack.c.l.b16 %v299
  %v1139 = vunpack.c.l.b16 %v300
  %v1140 = vunpack.c.l.b16 %v301
  %v1141 = vunpack.c.l.b16 %v302
  %v1142 = vunpack.c.l.b16 %v303
  %v1143 = vunpack.c.l.b16 %v304
  %v1144 = vunpack.c.l.b16 %v305
  %v1145 = vunpack.c.l.b16 %v306
  %v1146 = vunpack.c.l.b16 %v307
  %v1147 = vunpack.c.l.b16 %v308
  %v1148 = vunpack.c.l.b16 %v309
  %v1149 = vunpack.c.l.b16 %v310
  %v1150 = vunpack.c.l.b16 %v311
  %v1151 = vunpack.c.l.b16 %v312
  %v1152 = vunpack.c.l.b16 %v313
  %v1153 = vunpack.c.l.b16 %v314
  %v1154 = vunpack.c.l.b16 %v315
  %v1155 = vunpack.c.l.b16 %v316
  %v1156 = vunpack.c.l.b16 %v317
  %v1157 = vunpack.c.l.b16 %v318
  %v1158 = vunpack.c.l.b16 %v319
  %v1159 = vunpack.c.l.b16 %v320
  %v1160 = vunpack.c.l.b16 %v321
  %v1161 = vunpack.c.l.b16 %v322
  %v1162 = vunpack.c.l.b16 %v323
  %v1163 = vunpack.c.l.b16 %v324
  %v1164 = vunpack.c.l.b16 %v325
  %v1165 = vunpack.c.l.b16 %v326
  %v1166 = vunpack.c.l.b16 %v327
  %v1167 = vunpack.c.l.b16 %v328
  %v1168 = vunpack.c.l.b16 %v329
  %v1169 = vunpack.c.l.b16 %v330
  %v1170 = vunpack.c.l.b16 %v331
  %v1171 = vunpack.c.l.b16 %v332
  %v1172 = vunpack.c.l.b16 %v333
  %v1173 = vunpack.c.l.b16 %v334
  %v1174 = vpack.c.b16 %v919, %v918
  %v1175 = vpack.c.b16 %v921, %v920
  %v1176 = vpack.c.b16 %v923, %v922
  %v1177 = vpack.c.b16 %v925, %v924
  %v1178 = vpack.c.b16 %v927, %v926
  %v1179 = vpack.c.b16 %v929, %v928
  %v1180 = vpack.c.b16 %v931, %v930
  %v1181 = vpack.c.b16 %v933, %v932
  %v1182 = vpack.c.b16 %v935, %v934
  %v1183 = vpack.c.b16 %v937, %v936
  %v1184 = vpack.c.b16 %v939, %v938
  %v1185 = vpack.c.b16 %v941, %v940
  %v1186 = vpack.c.b16 %v943, %v942
  %v1187 = vpack.c.b16 %v945, %v944
  %v1188 = vpack.c.b16 %v947, %v946
  %v1189 = vpack.c.b16 %v949, %v948
  %v1190 = vpack.c.b16 %v951, %v950
  %v1191 = vpack.c.b16 %v953, %v952
  %v1192 = vpack.c.b16 %v955, %v954
  %v1193 = vpack.c.b16 %v957, %v956
  %v1194 = vpack.c.b16 %v959, %v958
  %v1195 = vpack.c.b16 %v961, %v960
  %v1196 = vpack.c.b16 %v963, %v962
  %v1197 = vpack.c.b16 %v965, %v964
  %v1198 = vpack.c.b16 %v967, %v966
  %v1199 = vpack.c.b16 %v969, %v968
  %v1200 = vpack.c.b16 %v971, %v970
  %v1201 = vpack.c.b16 %v973, %v972
  %v1202 = vpack.c.b16 %v975, %v974
  %v1203 = vpack.c.b16 %v977, %v976
  %v1204 = vpack.c.b16 %v979, %v978
  %v1205 = vpack.c.b16 %v981, %v980
  %v1206 = vpack.c.b16 %v983, %v982
  %v1207 = vpack.c.b16 %v985, %v984
  %v1208 = vpack.c.b16 %v987, %v986
  %v1209 = vpack.c.b16 %v989, %v988
  %v1210 = vpack.c.b16 %v991, %v990
  %v1211 = vpack.c.b16 %v993, %v992
  %v1212 = vpack.c.b16 %v995, %v994
  %v1213 = vpack.c.b16 %v997, %v996
  %v1214 = vpack.c.b16 %v999, %v998
  %v1215 = vpack.c.b16 %v1001, %v1000
  %v1216 = vpack.c.b16 %v1003, %v1002
  %v1217 = vpack.c.b16 %v1005, %v1004
  %v1218 = vpack.c.b16 %v1007, %v1006
  %v1219 = vpack.c.b16 %v1009, %v1008
  %v1220 = vpack.c.b16 %v1011, %v1010
  %v1221 = vpack.c.b16 %v1013, %v1012
  %v1222 = vpack.c.b16 %v1015, %v1014
  %v1223 = vpack.c.b16 %v1017, %v1016
  %v1224 = vpack.c.b16 %v1019, %v1018
  %v1225 = vpack.c.b16 %v1021, %v1020
  %v1226 = vpack.c.b16 %v1023, %v1022
  %v1227 = vpack.c.b16 %v1025, %v1024
  %v1228 = vpack.c.b16 %v1027, %v1026
  %v1229 = vpack.c.b16 %v1029, %v1028
  %v1230 = vpack.c.b16 %v1031, %v1030
  %v1231 = vpack.c.b16 %v1033, %v1032
  %v1232 = vpack.c.b16 %v1035, %v1034
  %v1233 = vpack.c.b16 %v1037, %v1036
  %v1234 = vpack.c.b16 %v1039, %v1038
  %v1235 = vpack.c.b16 %v1041, %v1040
  %v1236 = vpack.c.b16 %v1043, %v1042
  %v1237 = vpack.c.b16 %v1045, %v1044
  %v1238 = vpack.c.b16 %v1047, %v1046
  %v1239 = vpack.c.b16 %v1049, %v1048
  %v1240 = vpack.c.b16 %v1051, %v1050
  %v1241 = vpack.c.b16 %v1053, %v1052
  %v1242 = vpack.c.b16 %v1055, %v1054
  %v1243 = vpack.c.b16 %v1057, %v1056
  %v1244 = vpack.c.b16 %v1059, %v1058
  %v1245 = vpack.c.b16 %v1061, %v1060
  %v1246 = vpack.c.b16 %v1063, %v1062
  %v1247 = vpack.c.b16 %v1065, %v1064
  %v1248 = vpack.c.b16 %v1067, %v1066
  %v1249 = vpack.c.b16 %v1069, %v1068
  %v1250 = vpack.c.b16 %v1071, %v1070
  %v1251 = vpack.c.b16 %v1073, %v1072
  %v1252 = vpack.c.b16 %v1075, %v1074
  %v1253 = vpack.c.b16 %v1077, %v1076
  %v1254 = vpack.c.b16 %v1079, %v1078
  %v1255 = vpack.c.b16 %v1081, %v1080
  %v1256 = vpack.c.b16 %v1083, %v1082
  %v1257 = vpack.c.b16 %v1085, %v1084
  %v1258 = vpack.c.b16 %v1087, %v1086
  %v1259 = vpack.c.b16 %v1089, %v1088
  %v1260 = vpack.c.b16 %v1091, %v1090
  %v1261 = vpack.c.b16 %v1093, %v1092
  %v1262 = vpack.c.b16 %v1095, %v1094
  %v1263 = vpack.c.b16 %v1097, %v1096
  %v1264 = vpack.c.b16 %v1099, %v1098
  %v1265 = vpack.c.b16 %v1101, %v1100
  %v1266 = vpack.c.b16 %v1103, %v1102
  %v1267 = vpack.c.b16 %v1105, %v1104
  %v1268 = vpack.c.b16 %v1107, %v1106
  %v1269 = vpack.c.b16 %v1109, %v1108
  %v1270 = vpack.c.b16 %v1111, %v1110
  %v1271 = vpack.c.b16 %v1113, %v1112
  %v1272 = vpack.c.b16 %v1115, %v1114
  %v1273 = vpack.c.b16 %v1117, %v1116
  %v1274 = vpack.c.b16 %v1119, %v1118
  %v1275 = vpack.c.b16 %v1121, %v1120
  %v1276 = vpack.c.b16 %v1123, %v1122
  %v1277 = vpack.c.b16 %v1125, %v1124
  %v1278 = vpack.c.b16 %v1127, %v1126
  %v1279 = vpack.c.b16 %v1129, %v1128
  %v1280 = vpack.c.b16 %v1131, %v1130
  %v1281 = vpack.c.b16 %v1133, %v1132
  %v1282 = vpack.c.b16 %v1135, %v1134
  %v1283 = vpack.c.b16 %v1137, %v1136
  %v1284 = vpack.c.b16 %v1139, %v1138
  %v1285 = vpack.c.b16 %v1141, %v1140
  %v1286 = vpack.c.b16 %v1143, %v1142
  %v1287 = vpack.c.b16 %v1145, %v1144
  %v1288 = vpack.c.b16 %v1147, %v1146
  %v1289 = vpack.c.b16 %v1149, %v1148
  %v1290 = vpack.c.b16 %v1151, %v1150
  %v1291 = vpack.c.b16 %v1153, %v1152
  %v1292 = vpack.c.b16 %v1155, %v1154
  %v1293 = vpack.c.b16 %v1157, %v1156
  %v1294 = vpack.c.b16 %v1159, %v1158
  %v1295 = vpack.c.b16 %v1161, %v1160
  %v1296 = vpack.c.b16 %v1163, %v1162
  %v1297 = vpack.c.b16 %v1165, %v1164
  %v1298 = vpack.c.b16 %v1167, %v1166
  %v1299 = vpack.c.b16 %v1169, %v1168
  %v1300 = vpack.c.b16 %v1171, %v1170
  %v1301 = vpack.c.b16 %v1173, %v1172
  %1430 = vmatprep.subr.bf16.mxu0 0
  %1431 = vmatpush1.bf16.msra.mxu0 %v1181
  %1432 = vmatprep.subr.bf16.mxu0 0
  %1433 = vmatpush1.bf16.msra.mxu0 %v1180
  %1434 = vmatprep.subr.bf16.mxu0 0
  %1435 = vmatpush1.bf16.msra.mxu0 %v1179
  %1436 = vmatprep.subr.bf16.mxu0 0
  %1437 = vmatpush1.bf16.msra.mxu0 %v1178
  %1438 = vmatprep.subr.bf16.mxu0 0
  %1439 = vmatpush1.bf16.msra.mxu0 %v1177
  %1440 = vmatprep.subr.bf16.mxu0 0
  %1441 = vmatpush1.bf16.msra.mxu0 %v1176
  %1442 = vmatprep.subr.bf16.mxu0 0
  %1443 = vmatpush1.bf16.msra.mxu0 %v1175
  %1444 = vmatprep.subr.bf16.mxu0 0
  %1445 = vmatpush1.bf16.msra.mxu0 %v1174
  %1446 = vmatprep.subr.bf16.mxu0 0
  %1447 = vmatpush2.bf16.msra.mxu0 %v1189
  %1448 = vmatprep.subr.bf16.mxu0 0
  %1449 = vmatpush2.bf16.msra.mxu0 %v1188
  %1450 = vmatprep.subr.bf16.mxu0 0
  %1451 = vmatpush2.bf16.msra.mxu0 %v1187
  %1452 = vmatprep.subr.bf16.mxu0 0
  %1453 = vmatpush2.bf16.msra.mxu0 %v1186
  %1454 = vmatprep.subr.bf16.mxu0 0
  %1455 = vmatpush2.bf16.msra.mxu0 %v1185
  %1456 = vmatprep.subr.bf16.mxu0 0
  %1457 = vmatpush2.bf16.msra.mxu0 %v1184
  %1458 = vmatprep.subr.bf16.mxu0 0
  %1459 = vmatpush2.bf16.msra.mxu0 %v1183
  %1460 = vmatprep.subr.bf16.mxu0 0
  %1461 = vmatpush2.bf16.msra.mxu0 %v1182
  %1462 = vmatprep.mubr.bf16.mxu0 %v535
  %1463 = vmatmul.mubr.bf16.gmra.mxu0 %v534
  %v1464 = vpop.f32.mrf.mxu0
  %v1465 = vadd.f32 %v340, %v1464
  %v1466 = vpop.f32.mrf.mxu0
  %v1467 = vpop.f32.mrf.mxu0
  %v1468 = vadd.f32 %v340, %v1467
  %v1469 = vpop.f32.mrf.mxu0
  %1470 = vmatprep.mubr.bf16.mxu0 %v551
  %1471 = vmatmul.mubr.bf16.gmra.mxu0 %v550
  %v1472 = vpop.f32.mrf.mxu0
  %v1473 = vadd.f32 %v340, %v1472
  %v1474 = vpop.f32.mrf.mxu0
  %v1475 = vpop.f32.mrf.mxu0
  %v1476 = vadd.f32 %v340, %v1475
  %v1477 = vpop.f32.mrf.mxu0
  %1478 = vmatprep.mubr.bf16.mxu0 %v567
  %1479 = vmatmul.mubr.bf16.gmra.mxu0 %v566
  %v1480 = vpop.f32.mrf.mxu0
  %v1481 = vadd.f32 %v340, %v1480
  %v1482 = vpop.f32.mrf.mxu0
  %v1483 = vpop.f32.mrf.mxu0
  %v1484 = vadd.f32 %v340, %v1483
  %v1485 = vpop.f32.mrf.mxu0
  %1486 = vmatprep.mubr.bf16.mxu0 %v583
  %1487 = vmatmul.mubr.bf16.gmra.mxu0 %v582
  %v1488 = vpop.f32.mrf.mxu0
  %v1489 = vadd.f32 %v340, %v1488
  %v1490 = vpop.f32.mrf.mxu0
  %v1491 = vpop.f32.mrf.mxu0
  %v1492 = vadd.f32 %v340, %v1491
  %v1493 = vpop.f32.mrf.mxu0
  %1494 = vdwg.mxu0
  %1495 = vmatprep.subr.bf16.mxu0 0
  %1496 = vmatpush1.bf16.msra.mxu0 %v1197
  %1497 = vmatprep.subr.bf16.mxu0 0
  %1498 = vmatpush1.bf16.msra.mxu0 %v1196
  %1499 = vmatprep.subr.bf16.mxu0 0
  %1500 = vmatpush1.bf16.msra.mxu0 %v1195
  %1501 = vmatprep.subr.bf16.mxu0 0
  %1502 = vmatpush1.bf16.msra.mxu0 %v1194
  %1503 = vmatprep.subr.bf16.mxu0 0
  %1504 = vmatpush1.bf16.msra.mxu0 %v1193
  %1505 = vmatprep.subr.bf16.mxu0 0
  %1506 = vmatpush1.bf16.msra.mxu0 %v1192
  %1507 = vmatprep.subr.bf16.mxu0 0
  %1508 = vmatpush1.bf16.msra.mxu0 %v1191
  %1509 = vmatprep.subr.bf16.mxu0 0
  %1510 = vmatpush1.bf16.msra.mxu0 %v1190
  %1511 = vmatprep.subr.bf16.mxu0 0
  %1512 = vmatpush2.bf16.msra.mxu0 %v1205
  %1513 = vmatprep.subr.bf16.mxu0 0
  %1514 = vmatpush2.bf16.msra.mxu0 %v1204
  %1515 = vmatprep.subr.bf16.mxu0 0
  %1516 = vmatpush2.bf16.msra.mxu0 %v1203
  %1517 = vmatprep.subr.bf16.mxu0 0
  %1518 = vmatpush2.bf16.msra.mxu0 %v1202
  %1519 = vmatprep.subr.bf16.mxu0 0
  %1520 = vmatpush2.bf16.msra.mxu0 %v1201
  %1521 = vmatprep.subr.bf16.mxu0 0
  %1522 = vmatpush2.bf16.msra.mxu0 %v1200
  %1523 = vmatprep.subr.bf16.mxu0 0
  %1524 = vmatpush2.bf16.msra.mxu0 %v1199
  %1525 = vmatprep.subr.bf16.mxu0 0
  %1526 = vmatpush2.bf16.msra.mxu0 %v1198
  %1527 = vmatprep.mubr.bf16.mxu0 %v537
  %1528 = vmatmul.mubr.bf16.gmra.mxu0 %v536
  %v1529 = vpop.f32.mrf.mxu0
  %v1530 = vadd.f32 %v1465, %v1529
  %v1531 = vpop.f32.mrf.mxu0
  %v1532 = vpop.f32.mrf.mxu0
  %v1533 = vadd.f32 %v1468, %v1532
  %v1534 = vpop.f32.mrf.mxu0
  %1535 = vmatprep.mubr.bf16.mxu0 %v553
  %1536 = vmatmul.mubr.bf16.gmra.mxu0 %v552
  %v1537 = vpop.f32.mrf.mxu0
  %v1538 = vadd.f32 %v1473, %v1537
  %v1539 = vpop.f32.mrf.mxu0
  %v1540 = vpop.f32.mrf.mxu0
  %v1541 = vadd.f32 %v1476, %v1540
  %v1542 = vpop.f32.mrf.mxu0
  %1543 = vmatprep.mubr.bf16.mxu0 %v569
  %1544 = vmatmul.mubr.bf16.gmra.mxu0 %v568
  %v1545 = vpop.f32.mrf.mxu0
  %v1546 = vadd.f32 %v1481, %v1545
  %v1547 = vpop.f32.mrf.mxu0
  %v1548 = vpop.f32.mrf.mxu0
  %v1549 = vadd.f32 %v1484, %v1548
  %v1550 = vpop.f32.mrf.mxu0
  %1551 = vmatprep.mubr.bf16.mxu0 %v585
  %1552 = vmatmul.mubr.bf16.gmra.mxu0 %v584
  %v1553 = vpop.f32.mrf.mxu0
  %v1554 = vadd.f32 %v1489, %v1553
  %v1555 = vpop.f32.mrf.mxu0
  %v1556 = vpop.f32.mrf.mxu0
  %v1557 = vadd.f32 %v1492, %v1556
  %v1558 = vpop.f32.mrf.mxu0
  %1559 = vdwg.mxu0
  %1560 = vmatprep.subr.bf16.mxu0 0
  %1561 = vmatpush1.bf16.msra.mxu0 %v1213
  %1562 = vmatprep.subr.bf16.mxu0 0
  %1563 = vmatpush1.bf16.msra.mxu0 %v1212
  %1564 = vmatprep.subr.bf16.mxu0 0
  %1565 = vmatpush1.bf16.msra.mxu0 %v1211
  %1566 = vmatprep.subr.bf16.mxu0 0
  %1567 = vmatpush1.bf16.msra.mxu0 %v1210
  %1568 = vmatprep.subr.bf16.mxu0 0
  %1569 = vmatpush1.bf16.msra.mxu0 %v1209
  %1570 = vmatprep.subr.bf16.mxu0 0
  %1571 = vmatpush1.bf16.msra.mxu0 %v1208
  %1572 = vmatprep.subr.bf16.mxu0 0
  %1573 = vmatpush1.bf16.msra.mxu0 %v1207
  %1574 = vmatprep.subr.bf16.mxu0 0
  %1575 = vmatpush1.bf16.msra.mxu0 %v1206
  %1576 = vmatprep.subr.bf16.mxu0 0
  %1577 = vmatpush2.bf16.msra.mxu0 %v1221
  %1578 = vmatprep.subr.bf16.mxu0 0
  %1579 = vmatpush2.bf16.msra.mxu0 %v1220
  %1580 = vmatprep.subr.bf16.mxu0 0
  %1581 = vmatpush2.bf16.msra.mxu0 %v1219
  %1582 = vmatprep.subr.bf16.mxu0 0
  %1583 = vmatpush2.bf16.msra.mxu0 %v1218
  %1584 = vmatprep.subr.bf16.mxu0 0
  %1585 = vmatpush2.bf16.msra.mxu0 %v1217
  %1586 = vmatprep.subr.bf16.mxu0 0
  %1587 = vmatpush2.bf16.msra.mxu0 %v1216
  %1588 = vmatprep.subr.bf16.mxu0 0
  %1589 = vmatpush2.bf16.msra.mxu0 %v1215
  %1590 = vmatprep.subr.bf16.mxu0 0
  %1591 = vmatpush2.bf16.msra.mxu0 %v1214
  %1592 = vmatprep.mubr.bf16.mxu0 %v539
  %1593 = vmatmul.mubr.bf16.gmra.mxu0 %v538
  %v1594 = vpop.f32.mrf.mxu0
  %v1595 = vadd.f32 %v1530, %v1594
  %v1596 = vpop.f32.mrf.mxu0
  %v1597 = vpop.f32.mrf.mxu0
  %v1598 = vadd.f32 %v1533, %v1597
  %v1599 = vpop.f32.mrf.mxu0
  %1600 = vmatprep.mubr.bf16.mxu0 %v555
  %1601 = vmatmul.mubr.bf16.gmra.mxu0 %v554
  %v1602 = vpop.f32.mrf.mxu0
  %v1603 = vadd.f32 %v1538, %v1602
  %v1604 = vpop.f32.mrf.mxu0
  %v1605 = vpop.f32.mrf.mxu0
  %v1606 = vadd.f32 %v1541, %v1605
  %v1607 = vpop.f32.mrf.mxu0
  %1608 = vmatprep.mubr.bf16.mxu0 %v571
  %1609 = vmatmul.mubr.bf16.gmra.mxu0 %v570
  %v1610 = vpop.f32.mrf.mxu0
  %v1611 = vadd.f32 %v1546, %v1610
  %v1612 = vpop.f32.mrf.mxu0
  %v1613 = vpop.f32.mrf.mxu0
  %v1614 = vadd.f32 %v1549, %v1613
  %v1615 = vpop.f32.mrf.mxu0
  %1616 = vmatprep.mubr.bf16.mxu0 %v587
  %1617 = vmatmul.mubr.bf16.gmra.mxu0 %v586
  %v1618 = vpop.f32.mrf.mxu0
  %v1619 = vadd.f32 %v1554, %v1618
  %v1620 = vpop.f32.mrf.mxu0
  %v1621 = vpop.f32.mrf.mxu0
  %v1622 = vadd.f32 %v1557, %v1621
  %v1623 = vpop.f32.mrf.mxu0
  %1624 = vdwg.mxu0
  %1625 = vmatprep.subr.bf16.mxu0 0
  %1626 = vmatpush1.bf16.msra.mxu0 %v1229
  %1627 = vmatprep.subr.bf16.mxu0 0
  %1628 = vmatpush1.bf16.msra.mxu0 %v1228
  %1629 = vmatprep.subr.bf16.mxu0 0
  %1630 = vmatpush1.bf16.msra.mxu0 %v1227
  %1631 = vmatprep.subr.bf16.mxu0 0
  %1632 = vmatpush1.bf16.msra.mxu0 %v1226
  %1633 = vmatprep.subr.bf16.mxu0 0
  %1634 = vmatpush1.bf16.msra.mxu0 %v1225
  %1635 = vmatprep.subr.bf16.mxu0 0
  %1636 = vmatpush1.bf16.msra.mxu0 %v1224
  %1637 = vmatprep.subr.bf16.mxu0 0
  %1638 = vmatpush1.bf16.msra.mxu0 %v1223
  %1639 = vmatprep.subr.bf16.mxu0 0
  %1640 = vmatpush1.bf16.msra.mxu0 %v1222
  %1641 = vmatprep.subr.bf16.mxu0 0
  %1642 = vmatpush2.bf16.msra.mxu0 %v1237
  %1643 = vmatprep.subr.bf16.mxu0 0
  %1644 = vmatpush2.bf16.msra.mxu0 %v1236
  %1645 = vmatprep.subr.bf16.mxu0 0
  %1646 = vmatpush2.bf16.msra.mxu0 %v1235
  %1647 = vmatprep.subr.bf16.mxu0 0
  %1648 = vmatpush2.bf16.msra.mxu0 %v1234
  %1649 = vmatprep.subr.bf16.mxu0 0
  %1650 = vmatpush2.bf16.msra.mxu0 %v1233
  %1651 = vmatprep.subr.bf16.mxu0 0
  %1652 = vmatpush2.bf16.msra.mxu0 %v1232
  %1653 = vmatprep.subr.bf16.mxu0 0
  %1654 = vmatpush2.bf16.msra.mxu0 %v1231
  %1655 = vmatprep.subr.bf16.mxu0 0
  %1656 = vmatpush2.bf16.msra.mxu0 %v1230
  %1657 = vmatprep.mubr.bf16.mxu0 %v541
  %1658 = vmatmul.mubr.bf16.gmra.mxu0 %v540
  %v1659 = vpop.f32.mrf.mxu0
  %v1660 = vadd.f32 %v1595, %v1659
  %v1661 = vpop.f32.mrf.mxu0
  %v1662 = vpop.f32.mrf.mxu0
  %v1663 = vadd.f32 %v1598, %v1662
  %v1664 = vpop.f32.mrf.mxu0
  %1665 = vmatprep.mubr.bf16.mxu0 %v557
  %1666 = vmatmul.mubr.bf16.gmra.mxu0 %v556
  %v1667 = vpop.f32.mrf.mxu0
  %v1668 = vadd.f32 %v1603, %v1667
  %v1669 = vpop.f32.mrf.mxu0
  %v1670 = vpop.f32.mrf.mxu0
  %v1671 = vadd.f32 %v1606, %v1670
  %v1672 = vpop.f32.mrf.mxu0
  %1673 = vmatprep.mubr.bf16.mxu0 %v573
  %1674 = vmatmul.mubr.bf16.gmra.mxu0 %v572
  %v1675 = vpop.f32.mrf.mxu0
  %v1676 = vadd.f32 %v1611, %v1675
  %v1677 = vpop.f32.mrf.mxu0
  %v1678 = vpop.f32.mrf.mxu0
  %v1679 = vadd.f32 %v1614, %v1678
  %v1680 = vpop.f32.mrf.mxu0
  %1681 = vmatprep.mubr.bf16.mxu0 %v589
  %1682 = vmatmul.mubr.bf16.gmra.mxu0 %v588
  %v1683 = vpop.f32.mrf.mxu0
  %v1684 = vadd.f32 %v1619, %v1683
  %v1685 = vpop.f32.mrf.mxu0
  %v1686 = vpop.f32.mrf.mxu0
  %v1687 = vadd.f32 %v1622, %v1686
  %v1688 = vpop.f32.mrf.mxu0
  %1689 = vdwg.mxu0
  %1690 = vmatprep.subr.bf16.mxu0 0
  %1691 = vmatpush1.bf16.msra.mxu0 %v1245
  %1692 = vmatprep.subr.bf16.mxu0 0
  %1693 = vmatpush1.bf16.msra.mxu0 %v1244
  %1694 = vmatprep.subr.bf16.mxu0 0
  %1695 = vmatpush1.bf16.msra.mxu0 %v1243
  %1696 = vmatprep.subr.bf16.mxu0 0
  %1697 = vmatpush1.bf16.msra.mxu0 %v1242
  %1698 = vmatprep.subr.bf16.mxu0 0
  %1699 = vmatpush1.bf16.msra.mxu0 %v1241
  %1700 = vmatprep.subr.bf16.mxu0 0
  %1701 = vmatpush1.bf16.msra.mxu0 %v1240
  %1702 = vmatprep.subr.bf16.mxu0 0
  %1703 = vmatpush1.bf16.msra.mxu0 %v1239
  %1704 = vmatprep.subr.bf16.mxu0 0
  %1705 = vmatpush1.bf16.msra.mxu0 %v1238
  %1706 = vmatprep.subr.bf16.mxu0 0
  %1707 = vmatpush2.bf16.msra.mxu0 %v1253
  %1708 = vmatprep.subr.bf16.mxu0 0
  %1709 = vmatpush2.bf16.msra.mxu0 %v1252
  %1710 = vmatprep.subr.bf16.mxu0 0
  %1711 = vmatpush2.bf16.msra.mxu0 %v1251
  %1712 = vmatprep.subr.bf16.mxu0 0
  %1713 = vmatpush2.bf16.msra.mxu0 %v1250
  %1714 = vmatprep.subr.bf16.mxu0 0
  %1715 = vmatpush2.bf16.msra.mxu0 %v1249
  %1716 = vmatprep.subr.bf16.mxu0 0
  %1717 = vmatpush2.bf16.msra.mxu0 %v1248
  %1718 = vmatprep.subr.bf16.mxu0 0
  %1719 = vmatpush2.bf16.msra.mxu0 %v1247
  %1720 = vmatprep.subr.bf16.mxu0 0
  %1721 = vmatpush2.bf16.msra.mxu0 %v1246
  %1722 = vmatprep.mubr.bf16.mxu0 %v543
  %1723 = vmatmul.mubr.bf16.gmra.mxu0 %v542
  %v1724 = vpop.f32.mrf.mxu0
  %v1725 = vadd.f32 %v1660, %v1724
  %v1726 = vpop.f32.mrf.mxu0
  %v1727 = vpop.f32.mrf.mxu0
  %v1728 = vadd.f32 %v1663, %v1727
  %v1729 = vpop.f32.mrf.mxu0
  %1730 = vmatprep.mubr.bf16.mxu0 %v559
  %1731 = vmatmul.mubr.bf16.gmra.mxu0 %v558
  %v1732 = vpop.f32.mrf.mxu0
  %v1733 = vadd.f32 %v1668, %v1732
  %v1734 = vpop.f32.mrf.mxu0
  %v1735 = vpop.f32.mrf.mxu0
  %v1736 = vadd.f32 %v1671, %v1735
  %v1737 = vpop.f32.mrf.mxu0
  %1738 = vmatprep.mubr.bf16.mxu0 %v575
  %1739 = vmatmul.mubr.bf16.gmra.mxu0 %v574
  %v1740 = vpop.f32.mrf.mxu0
  %v1741 = vadd.f32 %v1676, %v1740
  %v1742 = vpop.f32.mrf.mxu0
  %v1743 = vpop.f32.mrf.mxu0
  %v1744 = vadd.f32 %v1679, %v1743
  %v1745 = vpop.f32.mrf.mxu0
  %1746 = vmatprep.mubr.bf16.mxu0 %v591
  %1747 = vmatmul.mubr.bf16.gmra.mxu0 %v590
  %v1748 = vpop.f32.mrf.mxu0
  %v1749 = vadd.f32 %v1684, %v1748
  %v1750 = vpop.f32.mrf.mxu0
  %v1751 = vpop.f32.mrf.mxu0
  %v1752 = vadd.f32 %v1687, %v1751
  %v1753 = vpop.f32.mrf.mxu0
  %1754 = vdwg.mxu0
  %1755 = vmatprep.subr.bf16.mxu0 0
  %1756 = vmatpush1.bf16.msra.mxu0 %v1261
  %1757 = vmatprep.subr.bf16.mxu0 0
  %1758 = vmatpush1.bf16.msra.mxu0 %v1260
  %1759 = vmatprep.subr.bf16.mxu0 0
  %1760 = vmatpush1.bf16.msra.mxu0 %v1259
  %1761 = vmatprep.subr.bf16.mxu0 0
  %1762 = vmatpush1.bf16.msra.mxu0 %v1258
  %1763 = vmatprep.subr.bf16.mxu0 0
  %1764 = vmatpush1.bf16.msra.mxu0 %v1257
  %1765 = vmatprep.subr.bf16.mxu0 0
  %1766 = vmatpush1.bf16.msra.mxu0 %v1256
  %1767 = vmatprep.subr.bf16.mxu0 0
  %1768 = vmatpush1.bf16.msra.mxu0 %v1255
  %1769 = vmatprep.subr.bf16.mxu0 0
  %1770 = vmatpush1.bf16.msra.mxu0 %v1254
  %1771 = vmatprep.subr.bf16.mxu0 0
  %1772 = vmatpush2.bf16.msra.mxu0 %v1269
  %1773 = vmatprep.subr.bf16.mxu0 0
  %1774 = vmatpush2.bf16.msra.mxu0 %v1268
  %1775 = vmatprep.subr.bf16.mxu0 0
  %1776 = vmatpush2.bf16.msra.mxu0 %v1267
  %1777 = vmatprep.subr.bf16.mxu0 0
  %1778 = vmatpush2.bf16.msra.mxu0 %v1266
  %1779 = vmatprep.subr.bf16.mxu0 0
  %1780 = vmatpush2.bf16.msra.mxu0 %v1265
  %1781 = vmatprep.subr.bf16.mxu0 0
  %1782 = vmatpush2.bf16.msra.mxu0 %v1264
  %1783 = vmatprep.subr.bf16.mxu0 0
  %1784 = vmatpush2.bf16.msra.mxu0 %v1263
  %1785 = vmatprep.subr.bf16.mxu0 0
  %1786 = vmatpush2.bf16.msra.mxu0 %v1262
  %1787 = vmatprep.mubr.bf16.mxu0 %v545
  %1788 = vmatmul.mubr.bf16.gmra.mxu0 %v544
  %v1789 = vpop.f32.mrf.mxu0
  %v1790 = vadd.f32 %v1725, %v1789
  %v1791 = vpop.f32.mrf.mxu0
  %v1792 = vpop.f32.mrf.mxu0
  %v1793 = vadd.f32 %v1728, %v1792
  %v1794 = vpop.f32.mrf.mxu0
  %1795 = vmatprep.mubr.bf16.mxu0 %v561
  %1796 = vmatmul.mubr.bf16.gmra.mxu0 %v560
  %v1797 = vpop.f32.mrf.mxu0
  %v1798 = vadd.f32 %v1733, %v1797
  %v1799 = vpop.f32.mrf.mxu0
  %v1800 = vpop.f32.mrf.mxu0
  %v1801 = vadd.f32 %v1736, %v1800
  %v1802 = vpop.f32.mrf.mxu0
  %1803 = vmatprep.mubr.bf16.mxu0 %v577
  %1804 = vmatmul.mubr.bf16.gmra.mxu0 %v576
  %v1805 = vpop.f32.mrf.mxu0
  %v1806 = vadd.f32 %v1741, %v1805
  %v1807 = vpop.f32.mrf.mxu0
  %v1808 = vpop.f32.mrf.mxu0
  %v1809 = vadd.f32 %v1744, %v1808
  %v1810 = vpop.f32.mrf.mxu0
  %1811 = vmatprep.mubr.bf16.mxu0 %v593
  %1812 = vmatmul.mubr.bf16.gmra.mxu0 %v592
  %v1813 = vpop.f32.mrf.mxu0
  %v1814 = vadd.f32 %v1749, %v1813
  %v1815 = vpop.f32.mrf.mxu0
  %v1816 = vpop.f32.mrf.mxu0
  %v1817 = vadd.f32 %v1752, %v1816
  %v1818 = vpop.f32.mrf.mxu0
  %1819 = vdwg.mxu0
  %1820 = vmatprep.subr.bf16.mxu0 0
  %1821 = vmatpush1.bf16.msra.mxu0 %v1277
  %1822 = vmatprep.subr.bf16.mxu0 0
  %1823 = vmatpush1.bf16.msra.mxu0 %v1276
  %1824 = vmatprep.subr.bf16.mxu0 0
  %1825 = vmatpush1.bf16.msra.mxu0 %v1275
  %1826 = vmatprep.subr.bf16.mxu0 0
  %1827 = vmatpush1.bf16.msra.mxu0 %v1274
  %1828 = vmatprep.subr.bf16.mxu0 0
  %1829 = vmatpush1.bf16.msra.mxu0 %v1273
  %1830 = vmatprep.subr.bf16.mxu0 0
  %1831 = vmatpush1.bf16.msra.mxu0 %v1272
  %1832 = vmatprep.subr.bf16.mxu0 0
  %1833 = vmatpush1.bf16.msra.mxu0 %v1271
  %1834 = vmatprep.subr.bf16.mxu0 0
  %1835 = vmatpush1.bf16.msra.mxu0 %v1270
  %1836 = vmatprep.subr.bf16.mxu0 0
  %1837 = vmatpush2.bf16.msra.mxu0 %v1285
  %1838 = vmatprep.subr.bf16.mxu0 0
  %1839 = vmatpush2.bf16.msra.mxu0 %v1284
  %1840 = vmatprep.subr.bf16.mxu0 0
  %1841 = vmatpush2.bf16.msra.mxu0 %v1283
  %1842 = vmatprep.subr.bf16.mxu0 0
  %1843 = vmatpush2.bf16.msra.mxu0 %v1282
  %1844 = vmatprep.subr.bf16.mxu0 0
  %1845 = vmatpush2.bf16.msra.mxu0 %v1281
  %1846 = vmatprep.subr.bf16.mxu0 0
  %1847 = vmatpush2.bf16.msra.mxu0 %v1280
  %1848 = vmatprep.subr.bf16.mxu0 0
  %1849 = vmatpush2.bf16.msra.mxu0 %v1279
  %1850 = vmatprep.subr.bf16.mxu0 0
  %1851 = vmatpush2.bf16.msra.mxu0 %v1278
  %1852 = vmatprep.mubr.bf16.mxu0 %v547
  %1853 = vmatmul.mubr.bf16.gmra.mxu0 %v546
  %v1854 = vpop.f32.mrf.mxu0
  %v1855 = vadd.f32 %v1790, %v1854
  %v1856 = vpop.f32.mrf.mxu0
  %v1857 = vpop.f32.mrf.mxu0
  %v1858 = vadd.f32 %v1793, %v1857
  %v1859 = vpop.f32.mrf.mxu0
  %1860 = vmatprep.mubr.bf16.mxu0 %v563
  %1861 = vmatmul.mubr.bf16.gmra.mxu0 %v562
  %v1862 = vpop.f32.mrf.mxu0
  %v1863 = vadd.f32 %v1798, %v1862
  %v1864 = vpop.f32.mrf.mxu0
  %v1865 = vpop.f32.mrf.mxu0
  %v1866 = vadd.f32 %v1801, %v1865
  %v1867 = vpop.f32.mrf.mxu0
  %1868 = vmatprep.mubr.bf16.mxu0 %v579
  %1869 = vmatmul.mubr.bf16.gmra.mxu0 %v578
  %v1870 = vpop.f32.mrf.mxu0
  %v1871 = vadd.f32 %v1806, %v1870
  %v1872 = vpop.f32.mrf.mxu0
  %v1873 = vpop.f32.mrf.mxu0
  %v1874 = vadd.f32 %v1809, %v1873
  %v1875 = vpop.f32.mrf.mxu0
  %1876 = vmatprep.mubr.bf16.mxu0 %v595
  %1877 = vmatmul.mubr.bf16.gmra.mxu0 %v594
  %v1878 = vpop.f32.mrf.mxu0
  %v1879 = vadd.f32 %v1814, %v1878
  %v1880 = vpop.f32.mrf.mxu0
  %v1881 = vpop.f32.mrf.mxu0
  %v1882 = vadd.f32 %v1817, %v1881
  %v1883 = vpop.f32.mrf.mxu0
  %1884 = vdwg.mxu0
  %1885 = vmatprep.subr.bf16.mxu0 0
  %1886 = vmatpush1.bf16.msra.mxu0 %v1293
  %1887 = vmatprep.subr.bf16.mxu0 0
  %1888 = vmatpush1.bf16.msra.mxu0 %v1292
  %1889 = vmatprep.subr.bf16.mxu0 0
  %1890 = vmatpush1.bf16.msra.mxu0 %v1291
  %1891 = vmatprep.subr.bf16.mxu0 0
  %1892 = vmatpush1.bf16.msra.mxu0 %v1290
  %1893 = vmatprep.subr.bf16.mxu0 0
  %1894 = vmatpush1.bf16.msra.mxu0 %v1289
  %1895 = vmatprep.subr.bf16.mxu0 0
  %1896 = vmatpush1.bf16.msra.mxu0 %v1288
  %1897 = vmatprep.subr.bf16.mxu0 0
  %1898 = vmatpush1.bf16.msra.mxu0 %v1287
  %1899 = vmatprep.subr.bf16.mxu0 0
  %1900 = vmatpush1.bf16.msra.mxu0 %v1286
  %1901 = vmatprep.subr.bf16.mxu0 0
  %1902 = vmatpush2.bf16.msra.mxu0 %v1301
  %1903 = vmatprep.subr.bf16.mxu0 0
  %1904 = vmatpush2.bf16.msra.mxu0 %v1300
  %1905 = vmatprep.subr.bf16.mxu0 0
  %1906 = vmatpush2.bf16.msra.mxu0 %v1299
  %1907 = vmatprep.subr.bf16.mxu0 0
  %1908 = vmatpush2.bf16.msra.mxu0 %v1298
  %1909 = vmatprep.subr.bf16.mxu0 0
  %1910 = vmatpush2.bf16.msra.mxu0 %v1297
  %1911 = vmatprep.subr.bf16.mxu0 0
  %1912 = vmatpush2.bf16.msra.mxu0 %v1296
  %1913 = vmatprep.subr.bf16.mxu0 0
  %1914 = vmatpush2.bf16.msra.mxu0 %v1295
  %1915 = vmatprep.subr.bf16.mxu0 0
  %1916 = vmatpush2.bf16.msra.mxu0 %v1294
  %1917 = vmatprep.mubr.bf16.mxu0 %v549
  %1918 = vmatmul.mubr.bf16.gmra.mxu0 %v548
  %v1919 = vpop.f32.mrf.mxu0
  %v1920 = vadd.f32 %v1855, %v1919
  %v1921 = vpop.f32.mrf.mxu0
  %v1922 = vpop.f32.mrf.mxu0
  %v1923 = vadd.f32 %v1858, %v1922
  %v1924 = vpop.f32.mrf.mxu0
  %1925 = vmatprep.mubr.bf16.mxu0 %v565
  %1926 = vmatmul.mubr.bf16.gmra.mxu0 %v564
  %v1927 = vpop.f32.mrf.mxu0
  %v1928 = vadd.f32 %v1863, %v1927
  %v1929 = vpop.f32.mrf.mxu0
  %v1930 = vpop.f32.mrf.mxu0
  %v1931 = vadd.f32 %v1866, %v1930
  %v1932 = vpop.f32.mrf.mxu0
  %1933 = vmatprep.mubr.bf16.mxu0 %v581
  %1934 = vmatmul.mubr.bf16.gmra.mxu0 %v580
  %v1935 = vpop.f32.mrf.mxu0
  %v1936 = vadd.f32 %v1871, %v1935
  %v1937 = vpop.f32.mrf.mxu0
  %v1938 = vpop.f32.mrf.mxu0
  %v1939 = vadd.f32 %v1874, %v1938
  %v1940 = vpop.f32.mrf.mxu0
  %1941 = vmatprep.mubr.bf16.mxu0 %v597
  %1942 = vmatmul.mubr.bf16.gmra.mxu0 %v596
  %v1943 = vpop.f32.mrf.mxu0
  %v1944 = vadd.f32 %v1879, %v1943
  %v1945 = vpop.f32.mrf.mxu0
  %v1946 = vpop.f32.mrf.mxu0
  %v1947 = vadd.f32 %v1882, %v1946
  %v1948 = vpop.f32.mrf.mxu0
  %1949 = vdwg.mxu0
  %v1950 = vxor.u32 %v1920, 2147483648
  %v1951 = vxor.u32 %v1923, 2147483648
  %v1952 = vxor.u32 %v1928, 2147483648
  %v1953 = vxor.u32 %v1931, 2147483648
  %v1954 = vxor.u32 %v1936, 2147483648
  %v1955 = vxor.u32 %v1939, 2147483648
  %v1956 = vxor.u32 %v1944, 2147483648
  %v1957 = vxor.u32 %v1947, 2147483648
  %v1958 = vmul.f32 %v1950, 1.442695
  %v1959 = vpow.pop %v1958
  %v1960 = vmul.f32 %v1951, 1.442695
  %v1961 = vpow.pop %v1960
  %v1962 = vmul.f32 %v1952, 1.442695
  %v1963 = vpow.pop %v1962
  %v1964 = vmul.f32 %v1953, 1.442695
  %v1965 = vpow.pop %v1964
  %v1966 = vmul.f32 %v1954, 1.442695
  %v1967 = vpow.pop %v1966
  %v1968 = vmul.f32 %v1955, 1.442695
  %v1969 = vpow.pop %v1968
  %v1970 = vmul.f32 %v1956, 1.442695
  %v1971 = vpow.pop %v1970
  %v1972 = vmul.f32 %v1957, 1.442695
  %v1973 = vpow.pop %v1972
  %v1974 = vadd.f32 %v1959, 1.0
  %v1975 = vadd.f32 %v1961, 1.0
  %v1976 = vadd.f32 %v1963, 1.0
  %v1977 = vadd.f32 %v1965, 1.0
  %v1978 = vadd.f32 %v1967, 1.0
  %v1979 = vadd.f32 %v1969, 1.0
  %v1980 = vadd.f32 %v1971, 1.0
  %v1981 = vadd.f32 %v1973, 1.0
  %v1982 = vrcp.pop %v1974
  %v1983 = vmul.f32 1.0, %v1982
  %v1984 = vrcp.pop %v1975
  %v1985 = vmul.f32 1.0, %v1984
  %v1986 = vrcp.pop %v1976
  %v1987 = vmul.f32 1.0, %v1986
  %v1988 = vrcp.pop %v1977
  %v1989 = vmul.f32 1.0, %v1988
  %v1990 = vrcp.pop %v1978
  %v1991 = vmul.f32 1.0, %v1990
  %v1992 = vrcp.pop %v1979
  %v1993 = vmul.f32 1.0, %v1992
  %v1994 = vrcp.pop %v1980
  %v1995 = vmul.f32 1.0, %v1994
  %v1996 = vrcp.pop %v1981
  %v1997 = vmul.f32 1.0, %v1996
  %1998 = vst [vmem:[%s3] sm:$0xff] %v1983
  %1999 = vst [vmem:[%s3 + $0x8] sm:$0xff] %v1985
  %2000 = vst [vmem:[%s3 + $0x10] sm:$0xff] %v1987
  %2001 = vst [vmem:[%s3 + $0x18] sm:$0xff] %v1989
  %2002 = vst [vmem:[%s3 + $0x20] sm:$0xff] %v1991
  %2003 = vst [vmem:[%s3 + $0x28] sm:$0xff] %v1993
  %2004 = vst [vmem:[%s3 + $0x30] sm:$0xff] %v1995
  %2005 = vst [vmem:[%s3 + $0x38] sm:$0xff] %v1997
  // Predicated region
  $region14: #{discriminator_forward.13} parent=0 // pred_check
    _
  $region15: #{discriminator_forward.13} parent=0 // pred_check_branch
    %2007 = sbr.rel (0) target = $region17
  $region16: #{discriminator_forward.13} parent=0 // pred_region
    _
  $region17: #{discriminator_forward.13} parent=0 // pred_fallthru
    _
  // Predicated region
  $region18: #{discriminator_forward.13} parent=0 // pred_check
    _
  $region19: #{discriminator_forward.13} parent=0 // pred_check_branch
    %2009 = sbr.rel (0) target = $region21
  $region20: #{discriminator_forward.13} parent=0 // pred_region
    _
  $region21: #{discriminator_forward.13} parent=0 // pred_fallthru
    _

</llo_original>
